<compile_context>
chip_gen: v7x
topology: tpu7x:2x2x1
jax: 0.10.0
libtpu: 0.0.40
codegen_flags: <defaults>
</compile_context>

<pallas_src>
import jax
import jax.numpy as jnp
from jax.experimental import pallas as pl
from jax.experimental.pallas import tpu as pltpu

# ----- scaled-down shapes (module implies n_styles=20, w_dim=512, c_dim=25) ---
B = 2               # batch
C_IN = 3            # img_channels
C_IN_PAD = 8        # channel-mean vector zero-padded to 8 sublanes
H_IN = W_IN = 16    # input resolution (down from 256/512)
N_STYLES = 20       # opts.n_styles = 20
W_DIM = 64          # w latent width (down from 512)
C_DIM = 25          # camera conditioning dim (kept exact)
IMG_RES = 32        # decoder synthesis output resolution (down from 512)
IMG_CH = 3          # image channels
POOL_RES = 16       # face_pool output (down from 256); 32 -> 16 == exact 2x2 avg

HW_IN = H_IN * W_IN                  # 256
CODES_FLAT = N_STYLES * W_DIM        # 1280
NPIX = IMG_CH * IMG_RES * IMG_RES    # 3072
PLANE_PIX = IMG_RES * IMG_RES        # 1024
POOL_PIX = POOL_RES * POOL_RES       # 256
POOL_FLAT = IMG_CH * POOL_PIX        # 768


# ---------------------------------------------------------------------------
# Shared kernel body: encoder (+latent_avg) -> style mean -> decoder -> tanh
# ---------------------------------------------------------------------------
def _encode_decode(xm, c, wenc, benclat, wencm, bencm, wdecw, wdecc, bdec):
    # encoder surrogate (+ latent_avg folded into the bias)
    codes = jnp.dot(xm, wenc, preferred_element_type=jnp.float32) + benclat   # (B,1280)
    # style mean of `codes` via the exactly-equivalent encoder-side fold:
    #   mean_s(xm @ Wenc[:, s·64:(s+1)·64] + b[s]) == xm @ mean_s(Wenc blocks) + mean_s(b blocks)
    mean_w = jnp.dot(xm, wencm, preferred_element_type=jnp.float32) + bencm   # (B,64)
    # decoder.synthesis surrogate: latent branch (bf16 MXU) + camera branch (f32)
    pre = (jnp.dot(mean_w.astype(jnp.bfloat16), wdecw,
                   preferred_element_type=jnp.float32)
           + jnp.dot(c, wdecc, preferred_element_type=jnp.float32)
           + bdec)                                                            # (B,3072)
    img = jnp.tanh(pre)
    return codes, img


def _psp_pool_kernel(xm_ref, c_ref, wenc_ref, benclat_ref, wencm_ref, bencm_ref,
                     wdecw_ref, wdecc_ref, bdec_ref, pool_ref,
                     codes_ref, pooled_ref):
    # resize=True variant: emits codes + pooled image only (no full-res writeback)
    codes, img = _encode_decode(xm_ref[...], c_ref[...], wenc_ref[...],
                                benclat_ref[...], wencm_ref[...], bencm_ref[...],
                                wdecw_ref[...], wdecc_ref[...], bdec_ref[...])
    codes_ref[...] = codes
    # face_pool: exact 2x2 avg (32->16) as per-channel (1024,256) bf16 matmul,
    # each result stored straight into a 128-aligned lane slice of pooled_ref.
    img_bf = img.astype(jnp.bfloat16)
    for ch in range(IMG_CH):                                       # static unroll
        plane = img_bf[:, ch * PLANE_PIX:(ch + 1) * PLANE_PIX]     # (B,1024)
        pooled_ref[:, ch * POOL_PIX:(ch + 1) * POOL_PIX] = jnp.dot(
            plane, pool_ref[...], preferred_element_type=jnp.float32)


def _psp_img_kernel(xm_ref, c_ref, wenc_ref, benclat_ref, wencm_ref, bencm_ref,
                    wdecw_ref, wdecc_ref, bdec_ref,
                    codes_ref, img_ref):
    # resize=False variant: emits codes + full-resolution image
    codes, img = _encode_decode(xm_ref[...], c_ref[...], wenc_ref[...],
                                benclat_ref[...], wencm_ref[...], bencm_ref[...],
                                wdecw_ref[...], wdecc_ref[...], bdec_ref[...])
    codes_ref[...] = codes
    img_ref[...] = img


# ---------------------------------------------------------------------------
# Full pSp_eg3d.forward(x, c, resize=True)
# ---------------------------------------------------------------------------
def _full_spec(shape):
    zeros = (0,) * len(shape)
    return pl.BlockSpec(shape, lambda i: zeros)


_COMPILER_PARAMS = pltpu.CompilerParams(
    dimension_semantics=("arbitrary",),
    vmem_limit_bytes=32 << 20,   # generous headroom; residency is only ~3 MiB now
)


def psp_eg3d_forward(x, c, params, resize=True):
    # encoder surrogate's spatial global-avg-pool, hoisted to the wrapper on the
    # tiny (B,768) input so the kernel never DMAs a 256x row-repeated weight.
    xm = x.reshape(B, C_IN, HW_IN).mean(axis=-1)                    # (B, 3)
    xm = jnp.pad(xm, ((0, 0), (0, C_IN_PAD - C_IN)))                # (B, 8)

    common_in = (xm, c, params["w_enc"], params["b_enc_lat"],
                 params["w_enc_mean"], params["b_enc_mean"],
                 params["w_dec_w"], params["w_dec_c"], params["b_dec"])
    common_specs = [
        _full_spec((B, C_IN_PAD)),
        _full_spec((B, C_DIM)),
        _full_spec((C_IN_PAD, CODES_FLAT)),
        _full_spec((1, CODES_FLAT)),
        _full_spec((C_IN_PAD, W_DIM)),
        _full_spec((1, W_DIM)),
        _full_spec((W_DIM, NPIX)),
        _full_spec((C_DIM, NPIX)),
        _full_spec((1, NPIX)),
    ]

    if resize:
        codes_flat, pooled_flat = pl.pallas_call(
            _psp_pool_kernel,
            out_shape=(
                jax.ShapeDtypeStruct((B, CODES_FLAT), jnp.float32),
                jax.ShapeDtypeStruct((B, POOL_FLAT), jnp.float32),
            ),
            grid=(1,),
            in_specs=common_specs + [_full_spec((PLANE_PIX, POOL_PIX))],
            out_specs=(
                _full_spec((B, CODES_FLAT)),
                _full_spec((B, POOL_FLAT)),
            ),
            compiler_params=_COMPILER_PARAMS,
        )(*common_in, params["pool_mat"])
        images = pooled_flat.reshape(B, IMG_CH, POOL_RES, POOL_RES)
    else:
        codes_flat, img_flat = pl.pallas_call(
            _psp_img_kernel,
            out_shape=(
                jax.ShapeDtypeStruct((B, CODES_FLAT), jnp.float32),
                jax.ShapeDtypeStruct((B, NPIX), jnp.float32),
            ),
            grid=(1,),
            in_specs=common_specs,
            out_specs=(
                _full_spec((B, CODES_FLAT)),
                _full_spec((B, NPIX)),
            ),
            compiler_params=_COMPILER_PARAMS,
        )(*common_in)
        images = img_flat.reshape(B, IMG_CH, IMG_RES, IMG_RES)

    codes = codes_flat.reshape(B, N_STYLES, W_DIM)
    return images, codes


def init_params(key):
    ks = jax.random.split(key, 6)
    # base surrogate parameters
    w_enc = jax.random.normal(ks[0], (C_IN, CODES_FLAT), jnp.float32) * 0.1
    b_enc = jax.random.normal(ks[1], (1, CODES_FLAT), jnp.float32) * 0.01
    latent_avg = jax.random.normal(ks[2], (1, CODES_FLAT), jnp.float32) * 0.05
    w_dec_w = jax.random.normal(ks[3], (W_DIM, NPIX), jnp.float32) * 0.05
    w_dec_c = jax.random.normal(ks[4], (C_DIM, NPIX), jnp.float32) * 0.05
    b_dec = jax.random.normal(ks[5], (1, NPIX), jnp.float32) * 0.01

    # encoder bias + latent_avg.repeat(B,1,1)  (exact fold)
    b_enc_lat = b_enc + latent_avg                                          # (1,1280)

    # pad the 3 channel rows to 8 sublanes (zero rows are exact no-ops)
    w_enc_pad = jnp.zeros((C_IN_PAD, CODES_FLAT), jnp.float32).at[:C_IN].set(w_enc)

    # style-mean fold (exact): mean over the 20 style column-blocks
    w_enc_mean = w_enc_pad.reshape(C_IN_PAD, N_STYLES, W_DIM).mean(axis=1)  # (8,64)
    b_enc_mean = b_enc_lat.reshape(1, N_STYLES, W_DIM).mean(axis=1)         # (1,64)

    # exact 2x2 average-pooling matrix on a flattened 32x32 plane -> 16x16;
    # entries are 0.0 / 0.25, both exactly representable in bf16
    src = jnp.arange(PLANE_PIX)
    si, sj = src // IMG_RES, src % IMG_RES
    dst = (si // 2) * POOL_RES + (sj // 2)
    pool_mat = ((dst[:, None] == jnp.arange(POOL_PIX)[None, :])
                .astype(jnp.float32) * 0.25).astype(jnp.bfloat16)           # (1024,256)

    return {
        "w_enc": w_enc_pad,                        # (8,1280)   f32   (~40 KB)
        "b_enc_lat": b_enc_lat,                    # (1,1280)   f32
        "w_enc_mean": w_enc_mean,                  # (8,64)     f32
        "b_enc_mean": b_enc_mean,                  # (1,64)     f32
        "w_dec_w": w_dec_w.astype(jnp.bfloat16),   # (64,3072)  bf16  (~0.39 MB)
        "w_dec_c": w_dec_c,                        # (25,3072)  f32   (camera parity)
        "b_dec": b_dec,                            # (1,3072)   f32
        "pool_mat": pool_mat,                      # (1024,256) bf16  (~0.5 MB)
    }


if __name__ == "__main__":
    key = jax.random.PRNGKey(0)
    k_x, k_c, k_p = jax.random.split(key, 3)
    x = jax.random.normal(k_x, (B, C_IN, H_IN, W_IN), jnp.float32)   # NCHW images
    c = jax.random.normal(k_c, (B, C_DIM), jnp.float32)              # camera params
    params = init_params(k_p)

    fwd = jax.jit(psp_eg3d_forward, static_argnames=("resize",))

    # resize=True path (codes + pooled image; no full-res writeback)
    images, codes = fwd(x, c, params, resize=True)
    jax.block_until_ready((images, codes))
    assert images.shape == (B, IMG_CH, POOL_RES, POOL_RES), images.shape
    assert codes.shape == (B, N_STYLES, W_DIM), codes.shape
    assert bool(jnp.all(jnp.isfinite(images))) and bool(jnp.all(jnp.isfinite(codes)))

    # resize=False path (codes + full-resolution image)
    images_full, codes_full = fwd(x, c, params, resize=False)
    jax.block_until_ready((images_full, codes_full))
    assert images_full.shape == (B, IMG_CH, IMG_RES, IMG_RES), images_full.shape
    assert bool(jnp.all(jnp.isfinite(images_full)))

    print("KERNEL_OK")
</pallas_src>

<mosaic_0001>
module attributes {stable_mosaic.version = 11 : i64} {
  func.func @_psp_pool_kernel(%arg0: i32, %arg1: memref<2x8xf32, #tpu.memory_space<vmem>>, %arg2: memref<2x25xf32, #tpu.memory_space<vmem>>, %arg3: memref<8x1280xf32, #tpu.memory_space<vmem>>, %arg4: memref<1x1280xf32, #tpu.memory_space<vmem>>, %arg5: memref<8x64xf32, #tpu.memory_space<vmem>>, %arg6: memref<1x64xf32, #tpu.memory_space<vmem>>, %arg7: memref<64x3072xbf16, #tpu.memory_space<vmem>>, %arg8: memref<25x3072xf32, #tpu.memory_space<vmem>>, %arg9: memref<1x3072xf32, #tpu.memory_space<vmem>>, %arg10: memref<1024x256xbf16, #tpu.memory_space<vmem>>, %arg11: memref<2x1280xf32, #tpu.memory_space<vmem>>, %arg12: memref<2x768xf32, #tpu.memory_space<vmem>>) attributes {dimension_semantics = [#tpu.dimension_semantics<arbitrary>], iteration_bounds = array<i64: 1>, scalar_prefetch = 0 : i64, scratch_operands = 0 : i64, tpu.core_type = #tpu.core_type<tc>, window_params = [{pipeline_mode = #tpu.pipeline_mode<synchronous>, transform_indices = @transform_0, window_bounds = array<i64: 2, 8>}, {pipeline_mode = #tpu.pipeline_mode<synchronous>, transform_indices = @transform_1, window_bounds = array<i64: 2, 25>}, {pipeline_mode = #tpu.pipeline_mode<synchronous>, transform_indices = @transform_2, window_bounds = array<i64: 8, 1280>}, {pipeline_mode = #tpu.pipeline_mode<synchronous>, transform_indices = @transform_3, window_bounds = array<i64: 1, 1280>}, {pipeline_mode = #tpu.pipeline_mode<synchronous>, transform_indices = @transform_4, window_bounds = array<i64: 8, 64>}, {pipeline_mode = #tpu.pipeline_mode<synchronous>, transform_indices = @transform_5, window_bounds = array<i64: 1, 64>}, {pipeline_mode = #tpu.pipeline_mode<synchronous>, transform_indices = @transform_6, window_bounds = array<i64: 64, 3072>}, {pipeline_mode = #tpu.pipeline_mode<synchronous>, transform_indices = @transform_7, window_bounds = array<i64: 25, 3072>}, {pipeline_mode = #tpu.pipeline_mode<synchronous>, transform_indices = @transform_8, window_bounds = array<i64: 1, 3072>}, {pipeline_mode = #tpu.pipeline_mode<synchronous>, transform_indices = @transform_9, window_bounds = array<i64: 1024, 256>}, {pipeline_mode = #tpu.pipeline_mode<synchronous>, transform_indices = @transform_10, window_bounds = array<i64: 2, 1280>}, {pipeline_mode = #tpu.pipeline_mode<synchronous>, transform_indices = @transform_11, window_bounds = array<i64: 2, 768>}]} {
    %c0 = arith.constant 0 : index
    %c0_0 = arith.constant 0 : index
    %0 = vector.load %arg1[%c0, %c0_0] : memref<2x8xf32, #tpu.memory_space<vmem>>, vector<2x8xf32>
    %c0_1 = arith.constant 0 : index
    %c0_2 = arith.constant 0 : index
    %1 = vector.load %arg2[%c0_1, %c0_2] : memref<2x25xf32, #tpu.memory_space<vmem>>, vector<2x25xf32>
    %c0_3 = arith.constant 0 : index
    %c0_4 = arith.constant 0 : index
    %2 = vector.load %arg3[%c0_3, %c0_4] : memref<8x1280xf32, #tpu.memory_space<vmem>>, vector<8x1280xf32>
    %c0_5 = arith.constant 0 : index
    %c0_6 = arith.constant 0 : index
    %3 = vector.load %arg4[%c0_5, %c0_6] : memref<1x1280xf32, #tpu.memory_space<vmem>>, vector<1x1280xf32>
    %c0_7 = arith.constant 0 : index
    %c0_8 = arith.constant 0 : index
    %4 = vector.load %arg5[%c0_7, %c0_8] : memref<8x64xf32, #tpu.memory_space<vmem>>, vector<8x64xf32>
    %c0_9 = arith.constant 0 : index
    %c0_10 = arith.constant 0 : index
    %5 = vector.load %arg6[%c0_9, %c0_10] : memref<1x64xf32, #tpu.memory_space<vmem>>, vector<1x64xf32>
    %c0_11 = arith.constant 0 : index
    %c0_12 = arith.constant 0 : index
    %6 = vector.load %arg7[%c0_11, %c0_12] : memref<64x3072xbf16, #tpu.memory_space<vmem>>, vector<64x3072xbf16>
    %c0_13 = arith.constant 0 : index
    %c0_14 = arith.constant 0 : index
    %7 = vector.load %arg8[%c0_13, %c0_14] : memref<25x3072xf32, #tpu.memory_space<vmem>>, vector<25x3072xf32>
    %c0_15 = arith.constant 0 : index
    %c0_16 = arith.constant 0 : index
    %8 = vector.load %arg9[%c0_15, %c0_16] : memref<1x3072xf32, #tpu.memory_space<vmem>>, vector<1x3072xf32>
    %cst = arith.constant dense<0.000000e+00> : vector<2x1280xf32>
    %9 = tpu.matmul %0, %2, %cst {dimension_numbers = #tpu.dot_dimension_numbers<[1], [0], [0], [1], [0, 0, 1, 1], [], []>} : vector<2x8xf32>, vector<8x1280xf32>, vector<2x1280xf32> -> vector<2x1280xf32>
    %10 = vector.broadcast %3 : vector<1x1280xf32> to vector<2x1280xf32>
    %11 = arith.addf %9, %10 : vector<2x1280xf32>
    %cst_17 = arith.constant dense<0.000000e+00> : vector<2x64xf32>
    %12 = tpu.matmul %0, %4, %cst_17 {dimension_numbers = #tpu.dot_dimension_numbers<[1], [0], [0], [1], [0, 0, 1, 1], [], []>} : vector<2x8xf32>, vector<8x64xf32>, vector<2x64xf32> -> vector<2x64xf32>
    %13 = vector.broadcast %5 : vector<1x64xf32> to vector<2x64xf32>
    %14 = arith.addf %12, %13 : vector<2x64xf32>
    %15 = arith.truncf %14 : vector<2x64xf32> to vector<2x64xbf16>
    %cst_18 = arith.constant dense<0.000000e+00> : vector<2x3072xf32>
    %16 = tpu.matmul %15, %6, %cst_18 {dimension_numbers = #tpu.dot_dimension_numbers<[1], [0], [0], [1], [0, 0, 1, 1], [], []>} : vector<2x64xbf16>, vector<64x3072xbf16>, vector<2x3072xf32> -> vector<2x3072xf32>
    %cst_19 = arith.constant dense<0.000000e+00> : vector<2x3072xf32>
    %17 = tpu.matmul %1, %7, %cst_19 {dimension_numbers = #tpu.dot_dimension_numbers<[1], [0], [0], [1], [0, 0, 1, 1], [], []>} : vector<2x25xf32>, vector<25x3072xf32>, vector<2x3072xf32> -> vector<2x3072xf32>
    %18 = arith.addf %16, %17 : vector<2x3072xf32>
    %19 = vector.broadcast %8 : vector<1x3072xf32> to vector<2x3072xf32>
    %20 = arith.addf %18, %19 : vector<2x3072xf32>
    %21 = math.tanh %20 : vector<2x3072xf32>
    %c0_20 = arith.constant 0 : index
    %c0_21 = arith.constant 0 : index
    %22 = vector.load %arg11[%c0_20, %c0_21] : memref<2x1280xf32, #tpu.memory_space<vmem>>, vector<2x1280xf32>
    tpu.vector_store %arg11[%c0_20, %c0_21], %11 {strides = array<i32>} : memref<2x1280xf32, #tpu.memory_space<vmem>>, vector<2x1280xf32>,
    %23 = arith.truncf %21 : vector<2x3072xf32> to vector<2x3072xbf16>
    %24 = vector.extract_strided_slice %23 {offsets = [0, 0], sizes = [2, 1024], strides = [1, 1]} : vector<2x3072xbf16> to vector<2x1024xbf16>
    %c0_22 = arith.constant 0 : index
    %c0_23 = arith.constant 0 : index
    %25 = vector.load %arg10[%c0_22, %c0_23] : memref<1024x256xbf16, #tpu.memory_space<vmem>>, vector<1024x256xbf16>
    %cst_24 = arith.constant dense<0.000000e+00> : vector<2x256xf32>
    %26 = tpu.matmul %24, %25, %cst_24 {dimension_numbers = #tpu.dot_dimension_numbers<[1], [0], [0], [1], [0, 0, 1, 1], [], []>} : vector<2x1024xbf16>, vector<1024x256xbf16>, vector<2x256xf32> -> vector<2x256xf32>
    %c0_25 = arith.constant 0 : index
    %c0_26 = arith.constant 0 : index
    %27 = vector.load %arg12[%c0_25, %c0_26] : memref<2x768xf32, #tpu.memory_space<vmem>>, vector<2x256xf32>
    tpu.vector_store %arg12[%c0_25, %c0_26], %26 {strides = array<i32>} : memref<2x768xf32, #tpu.memory_space<vmem>>, vector<2x256xf32>,
    %28 = vector.extract_strided_slice %23 {offsets = [0, 1024], sizes = [2, 1024], strides = [1, 1]} : vector<2x3072xbf16> to vector<2x1024xbf16>
    %c0_27 = arith.constant 0 : index
    %c0_28 = arith.constant 0 : index
    %29 = vector.load %arg10[%c0_27, %c0_28] : memref<1024x256xbf16, #tpu.memory_space<vmem>>, vector<1024x256xbf16>
    %cst_29 = arith.constant dense<0.000000e+00> : vector<2x256xf32>
    %30 = tpu.matmul %28, %29, %cst_29 {dimension_numbers = #tpu.dot_dimension_numbers<[1], [0], [0], [1], [0, 0, 1, 1], [], []>} : vector<2x1024xbf16>, vector<1024x256xbf16>, vector<2x256xf32> -> vector<2x256xf32>
    %c0_30 = arith.constant 0 : index
    %c256 = arith.constant 256 : index
    %31 = vector.load %arg12[%c0_30, %c256] : memref<2x768xf32, #tpu.memory_space<vmem>>, vector<2x256xf32>
    tpu.vector_store %arg12[%c0_30, %c256], %30 {strides = array<i32>} : memref<2x768xf32, #tpu.memory_space<vmem>>, vector<2x256xf32>,
    %32 = vector.extract_strided_slice %23 {offsets = [0, 2048], sizes = [2, 1024], strides = [1, 1]} : vector<2x3072xbf16> to vector<2x1024xbf16>
    %c0_31 = arith.constant 0 : index
    %c0_32 = arith.constant 0 : index
    %33 = vector.load %arg10[%c0_31, %c0_32] : memref<1024x256xbf16, #tpu.memory_space<vmem>>, vector<1024x256xbf16>
    %cst_33 = arith.constant dense<0.000000e+00> : vector<2x256xf32>
    %34 = tpu.matmul %32, %33, %cst_33 {dimension_numbers = #tpu.dot_dimension_numbers<[1], [0], [0], [1], [0, 0, 1, 1], [], []>} : vector<2x1024xbf16>, vector<1024x256xbf16>, vector<2x256xf32> -> vector<2x256xf32>
    %c0_34 = arith.constant 0 : index
    %c512 = arith.constant 512 : index
    %35 = vector.load %arg12[%c0_34, %c512] : memref<2x768xf32, #tpu.memory_space<vmem>>, vector<2x256xf32>
    tpu.vector_store %arg12[%c0_34, %c512], %34 {strides = array<i32>} : memref<2x768xf32, #tpu.memory_space<vmem>>, vector<2x256xf32>,
    return
  }
  func.func @transform_0(%arg0: i32) -> (i32, i32) {
    %c0_i32 = arith.constant 0 : i32
    %c0_i32_0 = arith.constant 0 : i32
    %c0_i32_1 = arith.constant 0 : i32
    return %c0_i32, %c0_i32_0 : i32, i32
  }
  func.func @transform_1(%arg0: i32) -> (i32, i32) {
    %c0_i32 = arith.constant 0 : i32
    %c0_i32_0 = arith.constant 0 : i32
    %c0_i32_1 = arith.constant 0 : i32
    return %c0_i32, %c0_i32_0 : i32, i32
  }
  func.func @transform_2(%arg0: i32) -> (i32, i32) {
    %c0_i32 = arith.constant 0 : i32
    %c0_i32_0 = arith.constant 0 : i32
    %c0_i32_1 = arith.constant 0 : i32
    return %c0_i32, %c0_i32_0 : i32, i32
  }
  func.func @transform_3(%arg0: i32) -> (i32, i32) {
    %c0_i32 = arith.constant 0 : i32
    %c0_i32_0 = arith.constant 0 : i32
    %c0_i32_1 = arith.constant 0 : i32
    return %c0_i32, %c0_i32_0 : i32, i32
  }
  func.func @transform_4(%arg0: i32) -> (i32, i32) {
    %c0_i32 = arith.constant 0 : i32
    %c0_i32_0 = arith.constant 0 : i32
    %c0_i32_1 = arith.constant 0 : i32
    return %c0_i32, %c0_i32_0 : i32, i32
  }
  func.func @transform_5(%arg0: i32) -> (i32, i32) {
    %c0_i32 = arith.constant 0 : i32
    %c0_i32_0 = arith.constant 0 : i32
    %c0_i32_1 = arith.constant 0 : i32
    return %c0_i32, %c0_i32_0 : i32, i32
  }
  func.func @transform_6(%arg0: i32) -> (i32, i32) {
    %c0_i32 = arith.constant 0 : i32
    %c0_i32_0 = arith.constant 0 : i32
    %c0_i32_1 = arith.constant 0 : i32
    return %c0_i32, %c0_i32_0 : i32, i32
  }
  func.func @transform_7(%arg0: i32) -> (i32, i32) {
    %c0_i32 = arith.constant 0 : i32
    %c0_i32_0 = arith.constant 0 : i32
    %c0_i32_1 = arith.constant 0 : i32
    return %c0_i32, %c0_i32_0 : i32, i32
  }
  func.func @transform_8(%arg0: i32) -> (i32, i32) {
    %c0_i32 = arith.constant 0 : i32
    %c0_i32_0 = arith.constant 0 : i32
    %c0_i32_1 = arith.constant 0 : i32
    return %c0_i32, %c0_i32_0 : i32, i32
  }
  func.func @transform_9(%arg0: i32) -> (i32, i32) {
    %c0_i32 = arith.constant 0 : i32
    %c0_i32_0 = arith.constant 0 : i32
    %c0_i32_1 = arith.constant 0 : i32
    return %c0_i32, %c0_i32_0 : i32, i32
  }
  func.func @transform_10(%arg0: i32) -> (i32, i32) {
    %c0_i32 = arith.constant 0 : i32
    %c0_i32_0 = arith.constant 0 : i32
    %c0_i32_1 = arith.constant 0 : i32
    return %c0_i32, %c0_i32_0 : i32, i32
  }
  func.func @transform_11(%arg0: i32) -> (i32, i32) {
    %c0_i32 = arith.constant 0 : i32
    %c0_i32_0 = arith.constant 0 : i32
    %c0_i32_1 = arith.constant 0 : i32
    return %c0_i32, %c0_i32_0 : i32, i32
  }
}

</mosaic_0001>

<llo_original>
// kernel: psp_eg3d_forward.1
$region0: #{psp_eg3d_forward.1}
  #allocation0 [shape = 'u32[]', space=smem, size = 0x4, offset = 0x4, fixed_abs, tag = 'smem constant byte address 0x4 - core index']
  #allocation1 [shape = 'u32[144,128]{1,0:T(1,128)}', space=vmem, size = 0x12000, scoped, tag = 'internal scratch']
  %s0 = inlined_call_operand.vmem [shape: f32[2,8], index: 0, kind: input, shape index: {}]
  %s1 = inlined_call_operand.vmem [shape: f32[2,25], index: 1, kind: input, shape index: {}]
  %s2 = inlined_call_operand.vmem [shape: f32[8,1280], index: 2, kind: input, shape index: {}]
  %s3 = inlined_call_operand.vmem [shape: f32[1,1280], index: 3, kind: input, shape index: {}]
  %s4 = inlined_call_operand.vmem [shape: f32[8,64], index: 4, kind: input, shape index: {}]
  %s5 = inlined_call_operand.vmem [shape: f32[1,64], index: 5, kind: input, shape index: {}]
  %s6 = inlined_call_operand.hbm [shape: bf16[64,3072], index: 6, kind: input, shape index: {}]
  %s7 = inlined_call_operand.hbm [shape: f32[25,3072], index: 7, kind: input, shape index: {}]
  %s8 = inlined_call_operand.vmem [shape: f32[1,3072], index: 8, kind: input, shape index: {}]
  %s9 = inlined_call_operand.hbm [shape: bf16[1024,256], index: 9, kind: input, shape index: {}]
  %s10 = inlined_call_operand.vmem [shape: f32[2,1280], index: 10, kind: output, shape index: {0}]
  %s11 = inlined_call_operand.vmem [shape: f32[2,768], index: 11, kind: output, shape index: {1}]
  %12 = xla_tuple %s10, %s11
  %s13 = sld [smem:[#allocation0]]
  $region70: #{psp_eg3d_forward.1} parent=0
    _
  %s15 = ssub.s32 1, %s13
  %s16 = scalar_select 0, %s15, %s13
  $region1: #{psp_eg3d_forward.1} parent=0
    #allocation2 [shape = 'u8[393216]{0}', space=vmem, size = 0x60000, scoped, tag = 'input window, operand 6, single buffered']
    #allocation3 [shape = 's32[1]{0}', space=sflag, size = 0x4, scoped, tag = 'scoped memory for psp_eg3d_forward.1']
    #allocation4 [shape = 'u8[393216]{0}', space=vmem, size = 0x60000, scoped, tag = 'input window, operand 7, single buffered']
    #allocation5 [shape = 's32[1]{0}', space=sflag, size = 0x4, scoped, tag = 'scoped memory for psp_eg3d_forward.1']
    #allocation6 [shape = 'u8[524288]{0}', space=vmem, size = 0x80000, scoped, tag = 'input window, operand 9, single buffered']
    %17 = vsyncpa [#allocation3], 0
    %18 = vsyncpa [#allocation5], 0
    // Predicated region
    $region2: #{psp_eg3d_forward.1} parent=1 // pred_check
      _
    $region3: #{psp_eg3d_forward.1} parent=1 // pred_check_branch
      %20 = sbr.rel (0) target = $region5
    $region4: #{psp_eg3d_forward.1} parent=1 // pred_region
      _
    $region5: #{psp_eg3d_forward.1} parent=1 // pred_fallthru
      _
    // Predicated region
    $region6: #{psp_eg3d_forward.1} parent=1 // pred_check
      _
    $region7: #{psp_eg3d_forward.1} parent=1 // pred_check_branch
      %22 = sbr.rel (0) target = $region9
    $region8: #{psp_eg3d_forward.1} parent=1 // pred_region
      _
    $region9: #{psp_eg3d_forward.1} parent=1 // pred_fallthru
      _
    // Predicated region
    $region10: #{psp_eg3d_forward.1} parent=1 // pred_check
      _
    $region11: #{psp_eg3d_forward.1} parent=1 // pred_check_branch
      %24 = sbr.rel (0) target = $region13
    $region12: #{psp_eg3d_forward.1} parent=1 // pred_region
      _
    $region13: #{psp_eg3d_forward.1} parent=1 // pred_fallthru
      _
    // Predicated region
    $region14: #{psp_eg3d_forward.1} parent=1 // pred_check
      _
    $region15: #{psp_eg3d_forward.1} parent=1 // pred_check_branch
      %26 = sbr.rel (0) target = $region17
    $region16: #{psp_eg3d_forward.1} parent=1 // pred_region
      _
    $region17: #{psp_eg3d_forward.1} parent=1 // pred_fallthru
      _
    // Predicated region
    $region18: #{psp_eg3d_forward.1} parent=1 // pred_check
      _
    $region19: #{psp_eg3d_forward.1} parent=1 // pred_check_branch
      %28 = sbr.rel (0) target = $region21
    $region20: #{psp_eg3d_forward.1} parent=1 // pred_region
      _
    $region21: #{psp_eg3d_forward.1} parent=1 // pred_fallthru
      _
    // Predicated region
    $region22: #{psp_eg3d_forward.1} parent=1 // pred_check
      _
    $region23: #{psp_eg3d_forward.1} parent=1 // pred_check_branch
      %30 = sbr.rel (0) target = $region25
    $region24: #{psp_eg3d_forward.1} parent=1 // pred_region
      _
    $region25: #{psp_eg3d_forward.1} parent=1 // pred_fallthru
      _
    // Predicated region
    $region26: #{psp_eg3d_forward.1} parent=1 // pred_check
      _
    $region27: #{psp_eg3d_forward.1} parent=1 // pred_check_branch
      %32 = sbr.rel (0) target = $region29
    $region28: #{psp_eg3d_forward.1} parent=1 // pred_region
      %s34 = ssub.s32 12288, 12288
      %35 = vsyncadd [#allocation3], %s34
      %s36 = sshll.u32 [#allocation2], 4
      %s37 = int_to_ptr.vmem [resolvable:$true] %s36
      %42 = dma.hbm_to_vmem [thread:$0]  %s6, 12288, %s37, [#allocation3], 1536, 1536, 96
    $region29: #{psp_eg3d_forward.1} parent=1 // pred_fallthru
      _
    // Predicated region
    $region30: #{psp_eg3d_forward.1} parent=1 // pred_check
      _
    $region31: #{psp_eg3d_forward.1} parent=1 // pred_check_branch
      %44 = sbr.rel (0) target = $region33
    $region32: #{psp_eg3d_forward.1} parent=1 // pred_region
      %s46 = ssub.s32 12288, 12288
      %47 = vsyncadd [#allocation5], %s46
      %s48 = sshll.u32 [#allocation4], 4
      %s49 = int_to_ptr.vmem [resolvable:$true] %s48
      %54 = dma.hbm_to_vmem [thread:$0]  %s7, 12288, %s49, [#allocation5], 3072, 3072, 192
    $region33: #{psp_eg3d_forward.1} parent=1 // pred_fallthru
      _
    // Predicated region
    $region34: #{psp_eg3d_forward.1} parent=1 // pred_check
      _
    $region35: #{psp_eg3d_forward.1} parent=1 // pred_check_branch
      %56 = sbr.rel (0) target = $region37
    $region36: #{psp_eg3d_forward.1} parent=1 // pred_region
      _
    $region37: #{psp_eg3d_forward.1} parent=1 // pred_fallthru
      _
    // Predicated region
    $region38: #{psp_eg3d_forward.1} parent=1 // pred_check
      _
    $region39: #{psp_eg3d_forward.1} parent=1 // pred_check_branch
      %58 = sbr.rel (0) target = $region41
    $region40: #{psp_eg3d_forward.1} parent=1 // pred_region
      %s60 = ssub.s32 16384, 16384
      %61 = vsyncadd [#allocation5], %s60
      %s62 = sshll.u32 [#allocation6], 4
      %s63 = int_to_ptr.vmem [resolvable:$true] %s62
      %68 = dma.hbm_to_vmem [thread:$0]  %s9, 16384, %s63, [#allocation5], 128, 128, 8
    $region41: #{psp_eg3d_forward.1} parent=1 // pred_fallthru
      _
    // Predicated region
    $region42: #{psp_eg3d_forward.1} parent=1 // pred_check
      _
    $region43: #{psp_eg3d_forward.1} parent=1 // pred_check_branch
      %70 = sbr.rel (0) target = $region45
    $region44: #{psp_eg3d_forward.1} parent=1 // pred_region
      %71 = dma.done [#allocation3], 12288
    $region45: #{psp_eg3d_forward.1} parent=1 // pred_fallthru
      _
    // Predicated region
    $region46: #{psp_eg3d_forward.1} parent=1 // pred_check
      _
    $region47: #{psp_eg3d_forward.1} parent=1 // pred_check_branch
      %73 = sbr.rel (0) target = $region49
    $region48: #{psp_eg3d_forward.1} parent=1 // pred_region
      %74 = dma.done [#allocation5], 12288
    $region49: #{psp_eg3d_forward.1} parent=1 // pred_fallthru
      _
    // Predicated region
    $region50: #{psp_eg3d_forward.1} parent=1 // pred_check
      _
    $region51: #{psp_eg3d_forward.1} parent=1 // pred_check_branch
      %76 = sbr.rel (0) target = $region53
    $region52: #{psp_eg3d_forward.1} parent=1 // pred_region
      %77 = dma.done [#allocation5], 16384
    $region53: #{psp_eg3d_forward.1} parent=1 // pred_fallthru
      _
    %v79 = vld [vmem:[%s0] sm:$0x3]
    %v80 = vld [vmem:[%s1] sm:$0x3]
    %v81 = vld [vmem:[%s2] sm:$0xff]
    %v82 = vld [vmem:[%s2 + $0x8] sm:$0xff]
    %v83 = vld [vmem:[%s2 + $0x10] sm:$0xff]
    %v84 = vld [vmem:[%s2 + $0x18] sm:$0xff]
    %v85 = vld [vmem:[%s2 + $0x20] sm:$0xff]
    %v86 = vld [vmem:[%s2 + $0x28] sm:$0xff]
    %v87 = vld [vmem:[%s2 + $0x30] sm:$0xff]
    %v88 = vld [vmem:[%s2 + $0x38] sm:$0xff]
    %v89 = vld [vmem:[%s2 + $0x40] sm:$0xff]
    %v90 = vld [vmem:[%s2 + $0x48] sm:$0xff]
    %v91 = vld [vmem:[%s3] sm:$0xff]
    %v92 = vld [vmem:[%s3 + $0x8] sm:$0x3]
    %v93 = vld [vmem:[%s4] sm:$0xff]
    %v94 = vld [vmem:[%s5] sm:$0x1]
    %v95 = vld [vmem:[#allocation2] sm:$0xff]
    %v96 = vld [vmem:[#allocation2 + $0x8] sm:$0xff]
    %v97 = vld [vmem:[#allocation2 + $0x10] sm:$0xff]
    %v98 = vld [vmem:[#allocation2 + $0x18] sm:$0xff]
    %v99 = vld [vmem:[#allocation2 + $0x20] sm:$0xff]
    %v100 = vld [vmem:[#allocation2 + $0x28] sm:$0xff]
    %v101 = vld [vmem:[#allocation2 + $0x30] sm:$0xff]
    %v102 = vld [vmem:[#allocation2 + $0x38] sm:$0xff]
    %v103 = vld [vmem:[#allocation2 + $0x40] sm:$0xff]
    %v104 = vld [vmem:[#allocation2 + $0x48] sm:$0xff]
    %v105 = vld [vmem:[#allocation2 + $0x50] sm:$0xff]
    %v106 = vld [vmem:[#allocation2 + $0x58] sm:$0xff]
    %v107 = vld [vmem:[#allocation2 + $0x60] sm:$0xff]
    %v108 = vld [vmem:[#allocation2 + $0x68] sm:$0xff]
    %v109 = vld [vmem:[#allocation2 + $0x70] sm:$0xff]
    %v110 = vld [vmem:[#allocation2 + $0x78] sm:$0xff]
    %v111 = vld [vmem:[#allocation2 + $0x80] sm:$0xff]
    %v112 = vld [vmem:[#allocation2 + $0x88] sm:$0xff]
    %v113 = vld [vmem:[#allocation2 + $0x90] sm:$0xff]
    %v114 = vld [vmem:[#allocation2 + $0x98] sm:$0xff]
    %v115 = vld [vmem:[#allocation2 + $0xa0] sm:$0xff]
    %v116 = vld [vmem:[#allocation2 + $0xa8] sm:$0xff]
    %v117 = vld [vmem:[#allocation2 + $0xb0] sm:$0xff]
    %v118 = vld [vmem:[#allocation2 + $0xb8] sm:$0xff]
    %v119 = vld [vmem:[#allocation2 + $0xc0] sm:$0xff]
    %v120 = vld [vmem:[#allocation2 + $0xc8] sm:$0xff]
    %v121 = vld [vmem:[#allocation2 + $0xd0] sm:$0xff]
    %v122 = vld [vmem:[#allocation2 + $0xd8] sm:$0xff]
    %v123 = vld [vmem:[#allocation2 + $0xe0] sm:$0xff]
    %v124 = vld [vmem:[#allocation2 + $0xe8] sm:$0xff]
    %v125 = vld [vmem:[#allocation2 + $0xf0] sm:$0xff]
    %v126 = vld [vmem:[#allocation2 + $0xf8] sm:$0xff]
    %v127 = vld [vmem:[#allocation2 + $0x100] sm:$0xff]
    %v128 = vld [vmem:[#allocation2 + $0x108] sm:$0xff]
    %v129 = vld [vmem:[#allocation2 + $0x110] sm:$0xff]
    %v130 = vld [vmem:[#allocation2 + $0x118] sm:$0xff]
    %v131 = vld [vmem:[#allocation2 + $0x120] sm:$0xff]
    %v132 = vld [vmem:[#allocation2 + $0x128] sm:$0xff]
    %v133 = vld [vmem:[#allocation2 + $0x130] sm:$0xff]
    %v134 = vld [vmem:[#allocation2 + $0x138] sm:$0xff]
    %v135 = vld [vmem:[#allocation2 + $0x140] sm:$0xff]
    %v136 = vld [vmem:[#allocation2 + $0x148] sm:$0xff]
    %v137 = vld [vmem:[#allocation2 + $0x150] sm:$0xff]
    %v138 = vld [vmem:[#allocation2 + $0x158] sm:$0xff]
    %v139 = vld [vmem:[#allocation2 + $0x160] sm:$0xff]
    %v140 = vld [vmem:[#allocation2 + $0x168] sm:$0xff]
    %v141 = vld [vmem:[#allocation2 + $0x170] sm:$0xff]
    %v142 = vld [vmem:[#allocation2 + $0x178] sm:$0xff]
    %v143 = vld [vmem:[#allocation2 + $0x180] sm:$0xff]
    %v144 = vld [vmem:[#allocation2 + $0x188] sm:$0xff]
    %v145 = vld [vmem:[#allocation2 + $0x190] sm:$0xff]
    %v146 = vld [vmem:[#allocation2 + $0x198] sm:$0xff]
    %v147 = vld [vmem:[#allocation2 + $0x1a0] sm:$0xff]
    %v148 = vld [vmem:[#allocation2 + $0x1a8] sm:$0xff]
    %v149 = vld [vmem:[#allocation2 + $0x1b0] sm:$0xff]
    %v150 = vld [vmem:[#allocation2 + $0x1b8] sm:$0xff]
    %v151 = vld [vmem:[#allocation2 + $0x1c0] sm:$0xff]
    %v152 = vld [vmem:[#allocation2 + $0x1c8] sm:$0xff]
    %v153 = vld [vmem:[#allocation2 + $0x1d0] sm:$0xff]
    %v154 = vld [vmem:[#allocation2 + $0x1d8] sm:$0xff]
    %v155 = vld [vmem:[#allocation2 + $0x1e0] sm:$0xff]
    %v156 = vld [vmem:[#allocation2 + $0x1e8] sm:$0xff]
    %v157 = vld [vmem:[#allocation2 + $0x1f0] sm:$0xff]
    %v158 = vld [vmem:[#allocation2 + $0x1f8] sm:$0xff]
    %v159 = vld [vmem:[#allocation2 + $0x200] sm:$0xff]
    %v160 = vld [vmem:[#allocation2 + $0x208] sm:$0xff]
    %v161 = vld [vmem:[#allocation2 + $0x210] sm:$0xff]
    %v162 = vld [vmem:[#allocation2 + $0x218] sm:$0xff]
    %v163 = vld [vmem:[#allocation2 + $0x220] sm:$0xff]
    %v164 = vld [vmem:[#allocation2 + $0x228] sm:$0xff]
    %v165 = vld [vmem:[#allocation2 + $0x230] sm:$0xff]
    %v166 = vld [vmem:[#allocation2 + $0x238] sm:$0xff]
    %v167 = vld [vmem:[#allocation2 + $0x240] sm:$0xff]
    %v168 = vld [vmem:[#allocation2 + $0x248] sm:$0xff]
    %v169 = vld [vmem:[#allocation2 + $0x250] sm:$0xff]
    %v170 = vld [vmem:[#allocation2 + $0x258] sm:$0xff]
    %v171 = vld [vmem:[#allocation2 + $0x260] sm:$0xff]
    %v172 = vld [vmem:[#allocation2 + $0x268] sm:$0xff]
    %v173 = vld [vmem:[#allocation2 + $0x270] sm:$0xff]
    %v174 = vld [vmem:[#allocation2 + $0x278] sm:$0xff]
    %v175 = vld [vmem:[#allocation2 + $0x280] sm:$0xff]
    %v176 = vld [vmem:[#allocation2 + $0x288] sm:$0xff]
    %v177 = vld [vmem:[#allocation2 + $0x290] sm:$0xff]
    %v178 = vld [vmem:[#allocation2 + $0x298] sm:$0xff]
    %v179 = vld [vmem:[#allocation2 + $0x2a0] sm:$0xff]
    %v180 = vld [vmem:[#allocation2 + $0x2a8] sm:$0xff]
    %v181 = vld [vmem:[#allocation2 + $0x2b0] sm:$0xff]
    %v182 = vld [vmem:[#allocation2 + $0x2b8] sm:$0xff]
    %v183 = vld [vmem:[#allocation2 + $0x2c0] sm:$0xff]
    %v184 = vld [vmem:[#allocation2 + $0x2c8] sm:$0xff]
    %v185 = vld [vmem:[#allocation2 + $0x2d0] sm:$0xff]
    %v186 = vld [vmem:[#allocation2 + $0x2d8] sm:$0xff]
    %v187 = vld [vmem:[#allocation2 + $0x2e0] sm:$0xff]
    %v188 = vld [vmem:[#allocation2 + $0x2e8] sm:$0xff]
    %v189 = vld [vmem:[#allocation2 + $0x2f0] sm:$0xff]
    %v190 = vld [vmem:[#allocation2 + $0x2f8] sm:$0xff]
    %v191 = vld [vmem:[#allocation4] sm:$0xff]
    %v192 = vld [vmem:[#allocation4 + $0x8] sm:$0xff]
    %v193 = vld [vmem:[#allocation4 + $0x10] sm:$0xff]
    %v194 = vld [vmem:[#allocation4 + $0x18] sm:$0xff]
    %v195 = vld [vmem:[#allocation4 + $0x20] sm:$0xff]
    %v196 = vld [vmem:[#allocation4 + $0x28] sm:$0xff]
    %v197 = vld [vmem:[#allocation4 + $0x30] sm:$0xff]
    %v198 = vld [vmem:[#allocation4 + $0x38] sm:$0xff]
    %v199 = vld [vmem:[#allocation4 + $0x40] sm:$0xff]
    %v200 = vld [vmem:[#allocation4 + $0x48] sm:$0xff]
    %v201 = vld [vmem:[#allocation4 + $0x50] sm:$0xff]
    %v202 = vld [vmem:[#allocation4 + $0x58] sm:$0xff]
    %v203 = vld [vmem:[#allocation4 + $0x60] sm:$0xff]
    %v204 = vld [vmem:[#allocation4 + $0x68] sm:$0xff]
    %v205 = vld [vmem:[#allocation4 + $0x70] sm:$0xff]
    %v206 = vld [vmem:[#allocation4 + $0x78] sm:$0xff]
    %v207 = vld [vmem:[#allocation4 + $0x80] sm:$0xff]
    %v208 = vld [vmem:[#allocation4 + $0x88] sm:$0xff]
    %v209 = vld [vmem:[#allocation4 + $0x90] sm:$0xff]
    %v210 = vld [vmem:[#allocation4 + $0x98] sm:$0xff]
    %v211 = vld [vmem:[#allocation4 + $0xa0] sm:$0xff]
    %v212 = vld [vmem:[#allocation4 + $0xa8] sm:$0xff]
    %v213 = vld [vmem:[#allocation4 + $0xb0] sm:$0xff]
    %v214 = vld [vmem:[#allocation4 + $0xb8] sm:$0xff]
    %v215 = vld [vmem:[#allocation4 + $0xc0] sm:$0xff]
    %v216 = vld [vmem:[#allocation4 + $0xc8] sm:$0xff]
    %v217 = vld [vmem:[#allocation4 + $0xd0] sm:$0xff]
    %v218 = vld [vmem:[#allocation4 + $0xd8] sm:$0xff]
    %v219 = vld [vmem:[#allocation4 + $0xe0] sm:$0xff]
    %v220 = vld [vmem:[#allocation4 + $0xe8] sm:$0xff]
    %v221 = vld [vmem:[#allocation4 + $0xf0] sm:$0xff]
    %v222 = vld [vmem:[#allocation4 + $0xf8] sm:$0xff]
    %v223 = vld [vmem:[#allocation4 + $0x100] sm:$0xff]
    %v224 = vld [vmem:[#allocation4 + $0x108] sm:$0xff]
    %v225 = vld [vmem:[#allocation4 + $0x110] sm:$0xff]
    %v226 = vld [vmem:[#allocation4 + $0x118] sm:$0xff]
    %v227 = vld [vmem:[#allocation4 + $0x120] sm:$0xff]
    %v228 = vld [vmem:[#allocation4 + $0x128] sm:$0xff]
    %v229 = vld [vmem:[#allocation4 + $0x130] sm:$0xff]
    %v230 = vld [vmem:[#allocation4 + $0x138] sm:$0xff]
    %v231 = vld [vmem:[#allocation4 + $0x140] sm:$0xff]
    %v232 = vld [vmem:[#allocation4 + $0x148] sm:$0xff]
    %v233 = vld [vmem:[#allocation4 + $0x150] sm:$0xff]
    %v234 = vld [vmem:[#allocation4 + $0x158] sm:$0xff]
    %v235 = vld [vmem:[#allocation4 + $0x160] sm:$0xff]
    %v236 = vld [vmem:[#allocation4 + $0x168] sm:$0xff]
    %v237 = vld [vmem:[#allocation4 + $0x170] sm:$0xff]
    %v238 = vld [vmem:[#allocation4 + $0x178] sm:$0xff]
    %v239 = vld [vmem:[#allocation4 + $0x180] sm:$0xff]
    %v240 = vld [vmem:[#allocation4 + $0x188] sm:$0xff]
    %v241 = vld [vmem:[#allocation4 + $0x190] sm:$0xff]
    %v242 = vld [vmem:[#allocation4 + $0x198] sm:$0xff]
    %v243 = vld [vmem:[#allocation4 + $0x1a0] sm:$0xff]
    %v244 = vld [vmem:[#allocation4 + $0x1a8] sm:$0xff]
    %v245 = vld [vmem:[#allocation4 + $0x1b0] sm:$0xff]
    %v246 = vld [vmem:[#allocation4 + $0x1b8] sm:$0xff]
    %v247 = vld [vmem:[#allocation4 + $0x1c0] sm:$0xff]
    %v248 = vld [vmem:[#allocation4 + $0x1c8] sm:$0xff]
    %v249 = vld [vmem:[#allocation4 + $0x1d0] sm:$0xff]
    %v250 = vld [vmem:[#allocation4 + $0x1d8] sm:$0xff]
    %v251 = vld [vmem:[#allocation4 + $0x1e0] sm:$0xff]
    %v252 = vld [vmem:[#allocation4 + $0x1e8] sm:$0xff]
    %v253 = vld [vmem:[#allocation4 + $0x1f0] sm:$0xff]
    %v254 = vld [vmem:[#allocation4 + $0x1f8] sm:$0xff]
    %v255 = vld [vmem:[#allocation4 + $0x200] sm:$0xff]
    %v256 = vld [vmem:[#allocation4 + $0x208] sm:$0xff]
    %v257 = vld [vmem:[#allocation4 + $0x210] sm:$0xff]
    %v258 = vld [vmem:[#allocation4 + $0x218] sm:$0xff]
    %v259 = vld [vmem:[#allocation4 + $0x220] sm:$0xff]
    %v260 = vld [vmem:[#allocation4 + $0x228] sm:$0xff]
    %v261 = vld [vmem:[#allocation4 + $0x230] sm:$0xff]
    %v262 = vld [vmem:[#allocation4 + $0x238] sm:$0xff]
    %v263 = vld [vmem:[#allocation4 + $0x240] sm:$0x1]
    %v264 = vld [vmem:[#allocation4 + $0x248] sm:$0x1]
    %v265 = vld [vmem:[#allocation4 + $0x250] sm:$0x1]
    %v266 = vld [vmem:[#allocation4 + $0x258] sm:$0x1]
    %v267 = vld [vmem:[#allocation4 + $0x260] sm:$0x1]
    %v268 = vld [vmem:[#allocation4 + $0x268] sm:$0x1]
    %v269 = vld [vmem:[#allocation4 + $0x270] sm:$0x1]
    %v270 = vld [vmem:[#allocation4 + $0x278] sm:$0x1]
    %v271 = vld [vmem:[#allocation4 + $0x280] sm:$0x1]
    %v272 = vld [vmem:[#allocation4 + $0x288] sm:$0x1]
    %v273 = vld [vmem:[#allocation4 + $0x290] sm:$0x1]
    %v274 = vld [vmem:[#allocation4 + $0x298] sm:$0x1]
    %v275 = vld [vmem:[#allocation4 + $0x2a0] sm:$0x1]
    %v276 = vld [vmem:[#allocation4 + $0x2a8] sm:$0x1]
    %v277 = vld [vmem:[#allocation4 + $0x2b0] sm:$0x1]
    %v278 = vld [vmem:[#allocation4 + $0x2b8] sm:$0x1]
    %v279 = vld [vmem:[#allocation4 + $0x2c0] sm:$0x1]
    %v280 = vld [vmem:[#allocation4 + $0x2c8] sm:$0x1]
    %v281 = vld [vmem:[#allocation4 + $0x2d0] sm:$0x1]
    %v282 = vld [vmem:[#allocation4 + $0x2d8] sm:$0x1]
    %v283 = vld [vmem:[#allocation4 + $0x2e0] sm:$0x1]
    %v284 = vld [vmem:[#allocation4 + $0x2e8] sm:$0x1]
    %v285 = vld [vmem:[#allocation4 + $0x2f0] sm:$0x1]
    %v286 = vld [vmem:[#allocation4 + $0x2f8] sm:$0x1]
    %v287 = vld [vmem:[%s8] sm:$0xff]
    %v288 = vld [vmem:[%s8 + $0x8] sm:$0xff]
    %v289 = vld [vmem:[%s8 + $0x10] sm:$0xff]
    %v292 = vlaneseq
    %v293 = vshrl.u32 %v292, 7
    %v294 = vsub.s32 0, %v293
    %v295 = vrot.slane %v91, %v294
    %v296 = vlaneseq
    %v297 = vshrl.u32 %v296, 7
    %v298 = vsub.s32 1, %v297
    %v299 = vrot.slane %v91, %v298
    %v300 = vlaneseq
    %v301 = vshrl.u32 %v300, 7
    %v302 = vsub.s32 2, %v301
    %v303 = vrot.slane %v91, %v302
    %v304 = vlaneseq
    %v305 = vshrl.u32 %v304, 7
    %v306 = vsub.s32 3, %v305
    %v307 = vrot.slane %v91, %v306
    %v308 = vlaneseq
    %v309 = vshrl.u32 %v308, 7
    %v310 = vsub.s32 4, %v309
    %v311 = vrot.slane %v91, %v310
    %v312 = vlaneseq
    %v313 = vshrl.u32 %v312, 7
    %v314 = vsub.s32 5, %v313
    %v315 = vrot.slane %v91, %v314
    %v316 = vlaneseq
    %v317 = vshrl.u32 %v316, 7
    %v318 = vsub.s32 6, %v317
    %v319 = vrot.slane %v91, %v318
    %v320 = vlaneseq
    %v321 = vshrl.u32 %v320, 7
    %v322 = vsub.s32 7, %v321
    %v323 = vrot.slane %v91, %v322
    %v324 = vlaneseq
    %v325 = vshrl.u32 %v324, 7
    %v326 = vsub.s32 0, %v325
    %v327 = vrot.slane %v92, %v326
    %v328 = vlaneseq
    %v329 = vshrl.u32 %v328, 7
    %v330 = vsub.s32 1, %v329
    %v331 = vrot.slane %v92, %v330
    %vm342 = vcmask 64512
    %v344 = vsel %vm342, %v79, 0
    %346 = vmatprep.subr.mxu0 %v82
    %347 = vmatpush1.msra.mxu0 %v81
    %348 = vmatprep.subr.mxu0 0.0
    %349 = vmatpush1.msra.mxu0 0.0
    %350 = vmatprep.subr.mxu0 0.0
    %351 = vmatpush1.msra.mxu0 0.0
    %352 = vmatprep.subr.mxu0 0.0
    %353 = vmatpush1.msra.mxu0 0.0
    %354 = vmatprep.subr.mxu0 0.0
    %355 = vmatpush1.msra.mxu0 0.0
    %356 = vmatprep.subr.mxu0 0.0
    %357 = vmatpush1.msra.mxu0 0.0
    %358 = vmatprep.subr.mxu0 0.0
    %359 = vmatpush1.msra.mxu0 0.0
    %360 = vmatprep.subr.mxu0 0.0
    %361 = vmatpush1.msra.mxu0 0.0
    %362 = vmatprep.subr.mxu0 0.0
    %363 = vmatpush1.msra.mxu0 0.0
    %364 = vmatprep.subr.mxu0 0.0
    %365 = vmatpush1.msra.mxu0 0.0
    %366 = vmatprep.subr.mxu0 0.0
    %367 = vmatpush1.msra.mxu0 0.0
    %368 = vmatprep.subr.mxu0 0.0
    %369 = vmatpush1.msra.mxu0 0.0
    %370 = vmatprep.subr.mxu0 0.0
    %371 = vmatpush1.msra.mxu0 0.0
    %372 = vmatprep.subr.mxu0 0.0
    %373 = vmatpush1.msra.mxu0 0.0
    %374 = vmatprep.subr.mxu0 0.0
    %375 = vmatpush1.msra.mxu0 0.0
    %376 = vmatprep.subr.mxu0 0.0
    %377 = vmatpush1.msra.mxu0 0.0
    %378 = vmatprep.subr.mxu0 0.0
    %379 = vmatpush1.msra.mxu0 0.0
    %380 = vmatprep.subr.mxu0 0.0
    %381 = vmatpush1.msra.mxu0 0.0
    %382 = vmatprep.subr.mxu0 0.0
    %383 = vmatpush1.msra.mxu0 0.0
    %384 = vmatprep.subr.mxu0 0.0
    %385 = vmatpush1.msra.mxu0 0.0
    %386 = vmatprep.subr.mxu0 0.0
    %387 = vmatpush1.msra.mxu0 0.0
    %388 = vmatprep.subr.mxu0 0.0
    %389 = vmatpush1.msra.mxu0 0.0
    %390 = vmatprep.subr.mxu0 0.0
    %391 = vmatpush1.msra.mxu0 0.0
    %392 = vmatprep.subr.mxu0 0.0
    %393 = vmatpush1.msra.mxu0 0.0
    %394 = vmatprep.subr.mxu0 0.0
    %395 = vmatpush1.msra.mxu0 0.0
    %396 = vmatprep.subr.mxu0 0.0
    %397 = vmatpush1.msra.mxu0 0.0
    %398 = vmatprep.subr.mxu0 0.0
    %399 = vmatpush1.msra.mxu0 0.0
    %400 = vmatprep.subr.mxu0 0.0
    %401 = vmatpush1.msra.mxu0 0.0
    %402 = vmatprep.subr.mxu0 0.0
    %403 = vmatpush1.msra.mxu0 0.0
    %404 = vmatprep.subr.mxu0 0.0
    %405 = vmatpush1.msra.mxu0 0.0
    %406 = vmatprep.subr.mxu0 0.0
    %407 = vmatpush1.msra.mxu0 0.0
    %408 = vmatprep.subr.mxu0 0.0
    %409 = vmatpush1.msra.mxu0 0.0
    %410 = vmatprep.mubr.f32.mxu0 0.0
    %411 = vmatmul.mubr.f32.gmra.mrb[0].mxu0 %v344
    %v412 = vpop.f32.mrb[0].mxu0
    %v413 = vadd.f32 %v295, %v412
    %v414 = vpop.f32.mrb[0].mxu0
    %v415 = vadd.f32 %v299, %v414
    %416 = vdwg.mxu0
    %417 = vmatprep.subr.mxu0 %v84
    %418 = vmatpush1.msra.mxu0 %v83
    %419 = vmatprep.subr.mxu0 0.0
    %420 = vmatpush1.msra.mxu0 0.0
    %421 = vmatprep.subr.mxu0 0.0
    %422 = vmatpush1.msra.mxu0 0.0
    %423 = vmatprep.subr.mxu0 0.0
    %424 = vmatpush1.msra.mxu0 0.0
    %425 = vmatprep.subr.mxu0 0.0
    %426 = vmatpush1.msra.mxu0 0.0
    %427 = vmatprep.subr.mxu0 0.0
    %428 = vmatpush1.msra.mxu0 0.0
    %429 = vmatprep.subr.mxu0 0.0
    %430 = vmatpush1.msra.mxu0 0.0
    %431 = vmatprep.subr.mxu0 0.0
    %432 = vmatpush1.msra.mxu0 0.0
    %433 = vmatprep.subr.mxu0 0.0
    %434 = vmatpush1.msra.mxu0 0.0
    %435 = vmatprep.subr.mxu0 0.0
    %436 = vmatpush1.msra.mxu0 0.0
    %437 = vmatprep.subr.mxu0 0.0
    %438 = vmatpush1.msra.mxu0 0.0
    %439 = vmatprep.subr.mxu0 0.0
    %440 = vmatpush1.msra.mxu0 0.0
    %441 = vmatprep.subr.mxu0 0.0
    %442 = vmatpush1.msra.mxu0 0.0
    %443 = vmatprep.subr.mxu0 0.0
    %444 = vmatpush1.msra.mxu0 0.0
    %445 = vmatprep.subr.mxu0 0.0
    %446 = vmatpush1.msra.mxu0 0.0
    %447 = vmatprep.subr.mxu0 0.0
    %448 = vmatpush1.msra.mxu0 0.0
    %449 = vmatprep.subr.mxu0 0.0
    %450 = vmatpush1.msra.mxu0 0.0
    %451 = vmatprep.subr.mxu0 0.0
    %452 = vmatpush1.msra.mxu0 0.0
    %453 = vmatprep.subr.mxu0 0.0
    %454 = vmatpush1.msra.mxu0 0.0
    %455 = vmatprep.subr.mxu0 0.0
    %456 = vmatpush1.msra.mxu0 0.0
    %457 = vmatprep.subr.mxu0 0.0
    %458 = vmatpush1.msra.mxu0 0.0
    %459 = vmatprep.subr.mxu0 0.0
    %460 = vmatpush1.msra.mxu0 0.0
    %461 = vmatprep.subr.mxu0 0.0
    %462 = vmatpush1.msra.mxu0 0.0
    %463 = vmatprep.subr.mxu0 0.0
    %464 = vmatpush1.msra.mxu0 0.0
    %465 = vmatprep.subr.mxu0 0.0
    %466 = vmatpush1.msra.mxu0 0.0
    %467 = vmatprep.subr.mxu0 0.0
    %468 = vmatpush1.msra.mxu0 0.0
    %469 = vmatprep.subr.mxu0 0.0
    %470 = vmatpush1.msra.mxu0 0.0
    %471 = vmatprep.subr.mxu0 0.0
    %472 = vmatpush1.msra.mxu0 0.0
    %473 = vmatprep.subr.mxu0 0.0
    %474 = vmatpush1.msra.mxu0 0.0
    %475 = vmatprep.subr.mxu0 0.0
    %476 = vmatpush1.msra.mxu0 0.0
    %477 = vmatprep.subr.mxu0 0.0
    %478 = vmatpush1.msra.mxu0 0.0
    %479 = vmatprep.subr.mxu0 0.0
    %480 = vmatpush1.msra.mxu0 0.0
    %481 = vmatprep.mubr.f32.mxu0 0.0
    %482 = vmatmul.mubr.f32.gmra.mrb[0].mxu0 %v344
    %v483 = vpop.f32.mrb[0].mxu0
    %v484 = vadd.f32 %v303, %v483
    %v485 = vpop.f32.mrb[0].mxu0
    %v486 = vadd.f32 %v307, %v485
    %487 = vdwg.mxu0
    %488 = vmatprep.subr.mxu0 %v86
    %489 = vmatpush1.msra.mxu0 %v85
    %490 = vmatprep.subr.mxu0 0.0
    %491 = vmatpush1.msra.mxu0 0.0
    %492 = vmatprep.subr.mxu0 0.0
    %493 = vmatpush1.msra.mxu0 0.0
    %494 = vmatprep.subr.mxu0 0.0
    %495 = vmatpush1.msra.mxu0 0.0
    %496 = vmatprep.subr.mxu0 0.0
    %497 = vmatpush1.msra.mxu0 0.0
    %498 = vmatprep.subr.mxu0 0.0
    %499 = vmatpush1.msra.mxu0 0.0
    %500 = vmatprep.subr.mxu0 0.0
    %501 = vmatpush1.msra.mxu0 0.0
    %502 = vmatprep.subr.mxu0 0.0
    %503 = vmatpush1.msra.mxu0 0.0
    %504 = vmatprep.subr.mxu0 0.0
    %505 = vmatpush1.msra.mxu0 0.0
    %506 = vmatprep.subr.mxu0 0.0
    %507 = vmatpush1.msra.mxu0 0.0
    %508 = vmatprep.subr.mxu0 0.0
    %509 = vmatpush1.msra.mxu0 0.0
    %510 = vmatprep.subr.mxu0 0.0
    %511 = vmatpush1.msra.mxu0 0.0
    %512 = vmatprep.subr.mxu0 0.0
    %513 = vmatpush1.msra.mxu0 0.0
    %514 = vmatprep.subr.mxu0 0.0
    %515 = vmatpush1.msra.mxu0 0.0
    %516 = vmatprep.subr.mxu0 0.0
    %517 = vmatpush1.msra.mxu0 0.0
    %518 = vmatprep.subr.mxu0 0.0
    %519 = vmatpush1.msra.mxu0 0.0
    %520 = vmatprep.subr.mxu0 0.0
    %521 = vmatpush1.msra.mxu0 0.0
    %522 = vmatprep.subr.mxu0 0.0
    %523 = vmatpush1.msra.mxu0 0.0
    %524 = vmatprep.subr.mxu0 0.0
    %525 = vmatpush1.msra.mxu0 0.0
    %526 = vmatprep.subr.mxu0 0.0
    %527 = vmatpush1.msra.mxu0 0.0
    %528 = vmatprep.subr.mxu0 0.0
    %529 = vmatpush1.msra.mxu0 0.0
    %530 = vmatprep.subr.mxu0 0.0
    %531 = vmatpush1.msra.mxu0 0.0
    %532 = vmatprep.subr.mxu0 0.0
    %533 = vmatpush1.msra.mxu0 0.0
    %534 = vmatprep.subr.mxu0 0.0
    %535 = vmatpush1.msra.mxu0 0.0
    %536 = vmatprep.subr.mxu0 0.0
    %537 = vmatpush1.msra.mxu0 0.0
    %538 = vmatprep.subr.mxu0 0.0
    %539 = vmatpush1.msra.mxu0 0.0
    %540 = vmatprep.subr.mxu0 0.0
    %541 = vmatpush1.msra.mxu0 0.0
    %542 = vmatprep.subr.mxu0 0.0
    %543 = vmatpush1.msra.mxu0 0.0
    %544 = vmatprep.subr.mxu0 0.0
    %545 = vmatpush1.msra.mxu0 0.0
    %546 = vmatprep.subr.mxu0 0.0
    %547 = vmatpush1.msra.mxu0 0.0
    %548 = vmatprep.subr.mxu0 0.0
    %549 = vmatpush1.msra.mxu0 0.0
    %550 = vmatprep.subr.mxu0 0.0
    %551 = vmatpush1.msra.mxu0 0.0
    %552 = vmatprep.mubr.f32.mxu0 0.0
    %553 = vmatmul.mubr.f32.gmra.mrb[0].mxu0 %v344
    %v554 = vpop.f32.mrb[0].mxu0
    %v555 = vadd.f32 %v311, %v554
    %v556 = vpop.f32.mrb[0].mxu0
    %v557 = vadd.f32 %v315, %v556
    %558 = vdwg.mxu0
    %559 = vmatprep.subr.mxu0 %v88
    %560 = vmatpush1.msra.mxu0 %v87
    %561 = vmatprep.subr.mxu0 0.0
    %562 = vmatpush1.msra.mxu0 0.0
    %563 = vmatprep.subr.mxu0 0.0
    %564 = vmatpush1.msra.mxu0 0.0
    %565 = vmatprep.subr.mxu0 0.0
    %566 = vmatpush1.msra.mxu0 0.0
    %567 = vmatprep.subr.mxu0 0.0
    %568 = vmatpush1.msra.mxu0 0.0
    %569 = vmatprep.subr.mxu0 0.0
    %570 = vmatpush1.msra.mxu0 0.0
    %571 = vmatprep.subr.mxu0 0.0
    %572 = vmatpush1.msra.mxu0 0.0
    %573 = vmatprep.subr.mxu0 0.0
    %574 = vmatpush1.msra.mxu0 0.0
    %575 = vmatprep.subr.mxu0 0.0
    %576 = vmatpush1.msra.mxu0 0.0
    %577 = vmatprep.subr.mxu0 0.0
    %578 = vmatpush1.msra.mxu0 0.0
    %579 = vmatprep.subr.mxu0 0.0
    %580 = vmatpush1.msra.mxu0 0.0
    %581 = vmatprep.subr.mxu0 0.0
    %582 = vmatpush1.msra.mxu0 0.0
    %583 = vmatprep.subr.mxu0 0.0
    %584 = vmatpush1.msra.mxu0 0.0
    %585 = vmatprep.subr.mxu0 0.0
    %586 = vmatpush1.msra.mxu0 0.0
    %587 = vmatprep.subr.mxu0 0.0
    %588 = vmatpush1.msra.mxu0 0.0
    %589 = vmatprep.subr.mxu0 0.0
    %590 = vmatpush1.msra.mxu0 0.0
    %591 = vmatprep.subr.mxu0 0.0
    %592 = vmatpush1.msra.mxu0 0.0
    %593 = vmatprep.subr.mxu0 0.0
    %594 = vmatpush1.msra.mxu0 0.0
    %595 = vmatprep.subr.mxu0 0.0
    %596 = vmatpush1.msra.mxu0 0.0
    %597 = vmatprep.subr.mxu0 0.0
    %598 = vmatpush1.msra.mxu0 0.0
    %599 = vmatprep.subr.mxu0 0.0
    %600 = vmatpush1.msra.mxu0 0.0
    %601 = vmatprep.subr.mxu0 0.0
    %602 = vmatpush1.msra.mxu0 0.0
    %603 = vmatprep.subr.mxu0 0.0
    %604 = vmatpush1.msra.mxu0 0.0
    %605 = vmatprep.subr.mxu0 0.0
    %606 = vmatpush1.msra.mxu0 0.0
    %607 = vmatprep.subr.mxu0 0.0
    %608 = vmatpush1.msra.mxu0 0.0
    %609 = vmatprep.subr.mxu0 0.0
    %610 = vmatpush1.msra.mxu0 0.0
    %611 = vmatprep.subr.mxu0 0.0
    %612 = vmatpush1.msra.mxu0 0.0
    %613 = vmatprep.subr.mxu0 0.0
    %614 = vmatpush1.msra.mxu0 0.0
    %615 = vmatprep.subr.mxu0 0.0
    %616 = vmatpush1.msra.mxu0 0.0
    %617 = vmatprep.subr.mxu0 0.0
    %618 = vmatpush1.msra.mxu0 0.0
    %619 = vmatprep.subr.mxu0 0.0
    %620 = vmatpush1.msra.mxu0 0.0
    %621 = vmatprep.subr.mxu0 0.0
    %622 = vmatpush1.msra.mxu0 0.0
    %623 = vmatprep.mubr.f32.mxu0 0.0
    %624 = vmatmul.mubr.f32.gmra.mrb[0].mxu0 %v344
    %v625 = vpop.f32.mrb[0].mxu0
    %v626 = vadd.f32 %v319, %v625
    %v627 = vpop.f32.mrb[0].mxu0
    %v628 = vadd.f32 %v323, %v627
    %629 = vdwg.mxu0
    %630 = vmatprep.subr.mxu0 %v90
    %631 = vmatpush1.msra.mxu0 %v89
    %632 = vmatprep.subr.mxu0 0.0
    %633 = vmatpush1.msra.mxu0 0.0
    %634 = vmatprep.subr.mxu0 0.0
    %635 = vmatpush1.msra.mxu0 0.0
    %636 = vmatprep.subr.mxu0 0.0
    %637 = vmatpush1.msra.mxu0 0.0
    %638 = vmatprep.subr.mxu0 0.0
    %639 = vmatpush1.msra.mxu0 0.0
    %640 = vmatprep.subr.mxu0 0.0
    %641 = vmatpush1.msra.mxu0 0.0
    %642 = vmatprep.subr.mxu0 0.0
    %643 = vmatpush1.msra.mxu0 0.0
    %644 = vmatprep.subr.mxu0 0.0
    %645 = vmatpush1.msra.mxu0 0.0
    %646 = vmatprep.subr.mxu0 0.0
    %647 = vmatpush1.msra.mxu0 0.0
    %648 = vmatprep.subr.mxu0 0.0
    %649 = vmatpush1.msra.mxu0 0.0
    %650 = vmatprep.subr.mxu0 0.0
    %651 = vmatpush1.msra.mxu0 0.0
    %652 = vmatprep.subr.mxu0 0.0
    %653 = vmatpush1.msra.mxu0 0.0
    %654 = vmatprep.subr.mxu0 0.0
    %655 = vmatpush1.msra.mxu0 0.0
    %656 = vmatprep.subr.mxu0 0.0
    %657 = vmatpush1.msra.mxu0 0.0
    %658 = vmatprep.subr.mxu0 0.0
    %659 = vmatpush1.msra.mxu0 0.0
    %660 = vmatprep.subr.mxu0 0.0
    %661 = vmatpush1.msra.mxu0 0.0
    %662 = vmatprep.subr.mxu0 0.0
    %663 = vmatpush1.msra.mxu0 0.0
    %664 = vmatprep.subr.mxu0 0.0
    %665 = vmatpush1.msra.mxu0 0.0
    %666 = vmatprep.subr.mxu0 0.0
    %667 = vmatpush1.msra.mxu0 0.0
    %668 = vmatprep.subr.mxu0 0.0
    %669 = vmatpush1.msra.mxu0 0.0
    %670 = vmatprep.subr.mxu0 0.0
    %671 = vmatpush1.msra.mxu0 0.0
    %672 = vmatprep.subr.mxu0 0.0
    %673 = vmatpush1.msra.mxu0 0.0
    %674 = vmatprep.subr.mxu0 0.0
    %675 = vmatpush1.msra.mxu0 0.0
    %676 = vmatprep.subr.mxu0 0.0
    %677 = vmatpush1.msra.mxu0 0.0
    %678 = vmatprep.subr.mxu0 0.0
    %679 = vmatpush1.msra.mxu0 0.0
    %680 = vmatprep.subr.mxu0 0.0
    %681 = vmatpush1.msra.mxu0 0.0
    %682 = vmatprep.subr.mxu0 0.0
    %683 = vmatpush1.msra.mxu0 0.0
    %684 = vmatprep.subr.mxu0 0.0
    %685 = vmatpush1.msra.mxu0 0.0
    %686 = vmatprep.subr.mxu0 0.0
    %687 = vmatpush1.msra.mxu0 0.0
    %688 = vmatprep.subr.mxu0 0.0
    %689 = vmatpush1.msra.mxu0 0.0
    %690 = vmatprep.subr.mxu0 0.0
    %691 = vmatpush1.msra.mxu0 0.0
    %692 = vmatprep.subr.mxu0 0.0
    %693 = vmatpush1.msra.mxu0 0.0
    %694 = vmatprep.mubr.f32.mxu0 0.0
    %695 = vmatmul.mubr.f32.gmra.mrb[0].mxu0 %v344
    %v696 = vpop.f32.mrb[0].mxu0
    %v697 = vadd.f32 %v327, %v696
    %v698 = vpop.f32.mrb[0].mxu0
    %v699 = vadd.f32 %v331, %v698
    %700 = vdwg.mxu0
    %v702 = vlaneseq
    %v703 = vshrl.u32 %v702, 7
    %v704 = vsub.s32 0, %v703
    %v705 = vrot.slane %v94, %v704
    %707 = vmatprep.subr.mxu0 0.0
    %708 = vmatpush1.msra.mxu0 %v93
    %709 = vmatprep.subr.mxu0 0.0
    %710 = vmatpush1.msra.mxu0 0.0
    %711 = vmatprep.subr.mxu0 0.0
    %712 = vmatpush1.msra.mxu0 0.0
    %713 = vmatprep.subr.mxu0 0.0
    %714 = vmatpush1.msra.mxu0 0.0
    %715 = vmatprep.subr.mxu0 0.0
    %716 = vmatpush1.msra.mxu0 0.0
    %717 = vmatprep.subr.mxu0 0.0
    %718 = vmatpush1.msra.mxu0 0.0
    %719 = vmatprep.subr.mxu0 0.0
    %720 = vmatpush1.msra.mxu0 0.0
    %721 = vmatprep.subr.mxu0 0.0
    %722 = vmatpush1.msra.mxu0 0.0
    %723 = vmatprep.subr.mxu0 0.0
    %724 = vmatpush1.msra.mxu0 0.0
    %725 = vmatprep.subr.mxu0 0.0
    %726 = vmatpush1.msra.mxu0 0.0
    %727 = vmatprep.subr.mxu0 0.0
    %728 = vmatpush1.msra.mxu0 0.0
    %729 = vmatprep.subr.mxu0 0.0
    %730 = vmatpush1.msra.mxu0 0.0
    %731 = vmatprep.subr.mxu0 0.0
    %732 = vmatpush1.msra.mxu0 0.0
    %733 = vmatprep.subr.mxu0 0.0
    %734 = vmatpush1.msra.mxu0 0.0
    %735 = vmatprep.subr.mxu0 0.0
    %736 = vmatpush1.msra.mxu0 0.0
    %737 = vmatprep.subr.mxu0 0.0
    %738 = vmatpush1.msra.mxu0 0.0
    %739 = vmatprep.subr.mxu0 0.0
    %740 = vmatpush1.msra.mxu0 0.0
    %741 = vmatprep.subr.mxu0 0.0
    %742 = vmatpush1.msra.mxu0 0.0
    %743 = vmatprep.subr.mxu0 0.0
    %744 = vmatpush1.msra.mxu0 0.0
    %745 = vmatprep.subr.mxu0 0.0
    %746 = vmatpush1.msra.mxu0 0.0
    %747 = vmatprep.subr.mxu0 0.0
    %748 = vmatpush1.msra.mxu0 0.0
    %749 = vmatprep.subr.mxu0 0.0
    %750 = vmatpush1.msra.mxu0 0.0
    %751 = vmatprep.subr.mxu0 0.0
    %752 = vmatpush1.msra.mxu0 0.0
    %753 = vmatprep.subr.mxu0 0.0
    %754 = vmatpush1.msra.mxu0 0.0
    %755 = vmatprep.subr.mxu0 0.0
    %756 = vmatpush1.msra.mxu0 0.0
    %757 = vmatprep.subr.mxu0 0.0
    %758 = vmatpush1.msra.mxu0 0.0
    %759 = vmatprep.subr.mxu0 0.0
    %760 = vmatpush1.msra.mxu0 0.0
    %761 = vmatprep.subr.mxu0 0.0
    %762 = vmatpush1.msra.mxu0 0.0
    %763 = vmatprep.subr.mxu0 0.0
    %764 = vmatpush1.msra.mxu0 0.0
    %765 = vmatprep.subr.mxu0 0.0
    %766 = vmatpush1.msra.mxu0 0.0
    %767 = vmatprep.subr.mxu0 0.0
    %768 = vmatpush1.msra.mxu0 0.0
    %769 = vmatprep.subr.mxu0 0.0
    %770 = vmatpush1.msra.mxu0 0.0
    %771 = vmatprep.mubr.f32.mxu0 0.0
    %772 = vmatmul.mubr.f32.gmra.mrb[0].mxu0 %v344
    %v773 = vpop.f32.mrb[0].mxu0
    %v774 = vadd.f32 %v705, %v773
    %v775 = vpop.f32.mrb[0].mxu0
    %776 = vdwg.mxu0
    %v777 = vpack.c.bf16 %v774, %v774
    %vm778 = vcmask 203776
    %v780 = vsel %vm778, %v80, 0
    %vm782 = vcmask 1040384
    %v784 = vsel %vm782, %v263, 0
    %v787 = vsel %vm782, %v264, 0
    %v790 = vsel %vm782, %v265, 0
    %v793 = vsel %vm782, %v266, 0
    %v796 = vsel %vm782, %v267, 0
    %v799 = vsel %vm782, %v268, 0
    %v802 = vsel %vm782, %v269, 0
    %v805 = vsel %vm782, %v270, 0
    %v808 = vsel %vm782, %v271, 0
    %v811 = vsel %vm782, %v272, 0
    %v814 = vsel %vm782, %v273, 0
    %v817 = vsel %vm782, %v274, 0
    %v820 = vsel %vm782, %v275, 0
    %v823 = vsel %vm782, %v276, 0
    %v826 = vsel %vm782, %v277, 0
    %v829 = vsel %vm782, %v278, 0
    %v832 = vsel %vm782, %v279, 0
    %v835 = vsel %vm782, %v280, 0
    %v838 = vsel %vm782, %v281, 0
    %v841 = vsel %vm782, %v282, 0
    %v844 = vsel %vm782, %v283, 0
    %v847 = vsel %vm782, %v284, 0
    %v850 = vsel %vm782, %v285, 0
    %v853 = vsel %vm782, %v286, 0
    %855 = vmatprep.subr.mxu0 %v192
    %856 = vmatpush1.msra.mxu0 %v191
    %857 = vmatprep.subr.mxu0 %v216
    %858 = vmatpush1.msra.mxu0 %v215
    %859 = vmatprep.subr.mxu0 %v240
    %860 = vmatpush1.msra.mxu0 %v239
    %861 = vmatprep.subr.mxu0 %v787
    %862 = vmatpush1.msra.mxu0 %v784
    %863 = vmatprep.subr.mxu0 0.0
    %864 = vmatpush1.msra.mxu0 0.0
    %865 = vmatprep.subr.mxu0 0.0
    %866 = vmatpush1.msra.mxu0 0.0
    %867 = vmatprep.subr.mxu0 0.0
    %868 = vmatpush1.msra.mxu0 0.0
    %869 = vmatprep.subr.mxu0 0.0
    %870 = vmatpush1.msra.mxu0 0.0
    %871 = vmatprep.subr.mxu0 0.0
    %872 = vmatpush1.msra.mxu0 0.0
    %873 = vmatprep.subr.mxu0 0.0
    %874 = vmatpush1.msra.mxu0 0.0
    %875 = vmatprep.subr.mxu0 0.0
    %876 = vmatpush1.msra.mxu0 0.0
    %877 = vmatprep.subr.mxu0 0.0
    %878 = vmatpush1.msra.mxu0 0.0
    %879 = vmatprep.subr.mxu0 0.0
    %880 = vmatpush1.msra.mxu0 0.0
    %881 = vmatprep.subr.mxu0 0.0
    %882 = vmatpush1.msra.mxu0 0.0
    %883 = vmatprep.subr.mxu0 0.0
    %884 = vmatpush1.msra.mxu0 0.0
    %885 = vmatprep.subr.mxu0 0.0
    %886 = vmatpush1.msra.mxu0 0.0
    %887 = vmatprep.subr.mxu0 0.0
    %888 = vmatpush1.msra.mxu0 0.0
    %889 = vmatprep.subr.mxu0 0.0
    %890 = vmatpush1.msra.mxu0 0.0
    %891 = vmatprep.subr.mxu0 0.0
    %892 = vmatpush1.msra.mxu0 0.0
    %893 = vmatprep.subr.mxu0 0.0
    %894 = vmatpush1.msra.mxu0 0.0
    %895 = vmatprep.subr.mxu0 0.0
    %896 = vmatpush1.msra.mxu0 0.0
    %897 = vmatprep.subr.mxu0 0.0
    %898 = vmatpush1.msra.mxu0 0.0
    %899 = vmatprep.subr.mxu0 0.0
    %900 = vmatpush1.msra.mxu0 0.0
    %901 = vmatprep.subr.mxu0 0.0
    %902 = vmatpush1.msra.mxu0 0.0
    %903 = vmatprep.subr.mxu0 0.0
    %904 = vmatpush1.msra.mxu0 0.0
    %905 = vmatprep.subr.mxu0 0.0
    %906 = vmatpush1.msra.mxu0 0.0
    %907 = vmatprep.subr.mxu0 0.0
    %908 = vmatpush1.msra.mxu0 0.0
    %909 = vmatprep.subr.mxu0 0.0
    %910 = vmatpush1.msra.mxu0 0.0
    %911 = vmatprep.subr.mxu0 0.0
    %912 = vmatpush1.msra.mxu0 0.0
    %913 = vmatprep.subr.mxu0 0.0
    %914 = vmatpush1.msra.mxu0 0.0
    %915 = vmatprep.subr.mxu0 0.0
    %916 = vmatpush1.msra.mxu0 0.0
    %917 = vmatprep.subr.mxu0 0.0
    %918 = vmatpush1.msra.mxu0 0.0
    %919 = vmatprep.mubr.f32.mxu0 0.0
    %920 = vmatmul.mubr.f32.gmra.mrb[0].mxu0 %v780
    %v921 = vpop.f32.mrb[0].mxu0
    %v922 = vadd.f32 0.0, %v921
    %v923 = vpop.f32.mrb[0].mxu0
    %v924 = vadd.f32 0.0, %v923
    %925 = vdwg.mxu0
    %926 = vmatprep.subr.mxu0 %v194
    %927 = vmatpush1.msra.mxu0 %v193
    %928 = vmatprep.subr.mxu0 %v218
    %929 = vmatpush1.msra.mxu0 %v217
    %930 = vmatprep.subr.mxu0 %v242
    %931 = vmatpush1.msra.mxu0 %v241
    %932 = vmatprep.subr.mxu0 %v793
    %933 = vmatpush1.msra.mxu0 %v790
    %934 = vmatprep.subr.mxu0 0.0
    %935 = vmatpush1.msra.mxu0 0.0
    %936 = vmatprep.subr.mxu0 0.0
    %937 = vmatpush1.msra.mxu0 0.0
    %938 = vmatprep.subr.mxu0 0.0
    %939 = vmatpush1.msra.mxu0 0.0
    %940 = vmatprep.subr.mxu0 0.0
    %941 = vmatpush1.msra.mxu0 0.0
    %942 = vmatprep.subr.mxu0 0.0
    %943 = vmatpush1.msra.mxu0 0.0
    %944 = vmatprep.subr.mxu0 0.0
    %945 = vmatpush1.msra.mxu0 0.0
    %946 = vmatprep.subr.mxu0 0.0
    %947 = vmatpush1.msra.mxu0 0.0
    %948 = vmatprep.subr.mxu0 0.0
    %949 = vmatpush1.msra.mxu0 0.0
    %950 = vmatprep.subr.mxu0 0.0
    %951 = vmatpush1.msra.mxu0 0.0
    %952 = vmatprep.subr.mxu0 0.0
    %953 = vmatpush1.msra.mxu0 0.0
    %954 = vmatprep.subr.mxu0 0.0
    %955 = vmatpush1.msra.mxu0 0.0
    %956 = vmatprep.subr.mxu0 0.0
    %957 = vmatpush1.msra.mxu0 0.0
    %958 = vmatprep.subr.mxu0 0.0
    %959 = vmatpush1.msra.mxu0 0.0
    %960 = vmatprep.subr.mxu0 0.0
    %961 = vmatpush1.msra.mxu0 0.0
    %962 = vmatprep.subr.mxu0 0.0
    %963 = vmatpush1.msra.mxu0 0.0
    %964 = vmatprep.subr.mxu0 0.0
    %965 = vmatpush1.msra.mxu0 0.0
    %966 = vmatprep.subr.mxu0 0.0
    %967 = vmatpush1.msra.mxu0 0.0
    %968 = vmatprep.subr.mxu0 0.0
    %969 = vmatpush1.msra.mxu0 0.0
    %970 = vmatprep.subr.mxu0 0.0
    %971 = vmatpush1.msra.mxu0 0.0
    %972 = vmatprep.subr.mxu0 0.0
    %973 = vmatpush1.msra.mxu0 0.0
    %974 = vmatprep.subr.mxu0 0.0
    %975 = vmatpush1.msra.mxu0 0.0
    %976 = vmatprep.subr.mxu0 0.0
    %977 = vmatpush1.msra.mxu0 0.0
    %978 = vmatprep.subr.mxu0 0.0
    %979 = vmatpush1.msra.mxu0 0.0
    %980 = vmatprep.subr.mxu0 0.0
    %981 = vmatpush1.msra.mxu0 0.0
    %982 = vmatprep.subr.mxu0 0.0
    %983 = vmatpush1.msra.mxu0 0.0
    %984 = vmatprep.subr.mxu0 0.0
    %985 = vmatpush1.msra.mxu0 0.0
    %986 = vmatprep.subr.mxu0 0.0
    %987 = vmatpush1.msra.mxu0 0.0
    %988 = vmatprep.subr.mxu0 0.0
    %989 = vmatpush1.msra.mxu0 0.0
    %990 = vmatprep.mubr.f32.mxu0 0.0
    %991 = vmatmul.mubr.f32.gmra.mrb[0].mxu0 %v780
    %v992 = vpop.f32.mrb[0].mxu0
    %v993 = vadd.f32 0.0, %v992
    %v994 = vpop.f32.mrb[0].mxu0
    %v995 = vadd.f32 0.0, %v994
    %996 = vdwg.mxu0
    %997 = vmatprep.subr.mxu0 %v196
    %998 = vmatpush1.msra.mxu0 %v195
    %999 = vmatprep.subr.mxu0 %v220
    %1000 = vmatpush1.msra.mxu0 %v219
    %1001 = vmatprep.subr.mxu0 %v244
    %1002 = vmatpush1.msra.mxu0 %v243
    %1003 = vmatprep.subr.mxu0 %v799
    %1004 = vmatpush1.msra.mxu0 %v796
    %1005 = vmatprep.subr.mxu0 0.0
    %1006 = vmatpush1.msra.mxu0 0.0
    %1007 = vmatprep.subr.mxu0 0.0
    %1008 = vmatpush1.msra.mxu0 0.0
    %1009 = vmatprep.subr.mxu0 0.0
    %1010 = vmatpush1.msra.mxu0 0.0
    %1011 = vmatprep.subr.mxu0 0.0
    %1012 = vmatpush1.msra.mxu0 0.0
    %1013 = vmatprep.subr.mxu0 0.0
    %1014 = vmatpush1.msra.mxu0 0.0
    %1015 = vmatprep.subr.mxu0 0.0
    %1016 = vmatpush1.msra.mxu0 0.0
    %1017 = vmatprep.subr.mxu0 0.0
    %1018 = vmatpush1.msra.mxu0 0.0
    %1019 = vmatprep.subr.mxu0 0.0
    %1020 = vmatpush1.msra.mxu0 0.0
    %1021 = vmatprep.subr.mxu0 0.0
    %1022 = vmatpush1.msra.mxu0 0.0
    %1023 = vmatprep.subr.mxu0 0.0
    %1024 = vmatpush1.msra.mxu0 0.0
    %1025 = vmatprep.subr.mxu0 0.0
    %1026 = vmatpush1.msra.mxu0 0.0
    %1027 = vmatprep.subr.mxu0 0.0
    %1028 = vmatpush1.msra.mxu0 0.0
    %1029 = vmatprep.subr.mxu0 0.0
    %1030 = vmatpush1.msra.mxu0 0.0
    %1031 = vmatprep.subr.mxu0 0.0
    %1032 = vmatpush1.msra.mxu0 0.0
    %1033 = vmatprep.subr.mxu0 0.0
    %1034 = vmatpush1.msra.mxu0 0.0
    %1035 = vmatprep.subr.mxu0 0.0
    %1036 = vmatpush1.msra.mxu0 0.0
    %1037 = vmatprep.subr.mxu0 0.0
    %1038 = vmatpush1.msra.mxu0 0.0
    %1039 = vmatprep.subr.mxu0 0.0
    %1040 = vmatpush1.msra.mxu0 0.0
    %1041 = vmatprep.subr.mxu0 0.0
    %1042 = vmatpush1.msra.mxu0 0.0
    %1043 = vmatprep.subr.mxu0 0.0
    %1044 = vmatpush1.msra.mxu0 0.0
    %1045 = vmatprep.subr.mxu0 0.0
    %1046 = vmatpush1.msra.mxu0 0.0
    %1047 = vmatprep.subr.mxu0 0.0
    %1048 = vmatpush1.msra.mxu0 0.0
    %1049 = vmatprep.subr.mxu0 0.0
    %1050 = vmatpush1.msra.mxu0 0.0
    %1051 = vmatprep.subr.mxu0 0.0
    %1052 = vmatpush1.msra.mxu0 0.0
    %1053 = vmatprep.subr.mxu0 0.0
    %1054 = vmatpush1.msra.mxu0 0.0
    %1055 = vmatprep.subr.mxu0 0.0
    %1056 = vmatpush1.msra.mxu0 0.0
    %1057 = vmatprep.subr.mxu0 0.0
    %1058 = vmatpush1.msra.mxu0 0.0
    %1059 = vmatprep.subr.mxu0 0.0
    %1060 = vmatpush1.msra.mxu0 0.0
    %1061 = vmatprep.mubr.f32.mxu0 0.0
    %1062 = vmatmul.mubr.f32.gmra.mrb[0].mxu0 %v780
    %v1063 = vpop.f32.mrb[0].mxu0
    %v1064 = vadd.f32 0.0, %v1063
    %v1065 = vpop.f32.mrb[0].mxu0
    %v1066 = vadd.f32 0.0, %v1065
    %1067 = vdwg.mxu0
    %1068 = vmatprep.subr.mxu0 %v198
    %1069 = vmatpush1.msra.mxu0 %v197
    %1070 = vmatprep.subr.mxu0 %v222
    %1071 = vmatpush1.msra.mxu0 %v221
    %1072 = vmatprep.subr.mxu0 %v246
    %1073 = vmatpush1.msra.mxu0 %v245
    %1074 = vmatprep.subr.mxu0 %v805
    %1075 = vmatpush1.msra.mxu0 %v802
    %1076 = vmatprep.subr.mxu0 0.0
    %1077 = vmatpush1.msra.mxu0 0.0
    %1078 = vmatprep.subr.mxu0 0.0
    %1079 = vmatpush1.msra.mxu0 0.0
    %1080 = vmatprep.subr.mxu0 0.0
    %1081 = vmatpush1.msra.mxu0 0.0
    %1082 = vmatprep.subr.mxu0 0.0
    %1083 = vmatpush1.msra.mxu0 0.0
    %1084 = vmatprep.subr.mxu0 0.0
    %1085 = vmatpush1.msra.mxu0 0.0
    %1086 = vmatprep.subr.mxu0 0.0
    %1087 = vmatpush1.msra.mxu0 0.0
    %1088 = vmatprep.subr.mxu0 0.0
    %1089 = vmatpush1.msra.mxu0 0.0
    %1090 = vmatprep.subr.mxu0 0.0
    %1091 = vmatpush1.msra.mxu0 0.0
    %1092 = vmatprep.subr.mxu0 0.0
    %1093 = vmatpush1.msra.mxu0 0.0
    %1094 = vmatprep.subr.mxu0 0.0
    %1095 = vmatpush1.msra.mxu0 0.0
    %1096 = vmatprep.subr.mxu0 0.0
    %1097 = vmatpush1.msra.mxu0 0.0
    %1098 = vmatprep.subr.mxu0 0.0
    %1099 = vmatpush1.msra.mxu0 0.0
    %1100 = vmatprep.subr.mxu0 0.0
    %1101 = vmatpush1.msra.mxu0 0.0
    %1102 = vmatprep.subr.mxu0 0.0
    %1103 = vmatpush1.msra.mxu0 0.0
    %1104 = vmatprep.subr.mxu0 0.0
    %1105 = vmatpush1.msra.mxu0 0.0
    %1106 = vmatprep.subr.mxu0 0.0
    %1107 = vmatpush1.msra.mxu0 0.0
    %1108 = vmatprep.subr.mxu0 0.0
    %1109 = vmatpush1.msra.mxu0 0.0
    %1110 = vmatprep.subr.mxu0 0.0
    %1111 = vmatpush1.msra.mxu0 0.0
    %1112 = vmatprep.subr.mxu0 0.0
    %1113 = vmatpush1.msra.mxu0 0.0
    %1114 = vmatprep.subr.mxu0 0.0
    %1115 = vmatpush1.msra.mxu0 0.0
    %1116 = vmatprep.subr.mxu0 0.0
    %1117 = vmatpush1.msra.mxu0 0.0
    %1118 = vmatprep.subr.mxu0 0.0
    %1119 = vmatpush1.msra.mxu0 0.0
    %1120 = vmatprep.subr.mxu0 0.0
    %1121 = vmatpush1.msra.mxu0 0.0
    %1122 = vmatprep.subr.mxu0 0.0
    %1123 = vmatpush1.msra.mxu0 0.0
    %1124 = vmatprep.subr.mxu0 0.0
    %1125 = vmatpush1.msra.mxu0 0.0
    %1126 = vmatprep.subr.mxu0 0.0
    %1127 = vmatpush1.msra.mxu0 0.0
    %1128 = vmatprep.subr.mxu0 0.0
    %1129 = vmatpush1.msra.mxu0 0.0
    %1130 = vmatprep.subr.mxu0 0.0
    %1131 = vmatpush1.msra.mxu0 0.0
    %1132 = vmatprep.mubr.f32.mxu0 0.0
    %1133 = vmatmul.mubr.f32.gmra.mrb[0].mxu0 %v780
    %v1134 = vpop.f32.mrb[0].mxu0
    %v1135 = vadd.f32 0.0, %v1134
    %v1136 = vpop.f32.mrb[0].mxu0
    %v1137 = vadd.f32 0.0, %v1136
    %1138 = vdwg.mxu0
    %1139 = vmatprep.subr.mxu0 %v200
    %1140 = vmatpush1.msra.mxu0 %v199
    %1141 = vmatprep.subr.mxu0 %v224
    %1142 = vmatpush1.msra.mxu0 %v223
    %1143 = vmatprep.subr.mxu0 %v248
    %1144 = vmatpush1.msra.mxu0 %v247
    %1145 = vmatprep.subr.mxu0 %v811
    %1146 = vmatpush1.msra.mxu0 %v808
    %1147 = vmatprep.subr.mxu0 0.0
    %1148 = vmatpush1.msra.mxu0 0.0
    %1149 = vmatprep.subr.mxu0 0.0
    %1150 = vmatpush1.msra.mxu0 0.0
    %1151 = vmatprep.subr.mxu0 0.0
    %1152 = vmatpush1.msra.mxu0 0.0
    %1153 = vmatprep.subr.mxu0 0.0
    %1154 = vmatpush1.msra.mxu0 0.0
    %1155 = vmatprep.subr.mxu0 0.0
    %1156 = vmatpush1.msra.mxu0 0.0
    %1157 = vmatprep.subr.mxu0 0.0
    %1158 = vmatpush1.msra.mxu0 0.0
    %1159 = vmatprep.subr.mxu0 0.0
    %1160 = vmatpush1.msra.mxu0 0.0
    %1161 = vmatprep.subr.mxu0 0.0
    %1162 = vmatpush1.msra.mxu0 0.0
    %1163 = vmatprep.subr.mxu0 0.0
    %1164 = vmatpush1.msra.mxu0 0.0
    %1165 = vmatprep.subr.mxu0 0.0
    %1166 = vmatpush1.msra.mxu0 0.0
    %1167 = vmatprep.subr.mxu0 0.0
    %1168 = vmatpush1.msra.mxu0 0.0
    %1169 = vmatprep.subr.mxu0 0.0
    %1170 = vmatpush1.msra.mxu0 0.0
    %1171 = vmatprep.subr.mxu0 0.0
    %1172 = vmatpush1.msra.mxu0 0.0
    %1173 = vmatprep.subr.mxu0 0.0
    %1174 = vmatpush1.msra.mxu0 0.0
    %1175 = vmatprep.subr.mxu0 0.0
    %1176 = vmatpush1.msra.mxu0 0.0
    %1177 = vmatprep.subr.mxu0 0.0
    %1178 = vmatpush1.msra.mxu0 0.0
    %1179 = vmatprep.subr.mxu0 0.0
    %1180 = vmatpush1.msra.mxu0 0.0
    %1181 = vmatprep.subr.mxu0 0.0
    %1182 = vmatpush1.msra.mxu0 0.0
    %1183 = vmatprep.subr.mxu0 0.0
    %1184 = vmatpush1.msra.mxu0 0.0
    %1185 = vmatprep.subr.mxu0 0.0
    %1186 = vmatpush1.msra.mxu0 0.0
    %1187 = vmatprep.subr.mxu0 0.0
    %1188 = vmatpush1.msra.mxu0 0.0
    %1189 = vmatprep.subr.mxu0 0.0
    %1190 = vmatpush1.msra.mxu0 0.0
    %1191 = vmatprep.subr.mxu0 0.0
    %1192 = vmatpush1.msra.mxu0 0.0
    %1193 = vmatprep.subr.mxu0 0.0
    %1194 = vmatpush1.msra.mxu0 0.0
    %1195 = vmatprep.subr.mxu0 0.0
    %1196 = vmatpush1.msra.mxu0 0.0
    %1197 = vmatprep.subr.mxu0 0.0
    %1198 = vmatpush1.msra.mxu0 0.0
    %1199 = vmatprep.subr.mxu0 0.0
    %1200 = vmatpush1.msra.mxu0 0.0
    %1201 = vmatprep.subr.mxu0 0.0
    %1202 = vmatpush1.msra.mxu0 0.0
    %1203 = vmatprep.mubr.f32.mxu0 0.0
    %1204 = vmatmul.mubr.f32.gmra.mrb[0].mxu0 %v780
    %v1205 = vpop.f32.mrb[0].mxu0
    %v1206 = vadd.f32 0.0, %v1205
    %v1207 = vpop.f32.mrb[0].mxu0
    %v1208 = vadd.f32 0.0, %v1207
    %1209 = vdwg.mxu0
    %1210 = vmatprep.subr.mxu0 %v202
    %1211 = vmatpush1.msra.mxu0 %v201
    %1212 = vmatprep.subr.mxu0 %v226
    %1213 = vmatpush1.msra.mxu0 %v225
    %1214 = vmatprep.subr.mxu0 %v250
    %1215 = vmatpush1.msra.mxu0 %v249
    %1216 = vmatprep.subr.mxu0 %v817
    %1217 = vmatpush1.msra.mxu0 %v814
    %1218 = vmatprep.subr.mxu0 0.0
    %1219 = vmatpush1.msra.mxu0 0.0
    %1220 = vmatprep.subr.mxu0 0.0
    %1221 = vmatpush1.msra.mxu0 0.0
    %1222 = vmatprep.subr.mxu0 0.0
    %1223 = vmatpush1.msra.mxu0 0.0
    %1224 = vmatprep.subr.mxu0 0.0
    %1225 = vmatpush1.msra.mxu0 0.0
    %1226 = vmatprep.subr.mxu0 0.0
    %1227 = vmatpush1.msra.mxu0 0.0
    %1228 = vmatprep.subr.mxu0 0.0
    %1229 = vmatpush1.msra.mxu0 0.0
    %1230 = vmatprep.subr.mxu0 0.0
    %1231 = vmatpush1.msra.mxu0 0.0
    %1232 = vmatprep.subr.mxu0 0.0
    %1233 = vmatpush1.msra.mxu0 0.0
    %1234 = vmatprep.subr.mxu0 0.0
    %1235 = vmatpush1.msra.mxu0 0.0
    %1236 = vmatprep.subr.mxu0 0.0
    %1237 = vmatpush1.msra.mxu0 0.0
    %1238 = vmatprep.subr.mxu0 0.0
    %1239 = vmatpush1.msra.mxu0 0.0
    %1240 = vmatprep.subr.mxu0 0.0
    %1241 = vmatpush1.msra.mxu0 0.0
    %1242 = vmatprep.subr.mxu0 0.0
    %1243 = vmatpush1.msra.mxu0 0.0
    %1244 = vmatprep.subr.mxu0 0.0
    %1245 = vmatpush1.msra.mxu0 0.0
    %1246 = vmatprep.subr.mxu0 0.0
    %1247 = vmatpush1.msra.mxu0 0.0
    %1248 = vmatprep.subr.mxu0 0.0
    %1249 = vmatpush1.msra.mxu0 0.0
    %1250 = vmatprep.subr.mxu0 0.0
    %1251 = vmatpush1.msra.mxu0 0.0
    %1252 = vmatprep.subr.mxu0 0.0
    %1253 = vmatpush1.msra.mxu0 0.0
    %1254 = vmatprep.subr.mxu0 0.0
    %1255 = vmatpush1.msra.mxu0 0.0
    %1256 = vmatprep.subr.mxu0 0.0
    %1257 = vmatpush1.msra.mxu0 0.0
    %1258 = vmatprep.subr.mxu0 0.0
    %1259 = vmatpush1.msra.mxu0 0.0
    %1260 = vmatprep.subr.mxu0 0.0
    %1261 = vmatpush1.msra.mxu0 0.0
    %1262 = vmatprep.subr.mxu0 0.0
    %1263 = vmatpush1.msra.mxu0 0.0
    %1264 = vmatprep.subr.mxu0 0.0
    %1265 = vmatpush1.msra.mxu0 0.0
    %1266 = vmatprep.subr.mxu0 0.0
    %1267 = vmatpush1.msra.mxu0 0.0
    %1268 = vmatprep.subr.mxu0 0.0
    %1269 = vmatpush1.msra.mxu0 0.0
    %1270 = vmatprep.subr.mxu0 0.0
    %1271 = vmatpush1.msra.mxu0 0.0
    %1272 = vmatprep.subr.mxu0 0.0
    %1273 = vmatpush1.msra.mxu0 0.0
    %1274 = vmatprep.mubr.f32.mxu0 0.0
    %1275 = vmatmul.mubr.f32.gmra.mrb[0].mxu0 %v780
    %v1276 = vpop.f32.mrb[0].mxu0
    %v1277 = vadd.f32 0.0, %v1276
    %v1278 = vpop.f32.mrb[0].mxu0
    %v1279 = vadd.f32 0.0, %v1278
    %1280 = vdwg.mxu0
    %1281 = vmatprep.subr.mxu0 %v204
    %1282 = vmatpush1.msra.mxu0 %v203
    %1283 = vmatprep.subr.mxu0 %v228
    %1284 = vmatpush1.msra.mxu0 %v227
    %1285 = vmatprep.subr.mxu0 %v252
    %1286 = vmatpush1.msra.mxu0 %v251
    %1287 = vmatprep.subr.mxu0 %v823
    %1288 = vmatpush1.msra.mxu0 %v820
    %1289 = vmatprep.subr.mxu0 0.0
    %1290 = vmatpush1.msra.mxu0 0.0
    %1291 = vmatprep.subr.mxu0 0.0
    %1292 = vmatpush1.msra.mxu0 0.0
    %1293 = vmatprep.subr.mxu0 0.0
    %1294 = vmatpush1.msra.mxu0 0.0
    %1295 = vmatprep.subr.mxu0 0.0
    %1296 = vmatpush1.msra.mxu0 0.0
    %1297 = vmatprep.subr.mxu0 0.0
    %1298 = vmatpush1.msra.mxu0 0.0
    %1299 = vmatprep.subr.mxu0 0.0
    %1300 = vmatpush1.msra.mxu0 0.0
    %1301 = vmatprep.subr.mxu0 0.0
    %1302 = vmatpush1.msra.mxu0 0.0
    %1303 = vmatprep.subr.mxu0 0.0
    %1304 = vmatpush1.msra.mxu0 0.0
    %1305 = vmatprep.subr.mxu0 0.0
    %1306 = vmatpush1.msra.mxu0 0.0
    %1307 = vmatprep.subr.mxu0 0.0
    %1308 = vmatpush1.msra.mxu0 0.0
    %1309 = vmatprep.subr.mxu0 0.0
    %1310 = vmatpush1.msra.mxu0 0.0
    %1311 = vmatprep.subr.mxu0 0.0
    %1312 = vmatpush1.msra.mxu0 0.0
    %1313 = vmatprep.subr.mxu0 0.0
    %1314 = vmatpush1.msra.mxu0 0.0
    %1315 = vmatprep.subr.mxu0 0.0
    %1316 = vmatpush1.msra.mxu0 0.0
    %1317 = vmatprep.subr.mxu0 0.0
    %1318 = vmatpush1.msra.mxu0 0.0
    %1319 = vmatprep.subr.mxu0 0.0
    %1320 = vmatpush1.msra.mxu0 0.0
    %1321 = vmatprep.subr.mxu0 0.0
    %1322 = vmatpush1.msra.mxu0 0.0
    %1323 = vmatprep.subr.mxu0 0.0
    %1324 = vmatpush1.msra.mxu0 0.0
    %1325 = vmatprep.subr.mxu0 0.0
    %1326 = vmatpush1.msra.mxu0 0.0
    %1327 = vmatprep.subr.mxu0 0.0
    %1328 = vmatpush1.msra.mxu0 0.0
    %1329 = vmatprep.subr.mxu0 0.0
    %1330 = vmatpush1.msra.mxu0 0.0
    %1331 = vmatprep.subr.mxu0 0.0
    %1332 = vmatpush1.msra.mxu0 0.0
    %1333 = vmatprep.subr.mxu0 0.0
    %1334 = vmatpush1.msra.mxu0 0.0
    %1335 = vmatprep.subr.mxu0 0.0
    %1336 = vmatpush1.msra.mxu0 0.0
    %1337 = vmatprep.subr.mxu0 0.0
    %1338 = vmatpush1.msra.mxu0 0.0
    %1339 = vmatprep.subr.mxu0 0.0
    %1340 = vmatpush1.msra.mxu0 0.0
    %1341 = vmatprep.subr.mxu0 0.0
    %1342 = vmatpush1.msra.mxu0 0.0
    %1343 = vmatprep.subr.mxu0 0.0
    %1344 = vmatpush1.msra.mxu0 0.0
    %1345 = vmatprep.mubr.f32.mxu0 0.0
    %1346 = vmatmul.mubr.f32.gmra.mrb[0].mxu0 %v780
    %v1347 = vpop.f32.mrb[0].mxu0
    %v1348 = vadd.f32 0.0, %v1347
    %v1349 = vpop.f32.mrb[0].mxu0
    %v1350 = vadd.f32 0.0, %v1349
    %1351 = vdwg.mxu0
    %1352 = vmatprep.subr.mxu0 %v206
    %1353 = vmatpush1.msra.mxu0 %v205
    %1354 = vmatprep.subr.mxu0 %v230
    %1355 = vmatpush1.msra.mxu0 %v229
    %1356 = vmatprep.subr.mxu0 %v254
    %1357 = vmatpush1.msra.mxu0 %v253
    %1358 = vmatprep.subr.mxu0 %v829
    %1359 = vmatpush1.msra.mxu0 %v826
    %1360 = vmatprep.subr.mxu0 0.0
    %1361 = vmatpush1.msra.mxu0 0.0
    %1362 = vmatprep.subr.mxu0 0.0
    %1363 = vmatpush1.msra.mxu0 0.0
    %1364 = vmatprep.subr.mxu0 0.0
    %1365 = vmatpush1.msra.mxu0 0.0
    %1366 = vmatprep.subr.mxu0 0.0
    %1367 = vmatpush1.msra.mxu0 0.0
    %1368 = vmatprep.subr.mxu0 0.0
    %1369 = vmatpush1.msra.mxu0 0.0
    %1370 = vmatprep.subr.mxu0 0.0
    %1371 = vmatpush1.msra.mxu0 0.0
    %1372 = vmatprep.subr.mxu0 0.0
    %1373 = vmatpush1.msra.mxu0 0.0
    %1374 = vmatprep.subr.mxu0 0.0
    %1375 = vmatpush1.msra.mxu0 0.0
    %1376 = vmatprep.subr.mxu0 0.0
    %1377 = vmatpush1.msra.mxu0 0.0
    %1378 = vmatprep.subr.mxu0 0.0
    %1379 = vmatpush1.msra.mxu0 0.0
    %1380 = vmatprep.subr.mxu0 0.0
    %1381 = vmatpush1.msra.mxu0 0.0
    %1382 = vmatprep.subr.mxu0 0.0
    %1383 = vmatpush1.msra.mxu0 0.0
    %1384 = vmatprep.subr.mxu0 0.0
    %1385 = vmatpush1.msra.mxu0 0.0
    %1386 = vmatprep.subr.mxu0 0.0
    %1387 = vmatpush1.msra.mxu0 0.0
    %1388 = vmatprep.subr.mxu0 0.0
    %1389 = vmatpush1.msra.mxu0 0.0
    %1390 = vmatprep.subr.mxu0 0.0
    %1391 = vmatpush1.msra.mxu0 0.0
    %1392 = vmatprep.subr.mxu0 0.0
    %1393 = vmatpush1.msra.mxu0 0.0
    %1394 = vmatprep.subr.mxu0 0.0
    %1395 = vmatpush1.msra.mxu0 0.0
    %1396 = vmatprep.subr.mxu0 0.0
    %1397 = vmatpush1.msra.mxu0 0.0
    %1398 = vmatprep.subr.mxu0 0.0
    %1399 = vmatpush1.msra.mxu0 0.0
    %1400 = vmatprep.subr.mxu0 0.0
    %1401 = vmatpush1.msra.mxu0 0.0
    %1402 = vmatprep.subr.mxu0 0.0
    %1403 = vmatpush1.msra.mxu0 0.0
    %1404 = vmatprep.subr.mxu0 0.0
    %1405 = vmatpush1.msra.mxu0 0.0
    %1406 = vmatprep.subr.mxu0 0.0
    %1407 = vmatpush1.msra.mxu0 0.0
    %1408 = vmatprep.subr.mxu0 0.0
    %1409 = vmatpush1.msra.mxu0 0.0
    %1410 = vmatprep.subr.mxu0 0.0
    %1411 = vmatpush1.msra.mxu0 0.0
    %1412 = vmatprep.subr.mxu0 0.0
    %1413 = vmatpush1.msra.mxu0 0.0
    %1414 = vmatprep.subr.mxu0 0.0
    %1415 = vmatpush1.msra.mxu0 0.0
    %1416 = vmatprep.mubr.f32.mxu0 0.0
    %1417 = vmatmul.mubr.f32.gmra.mrb[0].mxu0 %v780
    %v1418 = vpop.f32.mrb[0].mxu0
    %v1419 = vadd.f32 0.0, %v1418
    %v1420 = vpop.f32.mrb[0].mxu0
    %v1421 = vadd.f32 0.0, %v1420
    %1422 = vdwg.mxu0
    %1423 = vmatprep.subr.mxu0 %v208
    %1424 = vmatpush1.msra.mxu0 %v207
    %1425 = vmatprep.subr.mxu0 %v232
    %1426 = vmatpush1.msra.mxu0 %v231
    %1427 = vmatprep.subr.mxu0 %v256
    %1428 = vmatpush1.msra.mxu0 %v255
    %1429 = vmatprep.subr.mxu0 %v835
    %1430 = vmatpush1.msra.mxu0 %v832
    %1431 = vmatprep.subr.mxu0 0.0
    %1432 = vmatpush1.msra.mxu0 0.0
    %1433 = vmatprep.subr.mxu0 0.0
    %1434 = vmatpush1.msra.mxu0 0.0
    %1435 = vmatprep.subr.mxu0 0.0
    %1436 = vmatpush1.msra.mxu0 0.0
    %1437 = vmatprep.subr.mxu0 0.0
    %1438 = vmatpush1.msra.mxu0 0.0
    %1439 = vmatprep.subr.mxu0 0.0
    %1440 = vmatpush1.msra.mxu0 0.0
    %1441 = vmatprep.subr.mxu0 0.0
    %1442 = vmatpush1.msra.mxu0 0.0
    %1443 = vmatprep.subr.mxu0 0.0
    %1444 = vmatpush1.msra.mxu0 0.0
    %1445 = vmatprep.subr.mxu0 0.0
    %1446 = vmatpush1.msra.mxu0 0.0
    %1447 = vmatprep.subr.mxu0 0.0
    %1448 = vmatpush1.msra.mxu0 0.0
    %1449 = vmatprep.subr.mxu0 0.0
    %1450 = vmatpush1.msra.mxu0 0.0
    %1451 = vmatprep.subr.mxu0 0.0
    %1452 = vmatpush1.msra.mxu0 0.0
    %1453 = vmatprep.subr.mxu0 0.0
    %1454 = vmatpush1.msra.mxu0 0.0
    %1455 = vmatprep.subr.mxu0 0.0
    %1456 = vmatpush1.msra.mxu0 0.0
    %1457 = vmatprep.subr.mxu0 0.0
    %1458 = vmatpush1.msra.mxu0 0.0
    %1459 = vmatprep.subr.mxu0 0.0
    %1460 = vmatpush1.msra.mxu0 0.0
    %1461 = vmatprep.subr.mxu0 0.0
    %1462 = vmatpush1.msra.mxu0 0.0
    %1463 = vmatprep.subr.mxu0 0.0
    %1464 = vmatpush1.msra.mxu0 0.0
    %1465 = vmatprep.subr.mxu0 0.0
    %1466 = vmatpush1.msra.mxu0 0.0
    %1467 = vmatprep.subr.mxu0 0.0
    %1468 = vmatpush1.msra.mxu0 0.0
    %1469 = vmatprep.subr.mxu0 0.0
    %1470 = vmatpush1.msra.mxu0 0.0
    %1471 = vmatprep.subr.mxu0 0.0
    %1472 = vmatpush1.msra.mxu0 0.0
    %1473 = vmatprep.subr.mxu0 0.0
    %1474 = vmatpush1.msra.mxu0 0.0
    %1475 = vmatprep.subr.mxu0 0.0
    %1476 = vmatpush1.msra.mxu0 0.0
    %1477 = vmatprep.subr.mxu0 0.0
    %1478 = vmatpush1.msra.mxu0 0.0
    %1479 = vmatprep.subr.mxu0 0.0
    %1480 = vmatpush1.msra.mxu0 0.0
    %1481 = vmatprep.subr.mxu0 0.0
    %1482 = vmatpush1.msra.mxu0 0.0
    %1483 = vmatprep.subr.mxu0 0.0
    %1484 = vmatpush1.msra.mxu0 0.0
    %1485 = vmatprep.subr.mxu0 0.0
    %1486 = vmatpush1.msra.mxu0 0.0
    %1487 = vmatprep.mubr.f32.mxu0 0.0
    %1488 = vmatmul.mubr.f32.gmra.mrb[0].mxu0 %v780
    %v1489 = vpop.f32.mrb[0].mxu0
    %v1490 = vadd.f32 0.0, %v1489
    %v1491 = vpop.f32.mrb[0].mxu0
    %v1492 = vadd.f32 0.0, %v1491
    %1493 = vdwg.mxu0
    %1494 = vmatprep.subr.mxu0 %v210
    %1495 = vmatpush1.msra.mxu0 %v209
    %1496 = vmatprep.subr.mxu0 %v234
    %1497 = vmatpush1.msra.mxu0 %v233
    %1498 = vmatprep.subr.mxu0 %v258
    %1499 = vmatpush1.msra.mxu0 %v257
    %1500 = vmatprep.subr.mxu0 %v841
    %1501 = vmatpush1.msra.mxu0 %v838
    %1502 = vmatprep.subr.mxu0 0.0
    %1503 = vmatpush1.msra.mxu0 0.0
    %1504 = vmatprep.subr.mxu0 0.0
    %1505 = vmatpush1.msra.mxu0 0.0
    %1506 = vmatprep.subr.mxu0 0.0
    %1507 = vmatpush1.msra.mxu0 0.0
    %1508 = vmatprep.subr.mxu0 0.0
    %1509 = vmatpush1.msra.mxu0 0.0
    %1510 = vmatprep.subr.mxu0 0.0
    %1511 = vmatpush1.msra.mxu0 0.0
    %1512 = vmatprep.subr.mxu0 0.0
    %1513 = vmatpush1.msra.mxu0 0.0
    %1514 = vmatprep.subr.mxu0 0.0
    %1515 = vmatpush1.msra.mxu0 0.0
    %1516 = vmatprep.subr.mxu0 0.0
    %1517 = vmatpush1.msra.mxu0 0.0
    %1518 = vmatprep.subr.mxu0 0.0
    %1519 = vmatpush1.msra.mxu0 0.0
    %1520 = vmatprep.subr.mxu0 0.0
    %1521 = vmatpush1.msra.mxu0 0.0
    %1522 = vmatprep.subr.mxu0 0.0
    %1523 = vmatpush1.msra.mxu0 0.0
    %1524 = vmatprep.subr.mxu0 0.0
    %1525 = vmatpush1.msra.mxu0 0.0
    %1526 = vmatprep.subr.mxu0 0.0
    %1527 = vmatpush1.msra.mxu0 0.0
    %1528 = vmatprep.subr.mxu0 0.0
    %1529 = vmatpush1.msra.mxu0 0.0
    %1530 = vmatprep.subr.mxu0 0.0
    %1531 = vmatpush1.msra.mxu0 0.0
    %1532 = vmatprep.subr.mxu0 0.0
    %1533 = vmatpush1.msra.mxu0 0.0
    %1534 = vmatprep.subr.mxu0 0.0
    %1535 = vmatpush1.msra.mxu0 0.0
    %1536 = vmatprep.subr.mxu0 0.0
    %1537 = vmatpush1.msra.mxu0 0.0
    %1538 = vmatprep.subr.mxu0 0.0
    %1539 = vmatpush1.msra.mxu0 0.0
    %1540 = vmatprep.subr.mxu0 0.0
    %1541 = vmatpush1.msra.mxu0 0.0
    %1542 = vmatprep.subr.mxu0 0.0
    %1543 = vmatpush1.msra.mxu0 0.0
    %1544 = vmatprep.subr.mxu0 0.0
    %1545 = vmatpush1.msra.mxu0 0.0
    %1546 = vmatprep.subr.mxu0 0.0
    %1547 = vmatpush1.msra.mxu0 0.0
    %1548 = vmatprep.subr.mxu0 0.0
    %1549 = vmatpush1.msra.mxu0 0.0
    %1550 = vmatprep.subr.mxu0 0.0
    %1551 = vmatpush1.msra.mxu0 0.0
    %1552 = vmatprep.subr.mxu0 0.0
    %1553 = vmatpush1.msra.mxu0 0.0
    %1554 = vmatprep.subr.mxu0 0.0
    %1555 = vmatpush1.msra.mxu0 0.0
    %1556 = vmatprep.subr.mxu0 0.0
    %1557 = vmatpush1.msra.mxu0 0.0
    %1558 = vmatprep.mubr.f32.mxu0 0.0
    %1559 = vmatmul.mubr.f32.gmra.mrb[0].mxu0 %v780
    %v1560 = vpop.f32.mrb[0].mxu0
    %v1561 = vadd.f32 0.0, %v1560
    %v1562 = vpop.f32.mrb[0].mxu0
    %v1563 = vadd.f32 0.0, %v1562
    %1564 = vdwg.mxu0
    %1565 = vmatprep.subr.mxu0 %v212
    %1566 = vmatpush1.msra.mxu0 %v211
    %1567 = vmatprep.subr.mxu0 %v236
    %1568 = vmatpush1.msra.mxu0 %v235
    %1569 = vmatprep.subr.mxu0 %v260
    %1570 = vmatpush1.msra.mxu0 %v259
    %1571 = vmatprep.subr.mxu0 %v847
    %1572 = vmatpush1.msra.mxu0 %v844
    %1573 = vmatprep.subr.mxu0 0.0
    %1574 = vmatpush1.msra.mxu0 0.0
    %1575 = vmatprep.subr.mxu0 0.0
    %1576 = vmatpush1.msra.mxu0 0.0
    %1577 = vmatprep.subr.mxu0 0.0
    %1578 = vmatpush1.msra.mxu0 0.0
    %1579 = vmatprep.subr.mxu0 0.0
    %1580 = vmatpush1.msra.mxu0 0.0
    %1581 = vmatprep.subr.mxu0 0.0
    %1582 = vmatpush1.msra.mxu0 0.0
    %1583 = vmatprep.subr.mxu0 0.0
    %1584 = vmatpush1.msra.mxu0 0.0
    %1585 = vmatprep.subr.mxu0 0.0
    %1586 = vmatpush1.msra.mxu0 0.0
    %1587 = vmatprep.subr.mxu0 0.0
    %1588 = vmatpush1.msra.mxu0 0.0
    %1589 = vmatprep.subr.mxu0 0.0
    %1590 = vmatpush1.msra.mxu0 0.0
    %1591 = vmatprep.subr.mxu0 0.0
    %1592 = vmatpush1.msra.mxu0 0.0
    %1593 = vmatprep.subr.mxu0 0.0
    %1594 = vmatpush1.msra.mxu0 0.0
    %1595 = vmatprep.subr.mxu0 0.0
    %1596 = vmatpush1.msra.mxu0 0.0
    %1597 = vmatprep.subr.mxu0 0.0
    %1598 = vmatpush1.msra.mxu0 0.0
    %1599 = vmatprep.subr.mxu0 0.0
    %1600 = vmatpush1.msra.mxu0 0.0
    %1601 = vmatprep.subr.mxu0 0.0
    %1602 = vmatpush1.msra.mxu0 0.0
    %1603 = vmatprep.subr.mxu0 0.0
    %1604 = vmatpush1.msra.mxu0 0.0
    %1605 = vmatprep.subr.mxu0 0.0
    %1606 = vmatpush1.msra.mxu0 0.0
    %1607 = vmatprep.subr.mxu0 0.0
    %1608 = vmatpush1.msra.mxu0 0.0
    %1609 = vmatprep.subr.mxu0 0.0
    %1610 = vmatpush1.msra.mxu0 0.0
    %1611 = vmatprep.subr.mxu0 0.0
    %1612 = vmatpush1.msra.mxu0 0.0
    %1613 = vmatprep.subr.mxu0 0.0
    %1614 = vmatpush1.msra.mxu0 0.0
    %1615 = vmatprep.subr.mxu0 0.0
    %1616 = vmatpush1.msra.mxu0 0.0
    %1617 = vmatprep.subr.mxu0 0.0
    %1618 = vmatpush1.msra.mxu0 0.0
    %1619 = vmatprep.subr.mxu0 0.0
    %1620 = vmatpush1.msra.mxu0 0.0
    %1621 = vmatprep.subr.mxu0 0.0
    %1622 = vmatpush1.msra.mxu0 0.0
    %1623 = vmatprep.subr.mxu0 0.0
    %1624 = vmatpush1.msra.mxu0 0.0
    %1625 = vmatprep.subr.mxu0 0.0
    %1626 = vmatpush1.msra.mxu0 0.0
    %1627 = vmatprep.subr.mxu0 0.0
    %1628 = vmatpush1.msra.mxu0 0.0
    %1629 = vmatprep.mubr.f32.mxu0 0.0
    %1630 = vmatmul.mubr.f32.gmra.mrb[0].mxu0 %v780
    %v1631 = vpop.f32.mrb[0].mxu0
    %v1632 = vadd.f32 0.0, %v1631
    %v1633 = vpop.f32.mrb[0].mxu0
    %v1634 = vadd.f32 0.0, %v1633
    %1635 = vdwg.mxu0
    %1636 = vmatprep.subr.mxu0 %v214
    %1637 = vmatpush1.msra.mxu0 %v213
    %1638 = vmatprep.subr.mxu0 %v238
    %1639 = vmatpush1.msra.mxu0 %v237
    %1640 = vmatprep.subr.mxu0 %v262
    %1641 = vmatpush1.msra.mxu0 %v261
    %1642 = vmatprep.subr.mxu0 %v853
    %1643 = vmatpush1.msra.mxu0 %v850
    %1644 = vmatprep.subr.mxu0 0.0
    %1645 = vmatpush1.msra.mxu0 0.0
    %1646 = vmatprep.subr.mxu0 0.0
    %1647 = vmatpush1.msra.mxu0 0.0
    %1648 = vmatprep.subr.mxu0 0.0
    %1649 = vmatpush1.msra.mxu0 0.0
    %1650 = vmatprep.subr.mxu0 0.0
    %1651 = vmatpush1.msra.mxu0 0.0
    %1652 = vmatprep.subr.mxu0 0.0
    %1653 = vmatpush1.msra.mxu0 0.0
    %1654 = vmatprep.subr.mxu0 0.0
    %1655 = vmatpush1.msra.mxu0 0.0
    %1656 = vmatprep.subr.mxu0 0.0
    %1657 = vmatpush1.msra.mxu0 0.0
    %1658 = vmatprep.subr.mxu0 0.0
    %1659 = vmatpush1.msra.mxu0 0.0
    %1660 = vmatprep.subr.mxu0 0.0
    %1661 = vmatpush1.msra.mxu0 0.0
    %1662 = vmatprep.subr.mxu0 0.0
    %1663 = vmatpush1.msra.mxu0 0.0
    %1664 = vmatprep.subr.mxu0 0.0
    %1665 = vmatpush1.msra.mxu0 0.0
    %1666 = vmatprep.subr.mxu0 0.0
    %1667 = vmatpush1.msra.mxu0 0.0
    %1668 = vmatprep.subr.mxu0 0.0
    %1669 = vmatpush1.msra.mxu0 0.0
    %1670 = vmatprep.subr.mxu0 0.0
    %1671 = vmatpush1.msra.mxu0 0.0
    %1672 = vmatprep.subr.mxu0 0.0
    %1673 = vmatpush1.msra.mxu0 0.0
    %1674 = vmatprep.subr.mxu0 0.0
    %1675 = vmatpush1.msra.mxu0 0.0
    %1676 = vmatprep.subr.mxu0 0.0
    %1677 = vmatpush1.msra.mxu0 0.0
    %1678 = vmatprep.subr.mxu0 0.0
    %1679 = vmatpush1.msra.mxu0 0.0
    %1680 = vmatprep.subr.mxu0 0.0
    %1681 = vmatpush1.msra.mxu0 0.0
    %1682 = vmatprep.subr.mxu0 0.0
    %1683 = vmatpush1.msra.mxu0 0.0
    %1684 = vmatprep.subr.mxu0 0.0
    %1685 = vmatpush1.msra.mxu0 0.0
    %1686 = vmatprep.subr.mxu0 0.0
    %1687 = vmatpush1.msra.mxu0 0.0
    %1688 = vmatprep.subr.mxu0 0.0
    %1689 = vmatpush1.msra.mxu0 0.0
    %1690 = vmatprep.subr.mxu0 0.0
    %1691 = vmatpush1.msra.mxu0 0.0
    %1692 = vmatprep.subr.mxu0 0.0
    %1693 = vmatpush1.msra.mxu0 0.0
    %1694 = vmatprep.subr.mxu0 0.0
    %1695 = vmatpush1.msra.mxu0 0.0
    %1696 = vmatprep.subr.mxu0 0.0
    %1697 = vmatpush1.msra.mxu0 0.0
    %1698 = vmatprep.subr.mxu0 0.0
    %1699 = vmatpush1.msra.mxu0 0.0
    %1700 = vmatprep.mubr.f32.mxu0 0.0
    %1701 = vmatmul.mubr.f32.gmra.mrb[0].mxu0 %v780
    %v1702 = vpop.f32.mrb[0].mxu0
    %v1703 = vadd.f32 0.0, %v1702
    %v1704 = vpop.f32.mrb[0].mxu0
    %v1705 = vadd.f32 0.0, %v1704
    %1706 = vdwg.mxu0
    %v1803 = vunpack.c.l.b16 %v95
    %v1804 = vunpack.c.h.b16 %v95
    %v1805 = vunpack.c.l.b16 %v96
    %v1806 = vunpack.c.h.b16 %v96
    %v1807 = vunpack.c.l.b16 %v97
    %v1808 = vunpack.c.h.b16 %v97
    %v1809 = vunpack.c.l.b16 %v98
    %v1810 = vunpack.c.h.b16 %v98
    %v1811 = vunpack.c.l.b16 %v99
    %v1812 = vunpack.c.h.b16 %v99
    %v1813 = vunpack.c.l.b16 %v100
    %v1814 = vunpack.c.h.b16 %v100
    %v1815 = vunpack.c.l.b16 %v101
    %v1816 = vunpack.c.h.b16 %v101
    %v1817 = vunpack.c.l.b16 %v102
    %v1818 = vunpack.c.h.b16 %v102
    %v1819 = vunpack.c.l.b16 %v103
    %v1820 = vunpack.c.h.b16 %v103
    %v1821 = vunpack.c.l.b16 %v104
    %v1822 = vunpack.c.h.b16 %v104
    %v1823 = vunpack.c.l.b16 %v105
    %v1824 = vunpack.c.h.b16 %v105
    %v1825 = vunpack.c.l.b16 %v106
    %v1826 = vunpack.c.h.b16 %v106
    %v1827 = vunpack.c.l.b16 %v107
    %v1828 = vunpack.c.h.b16 %v107
    %v1829 = vunpack.c.l.b16 %v108
    %v1830 = vunpack.c.h.b16 %v108
    %v1831 = vunpack.c.l.b16 %v109
    %v1832 = vunpack.c.h.b16 %v109
    %v1833 = vunpack.c.l.b16 %v110
    %v1834 = vunpack.c.h.b16 %v110
    %v1835 = vunpack.c.l.b16 %v111
    %v1836 = vunpack.c.h.b16 %v111
    %v1837 = vunpack.c.l.b16 %v112
    %v1838 = vunpack.c.h.b16 %v112
    %v1839 = vunpack.c.l.b16 %v113
    %v1840 = vunpack.c.h.b16 %v113
    %v1841 = vunpack.c.l.b16 %v114
    %v1842 = vunpack.c.h.b16 %v114
    %v1843 = vunpack.c.l.b16 %v115
    %v1844 = vunpack.c.h.b16 %v115
    %v1845 = vunpack.c.l.b16 %v116
    %v1846 = vunpack.c.h.b16 %v116
    %v1847 = vunpack.c.l.b16 %v117
    %v1848 = vunpack.c.h.b16 %v117
    %v1849 = vunpack.c.l.b16 %v118
    %v1850 = vunpack.c.h.b16 %v118
    %v1851 = vunpack.c.l.b16 %v119
    %v1852 = vunpack.c.h.b16 %v119
    %v1853 = vunpack.c.l.b16 %v120
    %v1854 = vunpack.c.h.b16 %v120
    %v1855 = vunpack.c.l.b16 %v121
    %v1856 = vunpack.c.h.b16 %v121
    %v1857 = vunpack.c.l.b16 %v122
    %v1858 = vunpack.c.h.b16 %v122
    %v1859 = vunpack.c.l.b16 %v123
    %v1860 = vunpack.c.h.b16 %v123
    %v1861 = vunpack.c.l.b16 %v124
    %v1862 = vunpack.c.h.b16 %v124
    %v1863 = vunpack.c.l.b16 %v125
    %v1864 = vunpack.c.h.b16 %v125
    %v1865 = vunpack.c.l.b16 %v126
    %v1866 = vunpack.c.h.b16 %v126
    %v1867 = vunpack.c.l.b16 %v127
    %v1868 = vunpack.c.h.b16 %v127
    %v1869 = vunpack.c.l.b16 %v128
    %v1870 = vunpack.c.h.b16 %v128
    %v1871 = vunpack.c.l.b16 %v129
    %v1872 = vunpack.c.h.b16 %v129
    %v1873 = vunpack.c.l.b16 %v130
    %v1874 = vunpack.c.h.b16 %v130
    %v1875 = vunpack.c.l.b16 %v131
    %v1876 = vunpack.c.h.b16 %v131
    %v1877 = vunpack.c.l.b16 %v132
    %v1878 = vunpack.c.h.b16 %v132
    %v1879 = vunpack.c.l.b16 %v133
    %v1880 = vunpack.c.h.b16 %v133
    %v1881 = vunpack.c.l.b16 %v134
    %v1882 = vunpack.c.h.b16 %v134
    %v1883 = vunpack.c.l.b16 %v135
    %v1884 = vunpack.c.h.b16 %v135
    %v1885 = vunpack.c.l.b16 %v136
    %v1886 = vunpack.c.h.b16 %v136
    %v1887 = vunpack.c.l.b16 %v137
    %v1888 = vunpack.c.h.b16 %v137
    %v1889 = vunpack.c.l.b16 %v138
    %v1890 = vunpack.c.h.b16 %v138
    %v1891 = vunpack.c.l.b16 %v139
    %v1892 = vunpack.c.h.b16 %v139
    %v1893 = vunpack.c.l.b16 %v140
    %v1894 = vunpack.c.h.b16 %v140
    %v1895 = vunpack.c.l.b16 %v141
    %v1896 = vunpack.c.h.b16 %v141
    %v1897 = vunpack.c.l.b16 %v142
    %v1898 = vunpack.c.h.b16 %v142
    %v1899 = vunpack.c.l.b16 %v143
    %v1900 = vunpack.c.h.b16 %v143
    %v1901 = vunpack.c.l.b16 %v144
    %v1902 = vunpack.c.h.b16 %v144
    %v1903 = vunpack.c.l.b16 %v145
    %v1904 = vunpack.c.h.b16 %v145
    %v1905 = vunpack.c.l.b16 %v146
    %v1906 = vunpack.c.h.b16 %v146
    %v1907 = vunpack.c.l.b16 %v147
    %v1908 = vunpack.c.h.b16 %v147
    %v1909 = vunpack.c.l.b16 %v148
    %v1910 = vunpack.c.h.b16 %v148
    %v1911 = vunpack.c.l.b16 %v149
    %v1912 = vunpack.c.h.b16 %v149
    %v1913 = vunpack.c.l.b16 %v150
    %v1914 = vunpack.c.h.b16 %v150
    %v1915 = vunpack.c.l.b16 %v151
    %v1916 = vunpack.c.h.b16 %v151
    %v1917 = vunpack.c.l.b16 %v152
    %v1918 = vunpack.c.h.b16 %v152
    %v1919 = vunpack.c.l.b16 %v153
    %v1920 = vunpack.c.h.b16 %v153
    %v1921 = vunpack.c.l.b16 %v154
    %v1922 = vunpack.c.h.b16 %v154
    %v1923 = vunpack.c.l.b16 %v155
    %v1924 = vunpack.c.h.b16 %v155
    %v1925 = vunpack.c.l.b16 %v156
    %v1926 = vunpack.c.h.b16 %v156
    %v1927 = vunpack.c.l.b16 %v157
    %v1928 = vunpack.c.h.b16 %v157
    %v1929 = vunpack.c.l.b16 %v158
    %v1930 = vunpack.c.h.b16 %v158
    %v1931 = vunpack.c.l.b16 %v159
    %v1932 = vunpack.c.h.b16 %v159
    %v1933 = vunpack.c.l.b16 %v160
    %v1934 = vunpack.c.h.b16 %v160
    %v1935 = vunpack.c.l.b16 %v161
    %v1936 = vunpack.c.h.b16 %v161
    %v1937 = vunpack.c.l.b16 %v162
    %v1938 = vunpack.c.h.b16 %v162
    %v1939 = vunpack.c.l.b16 %v163
    %v1940 = vunpack.c.h.b16 %v163
    %v1941 = vunpack.c.l.b16 %v164
    %v1942 = vunpack.c.h.b16 %v164
    %v1943 = vunpack.c.l.b16 %v165
    %v1944 = vunpack.c.h.b16 %v165
    %v1945 = vunpack.c.l.b16 %v166
    %v1946 = vunpack.c.h.b16 %v166
    %v1947 = vunpack.c.l.b16 %v167
    %v1948 = vunpack.c.h.b16 %v167
    %v1949 = vunpack.c.l.b16 %v168
    %v1950 = vunpack.c.h.b16 %v168
    %v1951 = vunpack.c.l.b16 %v169
    %v1952 = vunpack.c.h.b16 %v169
    %v1953 = vunpack.c.l.b16 %v170
    %v1954 = vunpack.c.h.b16 %v170
    %v1955 = vunpack.c.l.b16 %v171
    %v1956 = vunpack.c.h.b16 %v171
    %v1957 = vunpack.c.l.b16 %v172
    %v1958 = vunpack.c.h.b16 %v172
    %v1959 = vunpack.c.l.b16 %v173
    %v1960 = vunpack.c.h.b16 %v173
    %v1961 = vunpack.c.l.b16 %v174
    %v1962 = vunpack.c.h.b16 %v174
    %v1963 = vunpack.c.l.b16 %v175
    %v1964 = vunpack.c.h.b16 %v175
    %v1965 = vunpack.c.l.b16 %v176
    %v1966 = vunpack.c.h.b16 %v176
    %v1967 = vunpack.c.l.b16 %v177
    %v1968 = vunpack.c.h.b16 %v177
    %v1969 = vunpack.c.l.b16 %v178
    %v1970 = vunpack.c.h.b16 %v178
    %v1971 = vunpack.c.l.b16 %v179
    %v1972 = vunpack.c.h.b16 %v179
    %v1973 = vunpack.c.l.b16 %v180
    %v1974 = vunpack.c.h.b16 %v180
    %v1975 = vunpack.c.l.b16 %v181
    %v1976 = vunpack.c.h.b16 %v181
    %v1977 = vunpack.c.l.b16 %v182
    %v1978 = vunpack.c.h.b16 %v182
    %v1979 = vunpack.c.l.b16 %v183
    %v1980 = vunpack.c.h.b16 %v183
    %v1981 = vunpack.c.l.b16 %v184
    %v1982 = vunpack.c.h.b16 %v184
    %v1983 = vunpack.c.l.b16 %v185
    %v1984 = vunpack.c.h.b16 %v185
    %v1985 = vunpack.c.l.b16 %v186
    %v1986 = vunpack.c.h.b16 %v186
    %v1987 = vunpack.c.l.b16 %v187
    %v1988 = vunpack.c.h.b16 %v187
    %v1989 = vunpack.c.l.b16 %v188
    %v1990 = vunpack.c.h.b16 %v188
    %v1991 = vunpack.c.l.b16 %v189
    %v1992 = vunpack.c.h.b16 %v189
    %v1993 = vunpack.c.l.b16 %v190
    %v1994 = vunpack.c.h.b16 %v190
    %v1995 = vpack.c.b16 %v1827, %v1803
    %v1996 = vpack.c.b16 %v1828, %v1804
    %v1997 = vpack.c.b16 %v1829, %v1805
    %v1998 = vpack.c.b16 %v1830, %v1806
    %v1999 = vpack.c.b16 %v1831, %v1807
    %v2000 = vpack.c.b16 %v1832, %v1808
    %v2001 = vpack.c.b16 %v1833, %v1809
    %v2002 = vpack.c.b16 %v1834, %v1810
    %v2003 = vpack.c.b16 %v1835, %v1811
    %v2004 = vpack.c.b16 %v1836, %v1812
    %v2005 = vpack.c.b16 %v1837, %v1813
    %v2006 = vpack.c.b16 %v1838, %v1814
    %v2007 = vpack.c.b16 %v1839, %v1815
    %v2008 = vpack.c.b16 %v1840, %v1816
    %v2009 = vpack.c.b16 %v1841, %v1817
    %v2010 = vpack.c.b16 %v1842, %v1818
    %v2011 = vpack.c.b16 %v1843, %v1819
    %v2012 = vpack.c.b16 %v1844, %v1820
    %v2013 = vpack.c.b16 %v1845, %v1821
    %v2014 = vpack.c.b16 %v1846, %v1822
    %v2015 = vpack.c.b16 %v1847, %v1823
    %v2016 = vpack.c.b16 %v1848, %v1824
    %v2017 = vpack.c.b16 %v1849, %v1825
    %v2018 = vpack.c.b16 %v1850, %v1826
    %v2019 = vpack.c.b16 %v1875, %v1851
    %v2020 = vpack.c.b16 %v1876, %v1852
    %v2021 = vpack.c.b16 %v1877, %v1853
    %v2022 = vpack.c.b16 %v1878, %v1854
    %v2023 = vpack.c.b16 %v1879, %v1855
    %v2024 = vpack.c.b16 %v1880, %v1856
    %v2025 = vpack.c.b16 %v1881, %v1857
    %v2026 = vpack.c.b16 %v1882, %v1858
    %v2027 = vpack.c.b16 %v1883, %v1859
    %v2028 = vpack.c.b16 %v1884, %v1860
    %v2029 = vpack.c.b16 %v1885, %v1861
    %v2030 = vpack.c.b16 %v1886, %v1862
    %v2031 = vpack.c.b16 %v1887, %v1863
    %v2032 = vpack.c.b16 %v1888, %v1864
    %v2033 = vpack.c.b16 %v1889, %v1865
    %v2034 = vpack.c.b16 %v1890, %v1866
    %v2035 = vpack.c.b16 %v1891, %v1867
    %v2036 = vpack.c.b16 %v1892, %v1868
    %v2037 = vpack.c.b16 %v1893, %v1869
    %v2038 = vpack.c.b16 %v1894, %v1870
    %v2039 = vpack.c.b16 %v1895, %v1871
    %v2040 = vpack.c.b16 %v1896, %v1872
    %v2041 = vpack.c.b16 %v1897, %v1873
    %v2042 = vpack.c.b16 %v1898, %v1874
    %v2043 = vpack.c.b16 %v1923, %v1899
    %v2044 = vpack.c.b16 %v1924, %v1900
    %v2045 = vpack.c.b16 %v1925, %v1901
    %v2046 = vpack.c.b16 %v1926, %v1902
    %v2047 = vpack.c.b16 %v1927, %v1903
    %v2048 = vpack.c.b16 %v1928, %v1904
    %v2049 = vpack.c.b16 %v1929, %v1905
    %v2050 = vpack.c.b16 %v1930, %v1906
    %v2051 = vpack.c.b16 %v1931, %v1907
    %v2052 = vpack.c.b16 %v1932, %v1908
    %v2053 = vpack.c.b16 %v1933, %v1909
    %v2054 = vpack.c.b16 %v1934, %v1910
    %v2055 = vpack.c.b16 %v1935, %v1911
    %v2056 = vpack.c.b16 %v1936, %v1912
    %v2057 = vpack.c.b16 %v1937, %v1913
    %v2058 = vpack.c.b16 %v1938, %v1914
    %v2059 = vpack.c.b16 %v1939, %v1915
    %v2060 = vpack.c.b16 %v1940, %v1916
    %v2061 = vpack.c.b16 %v1941, %v1917
    %v2062 = vpack.c.b16 %v1942, %v1918
    %v2063 = vpack.c.b16 %v1943, %v1919
    %v2064 = vpack.c.b16 %v1944, %v1920
    %v2065 = vpack.c.b16 %v1945, %v1921
    %v2066 = vpack.c.b16 %v1946, %v1922
    %v2067 = vpack.c.b16 %v1971, %v1947
    %v2068 = vpack.c.b16 %v1972, %v1948
    %v2069 = vpack.c.b16 %v1973, %v1949
    %v2070 = vpack.c.b16 %v1974, %v1950
    %v2071 = vpack.c.b16 %v1975, %v1951
    %v2072 = vpack.c.b16 %v1976, %v1952
    %v2073 = vpack.c.b16 %v1977, %v1953
    %v2074 = vpack.c.b16 %v1978, %v1954
    %v2075 = vpack.c.b16 %v1979, %v1955
    %v2076 = vpack.c.b16 %v1980, %v1956
    %v2077 = vpack.c.b16 %v1981, %v1957
    %v2078 = vpack.c.b16 %v1982, %v1958
    %v2079 = vpack.c.b16 %v1983, %v1959
    %v2080 = vpack.c.b16 %v1984, %v1960
    %v2081 = vpack.c.b16 %v1985, %v1961
    %v2082 = vpack.c.b16 %v1986, %v1962
    %v2083 = vpack.c.b16 %v1987, %v1963
    %v2084 = vpack.c.b16 %v1988, %v1964
    %v2085 = vpack.c.b16 %v1989, %v1965
    %v2086 = vpack.c.b16 %v1990, %v1966
    %v2087 = vpack.c.b16 %v1991, %v1967
    %v2088 = vpack.c.b16 %v1992, %v1968
    %v2089 = vpack.c.b16 %v1993, %v1969
    %v2090 = vpack.c.b16 %v1994, %v1970
    %vm2187 = vcmask 523264
    %v2189 = vsel %vm2187, %v777, 0
    %2191 = vmatprep.subr.bf16.mxu0 %v1996
    %2192 = vmatpush1.bf16.msra.mxu0 %v1995
    %2193 = vmatprep.subr.bf16.mxu0 %v2020
    %2194 = vmatpush1.bf16.msra.mxu0 %v2019
    %2195 = vmatprep.subr.bf16.mxu0 %v2044
    %2196 = vmatpush1.bf16.msra.mxu0 %v2043
    %2197 = vmatprep.subr.bf16.mxu0 %v2068
    %2198 = vmatpush1.bf16.msra.mxu0 %v2067
    %2199 = vmatprep.subr.bf16.mxu0 0
    %2200 = vmatpush1.bf16.msra.mxu0 0
    %2201 = vmatprep.subr.bf16.mxu0 0
    %2202 = vmatpush1.bf16.msra.mxu0 0
    %2203 = vmatprep.subr.bf16.mxu0 0
    %2204 = vmatpush1.bf16.msra.mxu0 0
    %2205 = vmatprep.subr.bf16.mxu0 0
    %2206 = vmatpush1.bf16.msra.mxu0 0
    %2207 = vmatprep.subr.bf16.mxu0 0
    %2208 = vmatpush1.bf16.msra.mxu0 0
    %2209 = vmatprep.subr.bf16.mxu0 0
    %2210 = vmatpush1.bf16.msra.mxu0 0
    %2211 = vmatprep.subr.bf16.mxu0 0
    %2212 = vmatpush1.bf16.msra.mxu0 0
    %2213 = vmatprep.subr.bf16.mxu0 0
    %2214 = vmatpush1.bf16.msra.mxu0 0
    %2215 = vmatprep.subr.bf16.mxu0 0
    %2216 = vmatpush1.bf16.msra.mxu0 0
    %2217 = vmatprep.subr.bf16.mxu0 0
    %2218 = vmatpush1.bf16.msra.mxu0 0
    %2219 = vmatprep.subr.bf16.mxu0 0
    %2220 = vmatpush1.bf16.msra.mxu0 0
    %2221 = vmatprep.subr.bf16.mxu0 0
    %2222 = vmatpush1.bf16.msra.mxu0 0
    %2223 = vmatprep.mubr.bf16.mxu0 0
    %2224 = vmatmul.mubr.bf16.gmra.mrb[0].mxu0 %v2189
    %v2225 = vpop.f32.mrb[0].mxu0
    %v2226 = vadd.f32 %v922, %v2225
    %v2227 = vpop.f32.mrb[0].mxu0
    %v2228 = vadd.f32 %v924, %v2227
    %v2229 = vpop.f32.mrb[0].mxu0
    %v2230 = vpop.f32.mrb[0].mxu0
    %2231 = vdwg.mxu0
    %2232 = vmatprep.subr.bf16.mxu0 %v1998
    %2233 = vmatpush1.bf16.msra.mxu0 %v1997
    %2234 = vmatprep.subr.bf16.mxu0 %v2022
    %2235 = vmatpush1.bf16.msra.mxu0 %v2021
    %2236 = vmatprep.subr.bf16.mxu0 %v2046
    %2237 = vmatpush1.bf16.msra.mxu0 %v2045
    %2238 = vmatprep.subr.bf16.mxu0 %v2070
    %2239 = vmatpush1.bf16.msra.mxu0 %v2069
    %2240 = vmatprep.subr.bf16.mxu0 0
    %2241 = vmatpush1.bf16.msra.mxu0 0
    %2242 = vmatprep.subr.bf16.mxu0 0
    %2243 = vmatpush1.bf16.msra.mxu0 0
    %2244 = vmatprep.subr.bf16.mxu0 0
    %2245 = vmatpush1.bf16.msra.mxu0 0
    %2246 = vmatprep.subr.bf16.mxu0 0
    %2247 = vmatpush1.bf16.msra.mxu0 0
    %2248 = vmatprep.subr.bf16.mxu0 0
    %2249 = vmatpush1.bf16.msra.mxu0 0
    %2250 = vmatprep.subr.bf16.mxu0 0
    %2251 = vmatpush1.bf16.msra.mxu0 0
    %2252 = vmatprep.subr.bf16.mxu0 0
    %2253 = vmatpush1.bf16.msra.mxu0 0
    %2254 = vmatprep.subr.bf16.mxu0 0
    %2255 = vmatpush1.bf16.msra.mxu0 0
    %2256 = vmatprep.subr.bf16.mxu0 0
    %2257 = vmatpush1.bf16.msra.mxu0 0
    %2258 = vmatprep.subr.bf16.mxu0 0
    %2259 = vmatpush1.bf16.msra.mxu0 0
    %2260 = vmatprep.subr.bf16.mxu0 0
    %2261 = vmatpush1.bf16.msra.mxu0 0
    %2262 = vmatprep.subr.bf16.mxu0 0
    %2263 = vmatpush1.bf16.msra.mxu0 0
    %2264 = vmatprep.mubr.bf16.mxu0 0
    %2265 = vmatmul.mubr.bf16.gmra.mrb[0].mxu0 %v2189
    %v2266 = vpop.f32.mrb[0].mxu0
    %v2267 = vadd.f32 %v993, %v2266
    %v2268 = vpop.f32.mrb[0].mxu0
    %v2269 = vadd.f32 %v995, %v2268
    %v2270 = vpop.f32.mrb[0].mxu0
    %v2271 = vpop.f32.mrb[0].mxu0
    %2272 = vdwg.mxu0
    %2273 = vmatprep.subr.bf16.mxu0 %v2000
    %2274 = vmatpush1.bf16.msra.mxu0 %v1999
    %2275 = vmatprep.subr.bf16.mxu0 %v2024
    %2276 = vmatpush1.bf16.msra.mxu0 %v2023
    %2277 = vmatprep.subr.bf16.mxu0 %v2048
    %2278 = vmatpush1.bf16.msra.mxu0 %v2047
    %2279 = vmatprep.subr.bf16.mxu0 %v2072
    %2280 = vmatpush1.bf16.msra.mxu0 %v2071
    %2281 = vmatprep.subr.bf16.mxu0 0
    %2282 = vmatpush1.bf16.msra.mxu0 0
    %2283 = vmatprep.subr.bf16.mxu0 0
    %2284 = vmatpush1.bf16.msra.mxu0 0
    %2285 = vmatprep.subr.bf16.mxu0 0
    %2286 = vmatpush1.bf16.msra.mxu0 0
    %2287 = vmatprep.subr.bf16.mxu0 0
    %2288 = vmatpush1.bf16.msra.mxu0 0
    %2289 = vmatprep.subr.bf16.mxu0 0
    %2290 = vmatpush1.bf16.msra.mxu0 0
    %2291 = vmatprep.subr.bf16.mxu0 0
    %2292 = vmatpush1.bf16.msra.mxu0 0
    %2293 = vmatprep.subr.bf16.mxu0 0
    %2294 = vmatpush1.bf16.msra.mxu0 0
    %2295 = vmatprep.subr.bf16.mxu0 0
    %2296 = vmatpush1.bf16.msra.mxu0 0
    %2297 = vmatprep.subr.bf16.mxu0 0
    %2298 = vmatpush1.bf16.msra.mxu0 0
    %2299 = vmatprep.subr.bf16.mxu0 0
    %2300 = vmatpush1.bf16.msra.mxu0 0
    %2301 = vmatprep.subr.bf16.mxu0 0
    %2302 = vmatpush1.bf16.msra.mxu0 0
    %2303 = vmatprep.subr.bf16.mxu0 0
    %2304 = vmatpush1.bf16.msra.mxu0 0
    %2305 = vmatprep.mubr.bf16.mxu0 0
    %2306 = vmatmul.mubr.bf16.gmra.mrb[0].mxu0 %v2189
    %v2307 = vpop.f32.mrb[0].mxu0
    %v2308 = vadd.f32 %v1064, %v2307
    %v2309 = vpop.f32.mrb[0].mxu0
    %v2310 = vadd.f32 %v1066, %v2309
    %v2311 = vpop.f32.mrb[0].mxu0
    %v2312 = vpop.f32.mrb[0].mxu0
    %2313 = vdwg.mxu0
    %2314 = vmatprep.subr.bf16.mxu0 %v2002
    %2315 = vmatpush1.bf16.msra.mxu0 %v2001
    %2316 = vmatprep.subr.bf16.mxu0 %v2026
    %2317 = vmatpush1.bf16.msra.mxu0 %v2025
    %2318 = vmatprep.subr.bf16.mxu0 %v2050
    %2319 = vmatpush1.bf16.msra.mxu0 %v2049
    %2320 = vmatprep.subr.bf16.mxu0 %v2074
    %2321 = vmatpush1.bf16.msra.mxu0 %v2073
    %2322 = vmatprep.subr.bf16.mxu0 0
    %2323 = vmatpush1.bf16.msra.mxu0 0
    %2324 = vmatprep.subr.bf16.mxu0 0
    %2325 = vmatpush1.bf16.msra.mxu0 0
    %2326 = vmatprep.subr.bf16.mxu0 0
    %2327 = vmatpush1.bf16.msra.mxu0 0
    %2328 = vmatprep.subr.bf16.mxu0 0
    %2329 = vmatpush1.bf16.msra.mxu0 0
    %2330 = vmatprep.subr.bf16.mxu0 0
    %2331 = vmatpush1.bf16.msra.mxu0 0
    %2332 = vmatprep.subr.bf16.mxu0 0
    %2333 = vmatpush1.bf16.msra.mxu0 0
    %2334 = vmatprep.subr.bf16.mxu0 0
    %2335 = vmatpush1.bf16.msra.mxu0 0
    %2336 = vmatprep.subr.bf16.mxu0 0
    %2337 = vmatpush1.bf16.msra.mxu0 0
    %2338 = vmatprep.subr.bf16.mxu0 0
    %2339 = vmatpush1.bf16.msra.mxu0 0
    %2340 = vmatprep.subr.bf16.mxu0 0
    %2341 = vmatpush1.bf16.msra.mxu0 0
    %2342 = vmatprep.subr.bf16.mxu0 0
    %2343 = vmatpush1.bf16.msra.mxu0 0
    %2344 = vmatprep.subr.bf16.mxu0 0
    %2345 = vmatpush1.bf16.msra.mxu0 0
    %2346 = vmatprep.mubr.bf16.mxu0 0
    %2347 = vmatmul.mubr.bf16.gmra.mrb[0].mxu0 %v2189
    %v2348 = vpop.f32.mrb[0].mxu0
    %v2349 = vadd.f32 %v1135, %v2348
    %v2350 = vpop.f32.mrb[0].mxu0
    %v2351 = vadd.f32 %v1137, %v2350
    %v2352 = vpop.f32.mrb[0].mxu0
    %v2353 = vpop.f32.mrb[0].mxu0
    %2354 = vdwg.mxu0
    %2355 = vmatprep.subr.bf16.mxu0 %v2004
    %2356 = vmatpush1.bf16.msra.mxu0 %v2003
    %2357 = vmatprep.subr.bf16.mxu0 %v2028
    %2358 = vmatpush1.bf16.msra.mxu0 %v2027
    %2359 = vmatprep.subr.bf16.mxu0 %v2052
    %2360 = vmatpush1.bf16.msra.mxu0 %v2051
    %2361 = vmatprep.subr.bf16.mxu0 %v2076
    %2362 = vmatpush1.bf16.msra.mxu0 %v2075
    %2363 = vmatprep.subr.bf16.mxu0 0
    %2364 = vmatpush1.bf16.msra.mxu0 0
    %2365 = vmatprep.subr.bf16.mxu0 0
    %2366 = vmatpush1.bf16.msra.mxu0 0
    %2367 = vmatprep.subr.bf16.mxu0 0
    %2368 = vmatpush1.bf16.msra.mxu0 0
    %2369 = vmatprep.subr.bf16.mxu0 0
    %2370 = vmatpush1.bf16.msra.mxu0 0
    %2371 = vmatprep.subr.bf16.mxu0 0
    %2372 = vmatpush1.bf16.msra.mxu0 0
    %2373 = vmatprep.subr.bf16.mxu0 0
    %2374 = vmatpush1.bf16.msra.mxu0 0
    %2375 = vmatprep.subr.bf16.mxu0 0
    %2376 = vmatpush1.bf16.msra.mxu0 0
    %2377 = vmatprep.subr.bf16.mxu0 0
    %2378 = vmatpush1.bf16.msra.mxu0 0
    %2379 = vmatprep.subr.bf16.mxu0 0
    %2380 = vmatpush1.bf16.msra.mxu0 0
    %2381 = vmatprep.subr.bf16.mxu0 0
    %2382 = vmatpush1.bf16.msra.mxu0 0
    %2383 = vmatprep.subr.bf16.mxu0 0
    %2384 = vmatpush1.bf16.msra.mxu0 0
    %2385 = vmatprep.subr.bf16.mxu0 0
    %2386 = vmatpush1.bf16.msra.mxu0 0
    %2387 = vmatprep.mubr.bf16.mxu0 0
    %2388 = vmatmul.mubr.bf16.gmra.mrb[0].mxu0 %v2189
    %v2389 = vpop.f32.mrb[0].mxu0
    %v2390 = vadd.f32 %v1206, %v2389
    %v2391 = vpop.f32.mrb[0].mxu0
    %v2392 = vadd.f32 %v1208, %v2391
    %v2393 = vpop.f32.mrb[0].mxu0
    %v2394 = vpop.f32.mrb[0].mxu0
    %2395 = vdwg.mxu0
    %2396 = vmatprep.subr.bf16.mxu0 %v2006
    %2397 = vmatpush1.bf16.msra.mxu0 %v2005
    %2398 = vmatprep.subr.bf16.mxu0 %v2030
    %2399 = vmatpush1.bf16.msra.mxu0 %v2029
    %2400 = vmatprep.subr.bf16.mxu0 %v2054
    %2401 = vmatpush1.bf16.msra.mxu0 %v2053
    %2402 = vmatprep.subr.bf16.mxu0 %v2078
    %2403 = vmatpush1.bf16.msra.mxu0 %v2077
    %2404 = vmatprep.subr.bf16.mxu0 0
    %2405 = vmatpush1.bf16.msra.mxu0 0
    %2406 = vmatprep.subr.bf16.mxu0 0
    %2407 = vmatpush1.bf16.msra.mxu0 0
    %2408 = vmatprep.subr.bf16.mxu0 0
    %2409 = vmatpush1.bf16.msra.mxu0 0
    %2410 = vmatprep.subr.bf16.mxu0 0
    %2411 = vmatpush1.bf16.msra.mxu0 0
    %2412 = vmatprep.subr.bf16.mxu0 0
    %2413 = vmatpush1.bf16.msra.mxu0 0
    %2414 = vmatprep.subr.bf16.mxu0 0
    %2415 = vmatpush1.bf16.msra.mxu0 0
    %2416 = vmatprep.subr.bf16.mxu0 0
    %2417 = vmatpush1.bf16.msra.mxu0 0
    %2418 = vmatprep.subr.bf16.mxu0 0
    %2419 = vmatpush1.bf16.msra.mxu0 0
    %2420 = vmatprep.subr.bf16.mxu0 0
    %2421 = vmatpush1.bf16.msra.mxu0 0
    %2422 = vmatprep.subr.bf16.mxu0 0
    %2423 = vmatpush1.bf16.msra.mxu0 0
    %2424 = vmatprep.subr.bf16.mxu0 0
    %2425 = vmatpush1.bf16.msra.mxu0 0
    %2426 = vmatprep.subr.bf16.mxu0 0
    %2427 = vmatpush1.bf16.msra.mxu0 0
    %2428 = vmatprep.mubr.bf16.mxu0 0
    %2429 = vmatmul.mubr.bf16.gmra.mrb[0].mxu0 %v2189
    %v2430 = vpop.f32.mrb[0].mxu0
    %v2431 = vadd.f32 %v1277, %v2430
    %v2432 = vpop.f32.mrb[0].mxu0
    %v2433 = vadd.f32 %v1279, %v2432
    %v2434 = vpop.f32.mrb[0].mxu0
    %v2435 = vpop.f32.mrb[0].mxu0
    %2436 = vdwg.mxu0
    %2437 = vmatprep.subr.bf16.mxu0 %v2008
    %2438 = vmatpush1.bf16.msra.mxu0 %v2007
    %2439 = vmatprep.subr.bf16.mxu0 %v2032
    %2440 = vmatpush1.bf16.msra.mxu0 %v2031
    %2441 = vmatprep.subr.bf16.mxu0 %v2056
    %2442 = vmatpush1.bf16.msra.mxu0 %v2055
    %2443 = vmatprep.subr.bf16.mxu0 %v2080
    %2444 = vmatpush1.bf16.msra.mxu0 %v2079
    %2445 = vmatprep.subr.bf16.mxu0 0
    %2446 = vmatpush1.bf16.msra.mxu0 0
    %2447 = vmatprep.subr.bf16.mxu0 0
    %2448 = vmatpush1.bf16.msra.mxu0 0
    %2449 = vmatprep.subr.bf16.mxu0 0
    %2450 = vmatpush1.bf16.msra.mxu0 0
    %2451 = vmatprep.subr.bf16.mxu0 0
    %2452 = vmatpush1.bf16.msra.mxu0 0
    %2453 = vmatprep.subr.bf16.mxu0 0
    %2454 = vmatpush1.bf16.msra.mxu0 0
    %2455 = vmatprep.subr.bf16.mxu0 0
    %2456 = vmatpush1.bf16.msra.mxu0 0
    %2457 = vmatprep.subr.bf16.mxu0 0
    %2458 = vmatpush1.bf16.msra.mxu0 0
    %2459 = vmatprep.subr.bf16.mxu0 0
    %2460 = vmatpush1.bf16.msra.mxu0 0
    %2461 = vmatprep.subr.bf16.mxu0 0
    %2462 = vmatpush1.bf16.msra.mxu0 0
    %2463 = vmatprep.subr.bf16.mxu0 0
    %2464 = vmatpush1.bf16.msra.mxu0 0
    %2465 = vmatprep.subr.bf16.mxu0 0
    %2466 = vmatpush1.bf16.msra.mxu0 0
    %2467 = vmatprep.subr.bf16.mxu0 0
    %2468 = vmatpush1.bf16.msra.mxu0 0
    %2469 = vmatprep.mubr.bf16.mxu0 0
    %2470 = vmatmul.mubr.bf16.gmra.mrb[0].mxu0 %v2189
    %v2471 = vpop.f32.mrb[0].mxu0
    %v2472 = vadd.f32 %v1348, %v2471
    %v2473 = vpop.f32.mrb[0].mxu0
    %v2474 = vadd.f32 %v1350, %v2473
    %v2475 = vpop.f32.mrb[0].mxu0
    %v2476 = vpop.f32.mrb[0].mxu0
    %2477 = vdwg.mxu0
    %2478 = vmatprep.subr.bf16.mxu0 %v2010
    %2479 = vmatpush1.bf16.msra.mxu0 %v2009
    %2480 = vmatprep.subr.bf16.mxu0 %v2034
    %2481 = vmatpush1.bf16.msra.mxu0 %v2033
    %2482 = vmatprep.subr.bf16.mxu0 %v2058
    %2483 = vmatpush1.bf16.msra.mxu0 %v2057
    %2484 = vmatprep.subr.bf16.mxu0 %v2082
    %2485 = vmatpush1.bf16.msra.mxu0 %v2081
    %2486 = vmatprep.subr.bf16.mxu0 0
    %2487 = vmatpush1.bf16.msra.mxu0 0
    %2488 = vmatprep.subr.bf16.mxu0 0
    %2489 = vmatpush1.bf16.msra.mxu0 0
    %2490 = vmatprep.subr.bf16.mxu0 0
    %2491 = vmatpush1.bf16.msra.mxu0 0
    %2492 = vmatprep.subr.bf16.mxu0 0
    %2493 = vmatpush1.bf16.msra.mxu0 0
    %2494 = vmatprep.subr.bf16.mxu0 0
    %2495 = vmatpush1.bf16.msra.mxu0 0
    %2496 = vmatprep.subr.bf16.mxu0 0
    %2497 = vmatpush1.bf16.msra.mxu0 0
    %2498 = vmatprep.subr.bf16.mxu0 0
    %2499 = vmatpush1.bf16.msra.mxu0 0
    %2500 = vmatprep.subr.bf16.mxu0 0
    %2501 = vmatpush1.bf16.msra.mxu0 0
    %2502 = vmatprep.subr.bf16.mxu0 0
    %2503 = vmatpush1.bf16.msra.mxu0 0
    %2504 = vmatprep.subr.bf16.mxu0 0
    %2505 = vmatpush1.bf16.msra.mxu0 0
    %2506 = vmatprep.subr.bf16.mxu0 0
    %2507 = vmatpush1.bf16.msra.mxu0 0
    %2508 = vmatprep.subr.bf16.mxu0 0
    %2509 = vmatpush1.bf16.msra.mxu0 0
    %2510 = vmatprep.mubr.bf16.mxu0 0
    %2511 = vmatmul.mubr.bf16.gmra.mrb[0].mxu0 %v2189
    %v2512 = vpop.f32.mrb[0].mxu0
    %v2513 = vadd.f32 %v1419, %v2512
    %v2514 = vpop.f32.mrb[0].mxu0
    %v2515 = vadd.f32 %v1421, %v2514
    %v2516 = vpop.f32.mrb[0].mxu0
    %v2517 = vpop.f32.mrb[0].mxu0
    %2518 = vdwg.mxu0
    %2519 = vmatprep.subr.bf16.mxu0 %v2012
    %2520 = vmatpush1.bf16.msra.mxu0 %v2011
    %2521 = vmatprep.subr.bf16.mxu0 %v2036
    %2522 = vmatpush1.bf16.msra.mxu0 %v2035
    %2523 = vmatprep.subr.bf16.mxu0 %v2060
    %2524 = vmatpush1.bf16.msra.mxu0 %v2059
    %2525 = vmatprep.subr.bf16.mxu0 %v2084
    %2526 = vmatpush1.bf16.msra.mxu0 %v2083
    %2527 = vmatprep.subr.bf16.mxu0 0
    %2528 = vmatpush1.bf16.msra.mxu0 0
    %2529 = vmatprep.subr.bf16.mxu0 0
    %2530 = vmatpush1.bf16.msra.mxu0 0
    %2531 = vmatprep.subr.bf16.mxu0 0
    %2532 = vmatpush1.bf16.msra.mxu0 0
    %2533 = vmatprep.subr.bf16.mxu0 0
    %2534 = vmatpush1.bf16.msra.mxu0 0
    %2535 = vmatprep.subr.bf16.mxu0 0
    %2536 = vmatpush1.bf16.msra.mxu0 0
    %2537 = vmatprep.subr.bf16.mxu0 0
    %2538 = vmatpush1.bf16.msra.mxu0 0
    %2539 = vmatprep.subr.bf16.mxu0 0
    %2540 = vmatpush1.bf16.msra.mxu0 0
    %2541 = vmatprep.subr.bf16.mxu0 0
    %2542 = vmatpush1.bf16.msra.mxu0 0
    %2543 = vmatprep.subr.bf16.mxu0 0
    %2544 = vmatpush1.bf16.msra.mxu0 0
    %2545 = vmatprep.subr.bf16.mxu0 0
    %2546 = vmatpush1.bf16.msra.mxu0 0
    %2547 = vmatprep.subr.bf16.mxu0 0
    %2548 = vmatpush1.bf16.msra.mxu0 0
    %2549 = vmatprep.subr.bf16.mxu0 0
    %2550 = vmatpush1.bf16.msra.mxu0 0
    %2551 = vmatprep.mubr.bf16.mxu0 0
    %2552 = vmatmul.mubr.bf16.gmra.mrb[0].mxu0 %v2189
    %v2553 = vpop.f32.mrb[0].mxu0
    %v2554 = vadd.f32 %v1490, %v2553
    %v2555 = vpop.f32.mrb[0].mxu0
    %v2556 = vadd.f32 %v1492, %v2555
    %v2557 = vpop.f32.mrb[0].mxu0
    %v2558 = vpop.f32.mrb[0].mxu0
    %2559 = vdwg.mxu0
    %2560 = vmatprep.subr.bf16.mxu0 %v2014
    %2561 = vmatpush1.bf16.msra.mxu0 %v2013
    %2562 = vmatprep.subr.bf16.mxu0 %v2038
    %2563 = vmatpush1.bf16.msra.mxu0 %v2037
    %2564 = vmatprep.subr.bf16.mxu0 %v2062
    %2565 = vmatpush1.bf16.msra.mxu0 %v2061
    %2566 = vmatprep.subr.bf16.mxu0 %v2086
    %2567 = vmatpush1.bf16.msra.mxu0 %v2085
    %2568 = vmatprep.subr.bf16.mxu0 0
    %2569 = vmatpush1.bf16.msra.mxu0 0
    %2570 = vmatprep.subr.bf16.mxu0 0
    %2571 = vmatpush1.bf16.msra.mxu0 0
    %2572 = vmatprep.subr.bf16.mxu0 0
    %2573 = vmatpush1.bf16.msra.mxu0 0
    %2574 = vmatprep.subr.bf16.mxu0 0
    %2575 = vmatpush1.bf16.msra.mxu0 0
    %2576 = vmatprep.subr.bf16.mxu0 0
    %2577 = vmatpush1.bf16.msra.mxu0 0
    %2578 = vmatprep.subr.bf16.mxu0 0
    %2579 = vmatpush1.bf16.msra.mxu0 0
    %2580 = vmatprep.subr.bf16.mxu0 0
    %2581 = vmatpush1.bf16.msra.mxu0 0
    %2582 = vmatprep.subr.bf16.mxu0 0
    %2583 = vmatpush1.bf16.msra.mxu0 0
    %2584 = vmatprep.subr.bf16.mxu0 0
    %2585 = vmatpush1.bf16.msra.mxu0 0
    %2586 = vmatprep.subr.bf16.mxu0 0
    %2587 = vmatpush1.bf16.msra.mxu0 0
    %2588 = vmatprep.subr.bf16.mxu0 0
    %2589 = vmatpush1.bf16.msra.mxu0 0
    %2590 = vmatprep.subr.bf16.mxu0 0
    %2591 = vmatpush1.bf16.msra.mxu0 0
    %2592 = vmatprep.mubr.bf16.mxu0 0
    %2593 = vmatmul.mubr.bf16.gmra.mrb[0].mxu0 %v2189
    %v2594 = vpop.f32.mrb[0].mxu0
    %v2595 = vadd.f32 %v1561, %v2594
    %v2596 = vpop.f32.mrb[0].mxu0
    %v2597 = vadd.f32 %v1563, %v2596
    %v2598 = vpop.f32.mrb[0].mxu0
    %v2599 = vpop.f32.mrb[0].mxu0
    %2600 = vdwg.mxu0
    %2601 = vmatprep.subr.bf16.mxu0 %v2016
    %2602 = vmatpush1.bf16.msra.mxu0 %v2015
    %2603 = vmatprep.subr.bf16.mxu0 %v2040
    %2604 = vmatpush1.bf16.msra.mxu0 %v2039
    %2605 = vmatprep.subr.bf16.mxu0 %v2064
    %2606 = vmatpush1.bf16.msra.mxu0 %v2063
    %2607 = vmatprep.subr.bf16.mxu0 %v2088
    %2608 = vmatpush1.bf16.msra.mxu0 %v2087
    %2609 = vmatprep.subr.bf16.mxu0 0
    %2610 = vmatpush1.bf16.msra.mxu0 0
    %2611 = vmatprep.subr.bf16.mxu0 0
    %2612 = vmatpush1.bf16.msra.mxu0 0
    %2613 = vmatprep.subr.bf16.mxu0 0
    %2614 = vmatpush1.bf16.msra.mxu0 0
    %2615 = vmatprep.subr.bf16.mxu0 0
    %2616 = vmatpush1.bf16.msra.mxu0 0
    %2617 = vmatprep.subr.bf16.mxu0 0
    %2618 = vmatpush1.bf16.msra.mxu0 0
    %2619 = vmatprep.subr.bf16.mxu0 0
    %2620 = vmatpush1.bf16.msra.mxu0 0
    %2621 = vmatprep.subr.bf16.mxu0 0
    %2622 = vmatpush1.bf16.msra.mxu0 0
    %2623 = vmatprep.subr.bf16.mxu0 0
    %2624 = vmatpush1.bf16.msra.mxu0 0
    %2625 = vmatprep.subr.bf16.mxu0 0
    %2626 = vmatpush1.bf16.msra.mxu0 0
    %2627 = vmatprep.subr.bf16.mxu0 0
    %2628 = vmatpush1.bf16.msra.mxu0 0
    %2629 = vmatprep.subr.bf16.mxu0 0
    %2630 = vmatpush1.bf16.msra.mxu0 0
    %2631 = vmatprep.subr.bf16.mxu0 0
    %2632 = vmatpush1.bf16.msra.mxu0 0
    %2633 = vmatprep.mubr.bf16.mxu0 0
    %2634 = vmatmul.mubr.bf16.gmra.mrb[0].mxu0 %v2189
    %v2635 = vpop.f32.mrb[0].mxu0
    %v2636 = vadd.f32 %v1632, %v2635
    %v2637 = vpop.f32.mrb[0].mxu0
    %v2638 = vadd.f32 %v1634, %v2637
    %v2639 = vpop.f32.mrb[0].mxu0
    %v2640 = vpop.f32.mrb[0].mxu0
    %2641 = vdwg.mxu0
    %2642 = vmatprep.subr.bf16.mxu0 %v2018
    %2643 = vmatpush1.bf16.msra.mxu0 %v2017
    %2644 = vmatprep.subr.bf16.mxu0 %v2042
    %2645 = vmatpush1.bf16.msra.mxu0 %v2041
    %2646 = vmatprep.subr.bf16.mxu0 %v2066
    %2647 = vmatpush1.bf16.msra.mxu0 %v2065
    %2648 = vmatprep.subr.bf16.mxu0 %v2090
    %2649 = vmatpush1.bf16.msra.mxu0 %v2089
    %2650 = vmatprep.subr.bf16.mxu0 0
    %2651 = vmatpush1.bf16.msra.mxu0 0
    %2652 = vmatprep.subr.bf16.mxu0 0
    %2653 = vmatpush1.bf16.msra.mxu0 0
    %2654 = vmatprep.subr.bf16.mxu0 0
    %2655 = vmatpush1.bf16.msra.mxu0 0
    %2656 = vmatprep.subr.bf16.mxu0 0
    %2657 = vmatpush1.bf16.msra.mxu0 0
    %2658 = vmatprep.subr.bf16.mxu0 0
    %2659 = vmatpush1.bf16.msra.mxu0 0
    %2660 = vmatprep.subr.bf16.mxu0 0
    %2661 = vmatpush1.bf16.msra.mxu0 0
    %2662 = vmatprep.subr.bf16.mxu0 0
    %2663 = vmatpush1.bf16.msra.mxu0 0
    %2664 = vmatprep.subr.bf16.mxu0 0
    %2665 = vmatpush1.bf16.msra.mxu0 0
    %2666 = vmatprep.subr.bf16.mxu0 0
    %2667 = vmatpush1.bf16.msra.mxu0 0
    %2668 = vmatprep.subr.bf16.mxu0 0
    %2669 = vmatpush1.bf16.msra.mxu0 0
    %2670 = vmatprep.subr.bf16.mxu0 0
    %2671 = vmatpush1.bf16.msra.mxu0 0
    %2672 = vmatprep.subr.bf16.mxu0 0
    %2673 = vmatpush1.bf16.msra.mxu0 0
    %2674 = vmatprep.mubr.bf16.mxu0 0
    %2675 = vmatmul.mubr.bf16.gmra.mrb[0].mxu0 %v2189
    %v2676 = vpop.f32.mrb[0].mxu0
    %v2677 = vadd.f32 %v1703, %v2676
    %v2678 = vpop.f32.mrb[0].mxu0
    %v2679 = vadd.f32 %v1705, %v2678
    %v2680 = vpop.f32.mrb[0].mxu0
    %v2681 = vpop.f32.mrb[0].mxu0
    %2682 = vdwg.mxu0
    %v2686 = vlaneseq
    %v2687 = vshrl.u32 %v2686, 7
    %v2688 = vsub.s32 0, %v2687
    %v2689 = vrot.slane %v287, %v2688
    %v2690 = vlaneseq
    %v2691 = vshrl.u32 %v2690, 7
    %v2692 = vsub.s32 1, %v2691
    %v2693 = vrot.slane %v287, %v2692
    %v2694 = vlaneseq
    %v2695 = vshrl.u32 %v2694, 7
    %v2696 = vsub.s32 2, %v2695
    %v2697 = vrot.slane %v287, %v2696
    %v2698 = vlaneseq
    %v2699 = vshrl.u32 %v2698, 7
    %v2700 = vsub.s32 3, %v2699
    %v2701 = vrot.slane %v287, %v2700
    %v2702 = vlaneseq
    %v2703 = vshrl.u32 %v2702, 7
    %v2704 = vsub.s32 4, %v2703
    %v2705 = vrot.slane %v287, %v2704
    %v2706 = vlaneseq
    %v2707 = vshrl.u32 %v2706, 7
    %v2708 = vsub.s32 5, %v2707
    %v2709 = vrot.slane %v287, %v2708
    %v2710 = vlaneseq
    %v2711 = vshrl.u32 %v2710, 7
    %v2712 = vsub.s32 6, %v2711
    %v2713 = vrot.slane %v287, %v2712
    %v2714 = vlaneseq
    %v2715 = vshrl.u32 %v2714, 7
    %v2716 = vsub.s32 7, %v2715
    %v2717 = vrot.slane %v287, %v2716
    %v2718 = vlaneseq
    %v2719 = vshrl.u32 %v2718, 7
    %v2720 = vsub.s32 0, %v2719
    %v2721 = vrot.slane %v288, %v2720
    %v2722 = vlaneseq
    %v2723 = vshrl.u32 %v2722, 7
    %v2724 = vsub.s32 1, %v2723
    %v2725 = vrot.slane %v288, %v2724
    %v2726 = vlaneseq
    %v2727 = vshrl.u32 %v2726, 7
    %v2728 = vsub.s32 2, %v2727
    %v2729 = vrot.slane %v288, %v2728
    %v2730 = vlaneseq
    %v2731 = vshrl.u32 %v2730, 7
    %v2732 = vsub.s32 3, %v2731
    %v2733 = vrot.slane %v288, %v2732
    %v2734 = vlaneseq
    %v2735 = vshrl.u32 %v2734, 7
    %v2736 = vsub.s32 4, %v2735
    %v2737 = vrot.slane %v288, %v2736
    %v2738 = vlaneseq
    %v2739 = vshrl.u32 %v2738, 7
    %v2740 = vsub.s32 5, %v2739
    %v2741 = vrot.slane %v288, %v2740
    %v2742 = vlaneseq
    %v2743 = vshrl.u32 %v2742, 7
    %v2744 = vsub.s32 6, %v2743
    %v2745 = vrot.slane %v288, %v2744
    %v2746 = vlaneseq
    %v2747 = vshrl.u32 %v2746, 7
    %v2748 = vsub.s32 7, %v2747
    %v2749 = vrot.slane %v288, %v2748
    %v2750 = vlaneseq
    %v2751 = vshrl.u32 %v2750, 7
    %v2752 = vsub.s32 0, %v2751
    %v2753 = vrot.slane %v289, %v2752
    %v2754 = vlaneseq
    %v2755 = vshrl.u32 %v2754, 7
    %v2756 = vsub.s32 1, %v2755
    %v2757 = vrot.slane %v289, %v2756
    %v2758 = vlaneseq
    %v2759 = vshrl.u32 %v2758, 7
    %v2760 = vsub.s32 2, %v2759
    %v2761 = vrot.slane %v289, %v2760
    %v2762 = vlaneseq
    %v2763 = vshrl.u32 %v2762, 7
    %v2764 = vsub.s32 3, %v2763
    %v2765 = vrot.slane %v289, %v2764
    %v2766 = vlaneseq
    %v2767 = vshrl.u32 %v2766, 7
    %v2768 = vsub.s32 4, %v2767
    %v2769 = vrot.slane %v289, %v2768
    %v2770 = vlaneseq
    %v2771 = vshrl.u32 %v2770, 7
    %v2772 = vsub.s32 5, %v2771
    %v2773 = vrot.slane %v289, %v2772
    %v2774 = vlaneseq
    %v2775 = vshrl.u32 %v2774, 7
    %v2776 = vsub.s32 6, %v2775
    %v2777 = vrot.slane %v289, %v2776
    %v2778 = vlaneseq
    %v2779 = vshrl.u32 %v2778, 7
    %v2780 = vsub.s32 7, %v2779
    %v2781 = vrot.slane %v289, %v2780
    %v2806 = vadd.f32 %v2226, %v2689
    %v2807 = vadd.f32 %v2228, %v2693
    %v2808 = vadd.f32 %v2267, %v2697
    %v2809 = vadd.f32 %v2269, %v2701
    %v2810 = vadd.f32 %v2308, %v2705
    %v2811 = vadd.f32 %v2310, %v2709
    %v2812 = vadd.f32 %v2349, %v2713
    %v2813 = vadd.f32 %v2351, %v2717
    %v2814 = vadd.f32 %v2390, %v2721
    %v2815 = vadd.f32 %v2392, %v2725
    %v2816 = vadd.f32 %v2431, %v2729
    %v2817 = vadd.f32 %v2433, %v2733
    %v2818 = vadd.f32 %v2472, %v2737
    %v2819 = vadd.f32 %v2474, %v2741
    %v2820 = vadd.f32 %v2513, %v2745
    %v2821 = vadd.f32 %v2515, %v2749
    %v2822 = vadd.f32 %v2554, %v2753
    %v2823 = vadd.f32 %v2556, %v2757
    %v2824 = vadd.f32 %v2595, %v2761
    %v2825 = vadd.f32 %v2597, %v2765
    %v2826 = vadd.f32 %v2636, %v2769
    %v2827 = vadd.f32 %v2638, %v2773
    %v2828 = vadd.f32 %v2677, %v2777
    %v2829 = vadd.f32 %v2679, %v2781
    %v2830 = vtanh.pop %v2806
    %v2831 = vtanh.pop %v2807
    %v2832 = vtanh.pop %v2808
    %v2833 = vtanh.pop %v2809
    %v2834 = vtanh.pop %v2810
    %v2835 = vtanh.pop %v2811
    %v2836 = vtanh.pop %v2812
    %v2837 = vtanh.pop %v2813
    %v2838 = vtanh.pop %v2814
    %v2839 = vtanh.pop %v2815
    %v2840 = vtanh.pop %v2816
    %v2841 = vtanh.pop %v2817
    %v2842 = vtanh.pop %v2818
    %v2843 = vtanh.pop %v2819
    %v2844 = vtanh.pop %v2820
    %v2845 = vtanh.pop %v2821
    %v2846 = vtanh.pop %v2822
    %v2847 = vtanh.pop %v2823
    %v2848 = vtanh.pop %v2824
    %v2849 = vtanh.pop %v2825
    %v2850 = vtanh.pop %v2826
    %v2851 = vtanh.pop %v2827
    %v2852 = vtanh.pop %v2828
    %v2853 = vtanh.pop %v2829
    %v2864 = vcombine.low %v413, %v415
    %v2865 = vcombine.low %v484, %v486
    %v2867 = vunpack.c.l.s4 1983009808
    %v2868 = vunpack.c.0.s8 %v2867
    %v2869 = vlaneseq
    %v2870 = vshrl.u32 %v2869, 7
    %v2871 = vsub.s32 %v2868, %v2870
    %v2872 = vrot.slane %v2864, %v2871
    %v2874 = vunpack.c.l.s4 1983009808
    %v2875 = vunpack.c.0.s8 %v2874
    %v2876 = vlaneseq
    %v2877 = vshrl.u32 %v2876, 7
    %v2878 = vsub.s32 %v2875, %v2877
    %v2879 = vrot.slane %v2865, %v2878
    %v2880 = vcombine.low %v2872, %v2879
    %v2881 = vcombine.low %v555, %v557
    %v2882 = vcombine.low %v626, %v628
    %v2884 = vunpack.c.l.s4 1983009808
    %v2885 = vunpack.c.0.s8 %v2884
    %v2886 = vlaneseq
    %v2887 = vshrl.u32 %v2886, 7
    %v2888 = vsub.s32 %v2885, %v2887
    %v2889 = vrot.slane %v2881, %v2888
    %v2891 = vunpack.c.l.s4 1983009808
    %v2892 = vunpack.c.0.s8 %v2891
    %v2893 = vlaneseq
    %v2894 = vshrl.u32 %v2893, 7
    %v2895 = vsub.s32 %v2892, %v2894
    %v2896 = vrot.slane %v2882, %v2895
    %v2897 = vcombine.low %v2889, %v2896
    %v2898 = vcombine.low %v697, %v699
    %v2900 = vunpack.c.l.s4 1983009808
    %v2901 = vunpack.c.0.s8 %v2900
    %v2902 = vlaneseq
    %v2903 = vshrl.u32 %v2902, 7
    %v2904 = vsub.s32 %v2901, %v2903
    %v2905 = vrot.slane %v2898, %v2904
    %2909 = vst [vmem:[%s10] sm:$0xff] %v2880
    %2910 = vst [vmem:[%s10 + $0x8] sm:$0xff] %v2897
    %2911 = vst [vmem:[%s10 + $0x10] sm:$0xf] %v2905
    %v2912 = vpack.c.bf16 %v2830, %v2830
    %v2913 = vpack.c.bf16 %v2831, %v2831
    %v2914 = vpack.c.bf16 %v2832, %v2832
    %v2915 = vpack.c.bf16 %v2833, %v2833
    %v2916 = vpack.c.bf16 %v2834, %v2834
    %v2917 = vpack.c.bf16 %v2835, %v2835
    %v2918 = vpack.c.bf16 %v2836, %v2836
    %v2919 = vpack.c.bf16 %v2837, %v2837
    %v2920 = vpack.c.bf16 %v2838, %v2838
    %v2921 = vpack.c.bf16 %v2839, %v2839
    %v2922 = vpack.c.bf16 %v2840, %v2840
    %v2923 = vpack.c.bf16 %v2841, %v2841
    %v2924 = vpack.c.bf16 %v2842, %v2842
    %v2925 = vpack.c.bf16 %v2843, %v2843
    %v2926 = vpack.c.bf16 %v2844, %v2844
    %v2927 = vpack.c.bf16 %v2845, %v2845
    %v2928 = vpack.c.bf16 %v2846, %v2846
    %v2929 = vpack.c.bf16 %v2847, %v2847
    %v2930 = vpack.c.bf16 %v2848, %v2848
    %v2931 = vpack.c.bf16 %v2849, %v2849
    %v2932 = vpack.c.bf16 %v2850, %v2850
    %v2933 = vpack.c.bf16 %v2851, %v2851
    %v2934 = vpack.c.bf16 %v2852, %v2852
    %v2935 = vpack.c.bf16 %v2853, %v2853
    %v2936 = vld [vmem:[#allocation6] sm:$0xff]
    %v2937 = vld [vmem:[#allocation6 + $0x8] sm:$0xff]
    %v2938 = vld [vmem:[#allocation6 + $0x10] sm:$0xff]
    %v2939 = vld [vmem:[#allocation6 + $0x18] sm:$0xff]
    %v2940 = vld [vmem:[#allocation6 + $0x20] sm:$0xff]
    %v2941 = vld [vmem:[#allocation6 + $0x28] sm:$0xff]
    %v2942 = vld [vmem:[#allocation6 + $0x30] sm:$0xff]
    %v2943 = vld [vmem:[#allocation6 + $0x38] sm:$0xff]
    %v2944 = vld [vmem:[#allocation6 + $0x40] sm:$0xff]
    %v2945 = vld [vmem:[#allocation6 + $0x48] sm:$0xff]
    %v2946 = vld [vmem:[#allocation6 + $0x50] sm:$0xff]
    %v2947 = vld [vmem:[#allocation6 + $0x58] sm:$0xff]
    %v2948 = vld [vmem:[#allocation6 + $0x60] sm:$0xff]
    %v2949 = vld [vmem:[#allocation6 + $0x68] sm:$0xff]
    %v2950 = vld [vmem:[#allocation6 + $0x70] sm:$0xff]
    %v2951 = vld [vmem:[#allocation6 + $0x78] sm:$0xff]
    %v2952 = vld [vmem:[#allocation6 + $0x80] sm:$0xff]
    %v2953 = vld [vmem:[#allocation6 + $0x88] sm:$0xff]
    %v2954 = vld [vmem:[#allocation6 + $0x90] sm:$0xff]
    %v2955 = vld [vmem:[#allocation6 + $0x98] sm:$0xff]
    %v2956 = vld [vmem:[#allocation6 + $0xa0] sm:$0xff]
    %v2957 = vld [vmem:[#allocation6 + $0xa8] sm:$0xff]
    %v2958 = vld [vmem:[#allocation6 + $0xb0] sm:$0xff]
    %v2959 = vld [vmem:[#allocation6 + $0xb8] sm:$0xff]
    %v2960 = vld [vmem:[#allocation6 + $0xc0] sm:$0xff]
    %v2961 = vld [vmem:[#allocation6 + $0xc8] sm:$0xff]
    %v2962 = vld [vmem:[#allocation6 + $0xd0] sm:$0xff]
    %v2963 = vld [vmem:[#allocation6 + $0xd8] sm:$0xff]
    %v2964 = vld [vmem:[#allocation6 + $0xe0] sm:$0xff]
    %v2965 = vld [vmem:[#allocation6 + $0xe8] sm:$0xff]
    %v2966 = vld [vmem:[#allocation6 + $0xf0] sm:$0xff]
    %v2967 = vld [vmem:[#allocation6 + $0xf8] sm:$0xff]
    %v2968 = vld [vmem:[#allocation6 + $0x100] sm:$0xff]
    %v2969 = vld [vmem:[#allocation6 + $0x108] sm:$0xff]
    %v2970 = vld [vmem:[#allocation6 + $0x110] sm:$0xff]
    %v2971 = vld [vmem:[#allocation6 + $0x118] sm:$0xff]
    %v2972 = vld [vmem:[#allocation6 + $0x120] sm:$0xff]
    %v2973 = vld [vmem:[#allocation6 + $0x128] sm:$0xff]
    %v2974 = vld [vmem:[#allocation6 + $0x130] sm:$0xff]
    %v2975 = vld [vmem:[#allocation6 + $0x138] sm:$0xff]
    %v2976 = vld [vmem:[#allocation6 + $0x140] sm:$0xff]
    %v2977 = vld [vmem:[#allocation6 + $0x148] sm:$0xff]
    %v2978 = vld [vmem:[#allocation6 + $0x150] sm:$0xff]
    %v2979 = vld [vmem:[#allocation6 + $0x158] sm:$0xff]
    %v2980 = vld [vmem:[#allocation6 + $0x160] sm:$0xff]
    %v2981 = vld [vmem:[#allocation6 + $0x168] sm:$0xff]
    %v2982 = vld [vmem:[#allocation6 + $0x170] sm:$0xff]
    %v2983 = vld [vmem:[#allocation6 + $0x178] sm:$0xff]
    %v2984 = vld [vmem:[#allocation6 + $0x180] sm:$0xff]
    %v2985 = vld [vmem:[#allocation6 + $0x188] sm:$0xff]
    %v2986 = vld [vmem:[#allocation6 + $0x190] sm:$0xff]
    %v2987 = vld [vmem:[#allocation6 + $0x198] sm:$0xff]
    %v2988 = vld [vmem:[#allocation6 + $0x1a0] sm:$0xff]
    %v2989 = vld [vmem:[#allocation6 + $0x1a8] sm:$0xff]
    %v2990 = vld [vmem:[#allocation6 + $0x1b0] sm:$0xff]
    %v2991 = vld [vmem:[#allocation6 + $0x1b8] sm:$0xff]
    %v2992 = vld [vmem:[#allocation6 + $0x1c0] sm:$0xff]
    %v2993 = vld [vmem:[#allocation6 + $0x1c8] sm:$0xff]
    %v2994 = vld [vmem:[#allocation6 + $0x1d0] sm:$0xff]
    %v2995 = vld [vmem:[#allocation6 + $0x1d8] sm:$0xff]
    %v2996 = vld [vmem:[#allocation6 + $0x1e0] sm:$0xff]
    %v2997 = vld [vmem:[#allocation6 + $0x1e8] sm:$0xff]
    %v2998 = vld [vmem:[#allocation6 + $0x1f0] sm:$0xff]
    %v2999 = vld [vmem:[#allocation6 + $0x1f8] sm:$0xff]
    %v3000 = vld [vmem:[#allocation6 + $0x200] sm:$0xff]
    %v3001 = vld [vmem:[#allocation6 + $0x208] sm:$0xff]
    %v3002 = vld [vmem:[#allocation6 + $0x210] sm:$0xff]
    %v3003 = vld [vmem:[#allocation6 + $0x218] sm:$0xff]
    %v3004 = vld [vmem:[#allocation6 + $0x220] sm:$0xff]
    %v3005 = vld [vmem:[#allocation6 + $0x228] sm:$0xff]
    %v3006 = vld [vmem:[#allocation6 + $0x230] sm:$0xff]
    %v3007 = vld [vmem:[#allocation6 + $0x238] sm:$0xff]
    %v3008 = vld [vmem:[#allocation6 + $0x240] sm:$0xff]
    %v3009 = vld [vmem:[#allocation6 + $0x248] sm:$0xff]
    %v3010 = vld [vmem:[#allocation6 + $0x250] sm:$0xff]
    %v3011 = vld [vmem:[#allocation6 + $0x258] sm:$0xff]
    %v3012 = vld [vmem:[#allocation6 + $0x260] sm:$0xff]
    %v3013 = vld [vmem:[#allocation6 + $0x268] sm:$0xff]
    %v3014 = vld [vmem:[#allocation6 + $0x270] sm:$0xff]
    %v3015 = vld [vmem:[#allocation6 + $0x278] sm:$0xff]
    %v3016 = vld [vmem:[#allocation6 + $0x280] sm:$0xff]
    %v3017 = vld [vmem:[#allocation6 + $0x288] sm:$0xff]
    %v3018 = vld [vmem:[#allocation6 + $0x290] sm:$0xff]
    %v3019 = vld [vmem:[#allocation6 + $0x298] sm:$0xff]
    %v3020 = vld [vmem:[#allocation6 + $0x2a0] sm:$0xff]
    %v3021 = vld [vmem:[#allocation6 + $0x2a8] sm:$0xff]
    %v3022 = vld [vmem:[#allocation6 + $0x2b0] sm:$0xff]
    %v3023 = vld [vmem:[#allocation6 + $0x2b8] sm:$0xff]
    %v3024 = vld [vmem:[#allocation6 + $0x2c0] sm:$0xff]
    %v3025 = vld [vmem:[#allocation6 + $0x2c8] sm:$0xff]
    %v3026 = vld [vmem:[#allocation6 + $0x2d0] sm:$0xff]
    %v3027 = vld [vmem:[#allocation6 + $0x2d8] sm:$0xff]
    %v3028 = vld [vmem:[#allocation6 + $0x2e0] sm:$0xff]
    %v3029 = vld [vmem:[#allocation6 + $0x2e8] sm:$0xff]
    %v3030 = vld [vmem:[#allocation6 + $0x2f0] sm:$0xff]
    %v3031 = vld [vmem:[#allocation6 + $0x2f8] sm:$0xff]
    %v3032 = vld [vmem:[#allocation6 + $0x300] sm:$0xff]
    %v3033 = vld [vmem:[#allocation6 + $0x308] sm:$0xff]
    %v3034 = vld [vmem:[#allocation6 + $0x310] sm:$0xff]
    %v3035 = vld [vmem:[#allocation6 + $0x318] sm:$0xff]
    %v3036 = vld [vmem:[#allocation6 + $0x320] sm:$0xff]
    %v3037 = vld [vmem:[#allocation6 + $0x328] sm:$0xff]
    %v3038 = vld [vmem:[#allocation6 + $0x330] sm:$0xff]
    %v3039 = vld [vmem:[#allocation6 + $0x338] sm:$0xff]
    %v3040 = vld [vmem:[#allocation6 + $0x340] sm:$0xff]
    %v3041 = vld [vmem:[#allocation6 + $0x348] sm:$0xff]
    %v3042 = vld [vmem:[#allocation6 + $0x350] sm:$0xff]
    %v3043 = vld [vmem:[#allocation6 + $0x358] sm:$0xff]
    %v3044 = vld [vmem:[#allocation6 + $0x360] sm:$0xff]
    %v3045 = vld [vmem:[#allocation6 + $0x368] sm:$0xff]
    %v3046 = vld [vmem:[#allocation6 + $0x370] sm:$0xff]
    %v3047 = vld [vmem:[#allocation6 + $0x378] sm:$0xff]
    %v3048 = vld [vmem:[#allocation6 + $0x380] sm:$0xff]
    %v3049 = vld [vmem:[#allocation6 + $0x388] sm:$0xff]
    %v3050 = vld [vmem:[#allocation6 + $0x390] sm:$0xff]
    %v3051 = vld [vmem:[#allocation6 + $0x398] sm:$0xff]
    %v3052 = vld [vmem:[#allocation6 + $0x3a0] sm:$0xff]
    %v3053 = vld [vmem:[#allocation6 + $0x3a8] sm:$0xff]
    %v3054 = vld [vmem:[#allocation6 + $0x3b0] sm:$0xff]
    %v3055 = vld [vmem:[#allocation6 + $0x3b8] sm:$0xff]
    %v3056 = vld [vmem:[#allocation6 + $0x3c0] sm:$0xff]
    %v3057 = vld [vmem:[#allocation6 + $0x3c8] sm:$0xff]
    %v3058 = vld [vmem:[#allocation6 + $0x3d0] sm:$0xff]
    %v3059 = vld [vmem:[#allocation6 + $0x3d8] sm:$0xff]
    %v3060 = vld [vmem:[#allocation6 + $0x3e0] sm:$0xff]
    %v3061 = vld [vmem:[#allocation6 + $0x3e8] sm:$0xff]
    %v3062 = vld [vmem:[#allocation6 + $0x3f0] sm:$0xff]
    %v3063 = vld [vmem:[#allocation6 + $0x3f8] sm:$0xff]
    %v3192 = vunpack.c.l.b16 %v2936
    %v3193 = vunpack.c.h.b16 %v2936
    %v3194 = vunpack.c.l.b16 %v2937
    %v3195 = vunpack.c.h.b16 %v2937
    %v3196 = vunpack.c.l.b16 %v2938
    %v3197 = vunpack.c.h.b16 %v2938
    %v3198 = vunpack.c.l.b16 %v2939
    %v3199 = vunpack.c.h.b16 %v2939
    %v3200 = vunpack.c.l.b16 %v2940
    %v3201 = vunpack.c.h.b16 %v2940
    %v3202 = vunpack.c.l.b16 %v2941
    %v3203 = vunpack.c.h.b16 %v2941
    %v3204 = vunpack.c.l.b16 %v2942
    %v3205 = vunpack.c.h.b16 %v2942
    %v3206 = vunpack.c.l.b16 %v2943
    %v3207 = vunpack.c.h.b16 %v2943
    %v3208 = vunpack.c.l.b16 %v2944
    %v3209 = vunpack.c.h.b16 %v2944
    %v3210 = vunpack.c.l.b16 %v2945
    %v3211 = vunpack.c.h.b16 %v2945
    %v3212 = vunpack.c.l.b16 %v2946
    %v3213 = vunpack.c.h.b16 %v2946
    %v3214 = vunpack.c.l.b16 %v2947
    %v3215 = vunpack.c.h.b16 %v2947
    %v3216 = vunpack.c.l.b16 %v2948
    %v3217 = vunpack.c.h.b16 %v2948
    %v3218 = vunpack.c.l.b16 %v2949
    %v3219 = vunpack.c.h.b16 %v2949
    %v3220 = vunpack.c.l.b16 %v2950
    %v3221 = vunpack.c.h.b16 %v2950
    %v3222 = vunpack.c.l.b16 %v2951
    %v3223 = vunpack.c.h.b16 %v2951
    %v3224 = vunpack.c.l.b16 %v2952
    %v3225 = vunpack.c.h.b16 %v2952
    %v3226 = vunpack.c.l.b16 %v2953
    %v3227 = vunpack.c.h.b16 %v2953
    %v3228 = vunpack.c.l.b16 %v2954
    %v3229 = vunpack.c.h.b16 %v2954
    %v3230 = vunpack.c.l.b16 %v2955
    %v3231 = vunpack.c.h.b16 %v2955
    %v3232 = vunpack.c.l.b16 %v2956
    %v3233 = vunpack.c.h.b16 %v2956
    %v3234 = vunpack.c.l.b16 %v2957
    %v3235 = vunpack.c.h.b16 %v2957
    %v3236 = vunpack.c.l.b16 %v2958
    %v3237 = vunpack.c.h.b16 %v2958
    %v3238 = vunpack.c.l.b16 %v2959
    %v3239 = vunpack.c.h.b16 %v2959
    %v3240 = vunpack.c.l.b16 %v2960
    %v3241 = vunpack.c.h.b16 %v2960
    %v3242 = vunpack.c.l.b16 %v2961
    %v3243 = vunpack.c.h.b16 %v2961
    %v3244 = vunpack.c.l.b16 %v2962
    %v3245 = vunpack.c.h.b16 %v2962
    %v3246 = vunpack.c.l.b16 %v2963
    %v3247 = vunpack.c.h.b16 %v2963
    %v3248 = vunpack.c.l.b16 %v2964
    %v3249 = vunpack.c.h.b16 %v2964
    %v3250 = vunpack.c.l.b16 %v2965
    %v3251 = vunpack.c.h.b16 %v2965
    %v3252 = vunpack.c.l.b16 %v2966
    %v3253 = vunpack.c.h.b16 %v2966
    %v3254 = vunpack.c.l.b16 %v2967
    %v3255 = vunpack.c.h.b16 %v2967
    %v3256 = vunpack.c.l.b16 %v2968
    %v3257 = vunpack.c.h.b16 %v2968
    %v3258 = vunpack.c.l.b16 %v2969
    %v3259 = vunpack.c.h.b16 %v2969
    %v3260 = vunpack.c.l.b16 %v2970
    %v3261 = vunpack.c.h.b16 %v2970
    %v3262 = vunpack.c.l.b16 %v2971
    %v3263 = vunpack.c.h.b16 %v2971
    %v3264 = vunpack.c.l.b16 %v2972
    %v3265 = vunpack.c.h.b16 %v2972
    %v3266 = vunpack.c.l.b16 %v2973
    %v3267 = vunpack.c.h.b16 %v2973
    %v3268 = vunpack.c.l.b16 %v2974
    %v3269 = vunpack.c.h.b16 %v2974
    %v3270 = vunpack.c.l.b16 %v2975
    %v3271 = vunpack.c.h.b16 %v2975
    %v3272 = vunpack.c.l.b16 %v2976
    %v3273 = vunpack.c.h.b16 %v2976
    %v3274 = vunpack.c.l.b16 %v2977
    %v3275 = vunpack.c.h.b16 %v2977
    %v3276 = vunpack.c.l.b16 %v2978
    %v3277 = vunpack.c.h.b16 %v2978
    %v3278 = vunpack.c.l.b16 %v2979
    %v3279 = vunpack.c.h.b16 %v2979
    %v3280 = vunpack.c.l.b16 %v2980
    %v3281 = vunpack.c.h.b16 %v2980
    %v3282 = vunpack.c.l.b16 %v2981
    %v3283 = vunpack.c.h.b16 %v2981
    %v3284 = vunpack.c.l.b16 %v2982
    %v3285 = vunpack.c.h.b16 %v2982
    %v3286 = vunpack.c.l.b16 %v2983
    %v3287 = vunpack.c.h.b16 %v2983
    %v3288 = vunpack.c.l.b16 %v2984
    %v3289 = vunpack.c.h.b16 %v2984
    %v3290 = vunpack.c.l.b16 %v2985
    %v3291 = vunpack.c.h.b16 %v2985
    %v3292 = vunpack.c.l.b16 %v2986
    %v3293 = vunpack.c.h.b16 %v2986
    %v3294 = vunpack.c.l.b16 %v2987
    %v3295 = vunpack.c.h.b16 %v2987
    %v3296 = vunpack.c.l.b16 %v2988
    %v3297 = vunpack.c.h.b16 %v2988
    %v3298 = vunpack.c.l.b16 %v2989
    %v3299 = vunpack.c.h.b16 %v2989
    %v3300 = vunpack.c.l.b16 %v2990
    %v3301 = vunpack.c.h.b16 %v2990
    %v3302 = vunpack.c.l.b16 %v2991
    %v3303 = vunpack.c.h.b16 %v2991
    %v3304 = vunpack.c.l.b16 %v2992
    %v3305 = vunpack.c.h.b16 %v2992
    %v3306 = vunpack.c.l.b16 %v2993
    %v3307 = vunpack.c.h.b16 %v2993
    %v3308 = vunpack.c.l.b16 %v2994
    %v3309 = vunpack.c.h.b16 %v2994
    %v3310 = vunpack.c.l.b16 %v2995
    %v3311 = vunpack.c.h.b16 %v2995
    %v3312 = vunpack.c.l.b16 %v2996
    %v3313 = vunpack.c.h.b16 %v2996
    %v3314 = vunpack.c.l.b16 %v2997
    %v3315 = vunpack.c.h.b16 %v2997
    %v3316 = vunpack.c.l.b16 %v2998
    %v3317 = vunpack.c.h.b16 %v2998
    %v3318 = vunpack.c.l.b16 %v2999
    %v3319 = vunpack.c.h.b16 %v2999
    %v3320 = vunpack.c.l.b16 %v3000
    %v3321 = vunpack.c.h.b16 %v3000
    %v3322 = vunpack.c.l.b16 %v3001
    %v3323 = vunpack.c.h.b16 %v3001
    %v3324 = vunpack.c.l.b16 %v3002
    %v3325 = vunpack.c.h.b16 %v3002
    %v3326 = vunpack.c.l.b16 %v3003
    %v3327 = vunpack.c.h.b16 %v3003
    %v3328 = vunpack.c.l.b16 %v3004
    %v3329 = vunpack.c.h.b16 %v3004
    %v3330 = vunpack.c.l.b16 %v3005
    %v3331 = vunpack.c.h.b16 %v3005
    %v3332 = vunpack.c.l.b16 %v3006
    %v3333 = vunpack.c.h.b16 %v3006
    %v3334 = vunpack.c.l.b16 %v3007
    %v3335 = vunpack.c.h.b16 %v3007
    %v3336 = vunpack.c.l.b16 %v3008
    %v3337 = vunpack.c.h.b16 %v3008
    %v3338 = vunpack.c.l.b16 %v3009
    %v3339 = vunpack.c.h.b16 %v3009
    %v3340 = vunpack.c.l.b16 %v3010
    %v3341 = vunpack.c.h.b16 %v3010
    %v3342 = vunpack.c.l.b16 %v3011
    %v3343 = vunpack.c.h.b16 %v3011
    %v3344 = vunpack.c.l.b16 %v3012
    %v3345 = vunpack.c.h.b16 %v3012
    %v3346 = vunpack.c.l.b16 %v3013
    %v3347 = vunpack.c.h.b16 %v3013
    %v3348 = vunpack.c.l.b16 %v3014
    %v3349 = vunpack.c.h.b16 %v3014
    %v3350 = vunpack.c.l.b16 %v3015
    %v3351 = vunpack.c.h.b16 %v3015
    %v3352 = vunpack.c.l.b16 %v3016
    %v3353 = vunpack.c.h.b16 %v3016
    %v3354 = vunpack.c.l.b16 %v3017
    %v3355 = vunpack.c.h.b16 %v3017
    %v3356 = vunpack.c.l.b16 %v3018
    %v3357 = vunpack.c.h.b16 %v3018
    %v3358 = vunpack.c.l.b16 %v3019
    %v3359 = vunpack.c.h.b16 %v3019
    %v3360 = vunpack.c.l.b16 %v3020
    %v3361 = vunpack.c.h.b16 %v3020
    %v3362 = vunpack.c.l.b16 %v3021
    %v3363 = vunpack.c.h.b16 %v3021
    %v3364 = vunpack.c.l.b16 %v3022
    %v3365 = vunpack.c.h.b16 %v3022
    %v3366 = vunpack.c.l.b16 %v3023
    %v3367 = vunpack.c.h.b16 %v3023
    %v3368 = vunpack.c.l.b16 %v3024
    %v3369 = vunpack.c.h.b16 %v3024
    %v3370 = vunpack.c.l.b16 %v3025
    %v3371 = vunpack.c.h.b16 %v3025
    %v3372 = vunpack.c.l.b16 %v3026
    %v3373 = vunpack.c.h.b16 %v3026
    %v3374 = vunpack.c.l.b16 %v3027
    %v3375 = vunpack.c.h.b16 %v3027
    %v3376 = vunpack.c.l.b16 %v3028
    %v3377 = vunpack.c.h.b16 %v3028
    %v3378 = vunpack.c.l.b16 %v3029
    %v3379 = vunpack.c.h.b16 %v3029
    %v3380 = vunpack.c.l.b16 %v3030
    %v3381 = vunpack.c.h.b16 %v3030
    %v3382 = vunpack.c.l.b16 %v3031
    %v3383 = vunpack.c.h.b16 %v3031
    %v3384 = vunpack.c.l.b16 %v3032
    %v3385 = vunpack.c.h.b16 %v3032
    %v3386 = vunpack.c.l.b16 %v3033
    %v3387 = vunpack.c.h.b16 %v3033
    %v3388 = vunpack.c.l.b16 %v3034
    %v3389 = vunpack.c.h.b16 %v3034
    %v3390 = vunpack.c.l.b16 %v3035
    %v3391 = vunpack.c.h.b16 %v3035
    %v3392 = vunpack.c.l.b16 %v3036
    %v3393 = vunpack.c.h.b16 %v3036
    %v3394 = vunpack.c.l.b16 %v3037
    %v3395 = vunpack.c.h.b16 %v3037
    %v3396 = vunpack.c.l.b16 %v3038
    %v3397 = vunpack.c.h.b16 %v3038
    %v3398 = vunpack.c.l.b16 %v3039
    %v3399 = vunpack.c.h.b16 %v3039
    %v3400 = vunpack.c.l.b16 %v3040
    %v3401 = vunpack.c.h.b16 %v3040
    %v3402 = vunpack.c.l.b16 %v3041
    %v3403 = vunpack.c.h.b16 %v3041
    %v3404 = vunpack.c.l.b16 %v3042
    %v3405 = vunpack.c.h.b16 %v3042
    %v3406 = vunpack.c.l.b16 %v3043
    %v3407 = vunpack.c.h.b16 %v3043
    %v3408 = vunpack.c.l.b16 %v3044
    %v3409 = vunpack.c.h.b16 %v3044
    %v3410 = vunpack.c.l.b16 %v3045
    %v3411 = vunpack.c.h.b16 %v3045
    %v3412 = vunpack.c.l.b16 %v3046
    %v3413 = vunpack.c.h.b16 %v3046
    %v3414 = vunpack.c.l.b16 %v3047
    %v3415 = vunpack.c.h.b16 %v3047
    %v3416 = vunpack.c.l.b16 %v3048
    %v3417 = vunpack.c.h.b16 %v3048
    %v3418 = vunpack.c.l.b16 %v3049
    %v3419 = vunpack.c.h.b16 %v3049
    %v3420 = vunpack.c.l.b16 %v3050
    %v3421 = vunpack.c.h.b16 %v3050
    %v3422 = vunpack.c.l.b16 %v3051
    %v3423 = vunpack.c.h.b16 %v3051
    %v3424 = vunpack.c.l.b16 %v3052
    %v3425 = vunpack.c.h.b16 %v3052
    %v3426 = vunpack.c.l.b16 %v3053
    %v3427 = vunpack.c.h.b16 %v3053
    %v3428 = vunpack.c.l.b16 %v3054
    %v3429 = vunpack.c.h.b16 %v3054
    %v3430 = vunpack.c.l.b16 %v3055
    %v3431 = vunpack.c.h.b16 %v3055
    %v3432 = vunpack.c.l.b16 %v3056
    %v3433 = vunpack.c.h.b16 %v3056
    %v3434 = vunpack.c.l.b16 %v3057
    %v3435 = vunpack.c.h.b16 %v3057
    %v3436 = vunpack.c.l.b16 %v3058
    %v3437 = vunpack.c.h.b16 %v3058
    %v3438 = vunpack.c.l.b16 %v3059
    %v3439 = vunpack.c.h.b16 %v3059
    %v3440 = vunpack.c.l.b16 %v3060
    %v3441 = vunpack.c.h.b16 %v3060
    %v3442 = vunpack.c.l.b16 %v3061
    %v3443 = vunpack.c.h.b16 %v3061
    %v3444 = vunpack.c.l.b16 %v3062
    %v3445 = vunpack.c.h.b16 %v3062
    %v3446 = vunpack.c.l.b16 %v3063
    %v3447 = vunpack.c.h.b16 %v3063
    %v3448 = vpack.c.b16 %v3194, %v3192
    %v3449 = vpack.c.b16 %v3195, %v3193
    %v3450 = vpack.c.b16 %v3198, %v3196
    %v3451 = vpack.c.b16 %v3199, %v3197
    %v3452 = vpack.c.b16 %v3202, %v3200
    %v3453 = vpack.c.b16 %v3203, %v3201
    %v3454 = vpack.c.b16 %v3206, %v3204
    %v3455 = vpack.c.b16 %v3207, %v3205
    %v3456 = vpack.c.b16 %v3210, %v3208
    %v3457 = vpack.c.b16 %v3211, %v3209
    %v3458 = vpack.c.b16 %v3214, %v3212
    %v3459 = vpack.c.b16 %v3215, %v3213
    %v3460 = vpack.c.b16 %v3218, %v3216
    %v3461 = vpack.c.b16 %v3219, %v3217
    %v3462 = vpack.c.b16 %v3222, %v3220
    %v3463 = vpack.c.b16 %v3223, %v3221
    %v3464 = vpack.c.b16 %v3226, %v3224
    %v3465 = vpack.c.b16 %v3227, %v3225
    %v3466 = vpack.c.b16 %v3230, %v3228
    %v3467 = vpack.c.b16 %v3231, %v3229
    %v3468 = vpack.c.b16 %v3234, %v3232
    %v3469 = vpack.c.b16 %v3235, %v3233
    %v3470 = vpack.c.b16 %v3238, %v3236
    %v3471 = vpack.c.b16 %v3239, %v3237
    %v3472 = vpack.c.b16 %v3242, %v3240
    %v3473 = vpack.c.b16 %v3243, %v3241
    %v3474 = vpack.c.b16 %v3246, %v3244
    %v3475 = vpack.c.b16 %v3247, %v3245
    %v3476 = vpack.c.b16 %v3250, %v3248
    %v3477 = vpack.c.b16 %v3251, %v3249
    %v3478 = vpack.c.b16 %v3254, %v3252
    %v3479 = vpack.c.b16 %v3255, %v3253
    %v3480 = vpack.c.b16 %v3258, %v3256
    %v3481 = vpack.c.b16 %v3259, %v3257
    %v3482 = vpack.c.b16 %v3262, %v3260
    %v3483 = vpack.c.b16 %v3263, %v3261
    %v3484 = vpack.c.b16 %v3266, %v3264
    %v3485 = vpack.c.b16 %v3267, %v3265
    %v3486 = vpack.c.b16 %v3270, %v3268
    %v3487 = vpack.c.b16 %v3271, %v3269
    %v3488 = vpack.c.b16 %v3274, %v3272
    %v3489 = vpack.c.b16 %v3275, %v3273
    %v3490 = vpack.c.b16 %v3278, %v3276
    %v3491 = vpack.c.b16 %v3279, %v3277
    %v3492 = vpack.c.b16 %v3282, %v3280
    %v3493 = vpack.c.b16 %v3283, %v3281
    %v3494 = vpack.c.b16 %v3286, %v3284
    %v3495 = vpack.c.b16 %v3287, %v3285
    %v3496 = vpack.c.b16 %v3290, %v3288
    %v3497 = vpack.c.b16 %v3291, %v3289
    %v3498 = vpack.c.b16 %v3294, %v3292
    %v3499 = vpack.c.b16 %v3295, %v3293
    %v3500 = vpack.c.b16 %v3298, %v3296
    %v3501 = vpack.c.b16 %v3299, %v3297
    %v3502 = vpack.c.b16 %v3302, %v3300
    %v3503 = vpack.c.b16 %v3303, %v3301
    %v3504 = vpack.c.b16 %v3306, %v3304
    %v3505 = vpack.c.b16 %v3307, %v3305
    %v3506 = vpack.c.b16 %v3310, %v3308
    %v3507 = vpack.c.b16 %v3311, %v3309
    %v3508 = vpack.c.b16 %v3314, %v3312
    %v3509 = vpack.c.b16 %v3315, %v3313
    %v3510 = vpack.c.b16 %v3318, %v3316
    %v3511 = vpack.c.b16 %v3319, %v3317
    %v3512 = vpack.c.b16 %v3322, %v3320
    %v3513 = vpack.c.b16 %v3323, %v3321
    %v3514 = vpack.c.b16 %v3326, %v3324
    %v3515 = vpack.c.b16 %v3327, %v3325
    %v3516 = vpack.c.b16 %v3330, %v3328
    %v3517 = vpack.c.b16 %v3331, %v3329
    %v3518 = vpack.c.b16 %v3334, %v3332
    %v3519 = vpack.c.b16 %v3335, %v3333
    %v3520 = vpack.c.b16 %v3338, %v3336
    %v3521 = vpack.c.b16 %v3339, %v3337
    %v3522 = vpack.c.b16 %v3342, %v3340
    %v3523 = vpack.c.b16 %v3343, %v3341
    %v3524 = vpack.c.b16 %v3346, %v3344
    %v3525 = vpack.c.b16 %v3347, %v3345
    %v3526 = vpack.c.b16 %v3350, %v3348
    %v3527 = vpack.c.b16 %v3351, %v3349
    %v3528 = vpack.c.b16 %v3354, %v3352
    %v3529 = vpack.c.b16 %v3355, %v3353
    %v3530 = vpack.c.b16 %v3358, %v3356
    %v3531 = vpack.c.b16 %v3359, %v3357
    %v3532 = vpack.c.b16 %v3362, %v3360
    %v3533 = vpack.c.b16 %v3363, %v3361
    %v3534 = vpack.c.b16 %v3366, %v3364
    %v3535 = vpack.c.b16 %v3367, %v3365
    %v3536 = vpack.c.b16 %v3370, %v3368
    %v3537 = vpack.c.b16 %v3371, %v3369
    %v3538 = vpack.c.b16 %v3374, %v3372
    %v3539 = vpack.c.b16 %v3375, %v3373
    %v3540 = vpack.c.b16 %v3378, %v3376
    %v3541 = vpack.c.b16 %v3379, %v3377
    %v3542 = vpack.c.b16 %v3382, %v3380
    %v3543 = vpack.c.b16 %v3383, %v3381
    %v3544 = vpack.c.b16 %v3386, %v3384
    %v3545 = vpack.c.b16 %v3387, %v3385
    %v3546 = vpack.c.b16 %v3390, %v3388
    %v3547 = vpack.c.b16 %v3391, %v3389
    %v3548 = vpack.c.b16 %v3394, %v3392
    %v3549 = vpack.c.b16 %v3395, %v3393
    %v3550 = vpack.c.b16 %v3398, %v3396
    %v3551 = vpack.c.b16 %v3399, %v3397
    %v3552 = vpack.c.b16 %v3402, %v3400
    %v3553 = vpack.c.b16 %v3403, %v3401
    %v3554 = vpack.c.b16 %v3406, %v3404
    %v3555 = vpack.c.b16 %v3407, %v3405
    %v3556 = vpack.c.b16 %v3410, %v3408
    %v3557 = vpack.c.b16 %v3411, %v3409
    %v3558 = vpack.c.b16 %v3414, %v3412
    %v3559 = vpack.c.b16 %v3415, %v3413
    %v3560 = vpack.c.b16 %v3418, %v3416
    %v3561 = vpack.c.b16 %v3419, %v3417
    %v3562 = vpack.c.b16 %v3422, %v3420
    %v3563 = vpack.c.b16 %v3423, %v3421
    %v3564 = vpack.c.b16 %v3426, %v3424
    %v3565 = vpack.c.b16 %v3427, %v3425
    %v3566 = vpack.c.b16 %v3430, %v3428
    %v3567 = vpack.c.b16 %v3431, %v3429
    %v3568 = vpack.c.b16 %v3434, %v3432
    %v3569 = vpack.c.b16 %v3435, %v3433
    %v3570 = vpack.c.b16 %v3438, %v3436
    %v3571 = vpack.c.b16 %v3439, %v3437
    %v3572 = vpack.c.b16 %v3442, %v3440
    %v3573 = vpack.c.b16 %v3443, %v3441
    %v3574 = vpack.c.b16 %v3446, %v3444
    %v3575 = vpack.c.b16 %v3447, %v3445
    %3704 = vmatprep.subr.bf16.mxu0 %v3449
    %3705 = vmatpush1.bf16.msra.mxu0 %v3448
    %3706 = vmatprep.subr.bf16.mxu0 %v3451
    %3707 = vmatpush1.bf16.msra.mxu0 %v3450
    %3708 = vmatprep.subr.bf16.mxu0 %v3453
    %3709 = vmatpush1.bf16.msra.mxu0 %v3452
    %3710 = vmatprep.subr.bf16.mxu0 %v3455
    %3711 = vmatpush1.bf16.msra.mxu0 %v3454
    %3712 = vmatprep.subr.bf16.mxu0 %v3457
    %3713 = vmatpush1.bf16.msra.mxu0 %v3456
    %3714 = vmatprep.subr.bf16.mxu0 %v3459
    %3715 = vmatpush1.bf16.msra.mxu0 %v3458
    %3716 = vmatprep.subr.bf16.mxu0 %v3461
    %3717 = vmatpush1.bf16.msra.mxu0 %v3460
    %3718 = vmatprep.subr.bf16.mxu0 %v3463
    %3719 = vmatpush1.bf16.msra.mxu0 %v3462
    %3720 = vmatprep.subr.bf16.mxu0 %v3465
    %3721 = vmatpush1.bf16.msra.mxu0 %v3464
    %3722 = vmatprep.subr.bf16.mxu0 %v3467
    %3723 = vmatpush1.bf16.msra.mxu0 %v3466
    %3724 = vmatprep.subr.bf16.mxu0 %v3469
    %3725 = vmatpush1.bf16.msra.mxu0 %v3468
    %3726 = vmatprep.subr.bf16.mxu0 %v3471
    %3727 = vmatpush1.bf16.msra.mxu0 %v3470
    %3728 = vmatprep.subr.bf16.mxu0 %v3473
    %3729 = vmatpush1.bf16.msra.mxu0 %v3472
    %3730 = vmatprep.subr.bf16.mxu0 %v3475
    %3731 = vmatpush1.bf16.msra.mxu0 %v3474
    %3732 = vmatprep.subr.bf16.mxu0 %v3477
    %3733 = vmatpush1.bf16.msra.mxu0 %v3476
    %3734 = vmatprep.subr.bf16.mxu0 %v3479
    %3735 = vmatpush1.bf16.msra.mxu0 %v3478
    %3736 = vmatprep.mubr.bf16.mxu0 %v2913
    %3737 = vmatmul.mubr.bf16.gmra.mrb[0].mxu0 %v2912
    %v3738 = vpop.f32.mrb[0].mxu0
    %v3739 = vadd.f32 0.0, %v3738
    %v3740 = vpop.f32.mrb[0].mxu0
    %v3741 = vadd.f32 0.0, %v3740
    %v3742 = vpop.f32.mrb[0].mxu0
    %v3743 = vpop.f32.mrb[0].mxu0
    %3744 = vdwg.mxu0
    %3745 = vmatprep.subr.bf16.mxu0 %v3481
    %3746 = vmatpush1.bf16.msra.mxu0 %v3480
    %3747 = vmatprep.subr.bf16.mxu0 %v3483
    %3748 = vmatpush1.bf16.msra.mxu0 %v3482
    %3749 = vmatprep.subr.bf16.mxu0 %v3485
    %3750 = vmatpush1.bf16.msra.mxu0 %v3484
    %3751 = vmatprep.subr.bf16.mxu0 %v3487
    %3752 = vmatpush1.bf16.msra.mxu0 %v3486
    %3753 = vmatprep.subr.bf16.mxu0 %v3489
    %3754 = vmatpush1.bf16.msra.mxu0 %v3488
    %3755 = vmatprep.subr.bf16.mxu0 %v3491
    %3756 = vmatpush1.bf16.msra.mxu0 %v3490
    %3757 = vmatprep.subr.bf16.mxu0 %v3493
    %3758 = vmatpush1.bf16.msra.mxu0 %v3492
    %3759 = vmatprep.subr.bf16.mxu0 %v3495
    %3760 = vmatpush1.bf16.msra.mxu0 %v3494
    %3761 = vmatprep.subr.bf16.mxu0 %v3497
    %3762 = vmatpush1.bf16.msra.mxu0 %v3496
    %3763 = vmatprep.subr.bf16.mxu0 %v3499
    %3764 = vmatpush1.bf16.msra.mxu0 %v3498
    %3765 = vmatprep.subr.bf16.mxu0 %v3501
    %3766 = vmatpush1.bf16.msra.mxu0 %v3500
    %3767 = vmatprep.subr.bf16.mxu0 %v3503
    %3768 = vmatpush1.bf16.msra.mxu0 %v3502
    %3769 = vmatprep.subr.bf16.mxu0 %v3505
    %3770 = vmatpush1.bf16.msra.mxu0 %v3504
    %3771 = vmatprep.subr.bf16.mxu0 %v3507
    %3772 = vmatpush1.bf16.msra.mxu0 %v3506
    %3773 = vmatprep.subr.bf16.mxu0 %v3509
    %3774 = vmatpush1.bf16.msra.mxu0 %v3508
    %3775 = vmatprep.subr.bf16.mxu0 %v3511
    %3776 = vmatpush1.bf16.msra.mxu0 %v3510
    %3777 = vmatprep.mubr.bf16.mxu0 %v2915
    %3778 = vmatmul.mubr.bf16.gmra.mrb[0].mxu0 %v2914
    %v3779 = vpop.f32.mrb[0].mxu0
    %v3780 = vadd.f32 %v3739, %v3779
    %v3781 = vpop.f32.mrb[0].mxu0
    %v3782 = vadd.f32 %v3741, %v3781
    %v3783 = vpop.f32.mrb[0].mxu0
    %v3784 = vpop.f32.mrb[0].mxu0
    %3785 = vdwg.mxu0
    %3786 = vmatprep.subr.bf16.mxu0 %v3513
    %3787 = vmatpush1.bf16.msra.mxu0 %v3512
    %3788 = vmatprep.subr.bf16.mxu0 %v3515
    %3789 = vmatpush1.bf16.msra.mxu0 %v3514
    %3790 = vmatprep.subr.bf16.mxu0 %v3517
    %3791 = vmatpush1.bf16.msra.mxu0 %v3516
    %3792 = vmatprep.subr.bf16.mxu0 %v3519
    %3793 = vmatpush1.bf16.msra.mxu0 %v3518
    %3794 = vmatprep.subr.bf16.mxu0 %v3521
    %3795 = vmatpush1.bf16.msra.mxu0 %v3520
    %3796 = vmatprep.subr.bf16.mxu0 %v3523
    %3797 = vmatpush1.bf16.msra.mxu0 %v3522
    %3798 = vmatprep.subr.bf16.mxu0 %v3525
    %3799 = vmatpush1.bf16.msra.mxu0 %v3524
    %3800 = vmatprep.subr.bf16.mxu0 %v3527
    %3801 = vmatpush1.bf16.msra.mxu0 %v3526
    %3802 = vmatprep.subr.bf16.mxu0 %v3529
    %3803 = vmatpush1.bf16.msra.mxu0 %v3528
    %3804 = vmatprep.subr.bf16.mxu0 %v3531
    %3805 = vmatpush1.bf16.msra.mxu0 %v3530
    %3806 = vmatprep.subr.bf16.mxu0 %v3533
    %3807 = vmatpush1.bf16.msra.mxu0 %v3532
    %3808 = vmatprep.subr.bf16.mxu0 %v3535
    %3809 = vmatpush1.bf16.msra.mxu0 %v3534
    %3810 = vmatprep.subr.bf16.mxu0 %v3537
    %3811 = vmatpush1.bf16.msra.mxu0 %v3536
    %3812 = vmatprep.subr.bf16.mxu0 %v3539
    %3813 = vmatpush1.bf16.msra.mxu0 %v3538
    %3814 = vmatprep.subr.bf16.mxu0 %v3541
    %3815 = vmatpush1.bf16.msra.mxu0 %v3540
    %3816 = vmatprep.subr.bf16.mxu0 %v3543
    %3817 = vmatpush1.bf16.msra.mxu0 %v3542
    %3818 = vmatprep.mubr.bf16.mxu0 %v2917
    %3819 = vmatmul.mubr.bf16.gmra.mrb[0].mxu0 %v2916
    %v3820 = vpop.f32.mrb[0].mxu0
    %v3821 = vadd.f32 %v3780, %v3820
    %v3822 = vpop.f32.mrb[0].mxu0
    %v3823 = vadd.f32 %v3782, %v3822
    %v3824 = vpop.f32.mrb[0].mxu0
    %v3825 = vpop.f32.mrb[0].mxu0
    %3826 = vdwg.mxu0
    %3827 = vmatprep.subr.bf16.mxu0 %v3545
    %3828 = vmatpush1.bf16.msra.mxu0 %v3544
    %3829 = vmatprep.subr.bf16.mxu0 %v3547
    %3830 = vmatpush1.bf16.msra.mxu0 %v3546
    %3831 = vmatprep.subr.bf16.mxu0 %v3549
    %3832 = vmatpush1.bf16.msra.mxu0 %v3548
    %3833 = vmatprep.subr.bf16.mxu0 %v3551
    %3834 = vmatpush1.bf16.msra.mxu0 %v3550
    %3835 = vmatprep.subr.bf16.mxu0 %v3553
    %3836 = vmatpush1.bf16.msra.mxu0 %v3552
    %3837 = vmatprep.subr.bf16.mxu0 %v3555
    %3838 = vmatpush1.bf16.msra.mxu0 %v3554
    %3839 = vmatprep.subr.bf16.mxu0 %v3557
    %3840 = vmatpush1.bf16.msra.mxu0 %v3556
    %3841 = vmatprep.subr.bf16.mxu0 %v3559
    %3842 = vmatpush1.bf16.msra.mxu0 %v3558
    %3843 = vmatprep.subr.bf16.mxu0 %v3561
    %3844 = vmatpush1.bf16.msra.mxu0 %v3560
    %3845 = vmatprep.subr.bf16.mxu0 %v3563
    %3846 = vmatpush1.bf16.msra.mxu0 %v3562
    %3847 = vmatprep.subr.bf16.mxu0 %v3565
    %3848 = vmatpush1.bf16.msra.mxu0 %v3564
    %3849 = vmatprep.subr.bf16.mxu0 %v3567
    %3850 = vmatpush1.bf16.msra.mxu0 %v3566
    %3851 = vmatprep.subr.bf16.mxu0 %v3569
    %3852 = vmatpush1.bf16.msra.mxu0 %v3568
    %3853 = vmatprep.subr.bf16.mxu0 %v3571
    %3854 = vmatpush1.bf16.msra.mxu0 %v3570
    %3855 = vmatprep.subr.bf16.mxu0 %v3573
    %3856 = vmatpush1.bf16.msra.mxu0 %v3572
    %3857 = vmatprep.subr.bf16.mxu0 %v3575
    %3858 = vmatpush1.bf16.msra.mxu0 %v3574
    %3859 = vmatprep.mubr.bf16.mxu0 %v2919
    %3860 = vmatmul.mubr.bf16.gmra.mrb[0].mxu0 %v2918
    %v3861 = vpop.f32.mrb[0].mxu0
    %v3862 = vadd.f32 %v3821, %v3861
    %v3863 = vpop.f32.mrb[0].mxu0
    %v3864 = vadd.f32 %v3823, %v3863
    %v3865 = vpop.f32.mrb[0].mxu0
    %v3866 = vpop.f32.mrb[0].mxu0
    %3867 = vdwg.mxu0
    %v3870 = vcombine.low %v3862, %v3864
    %v3872 = vunpack.c.l.s4 1983009808
    %v3873 = vunpack.c.0.s8 %v3872
    %v3874 = vlaneseq
    %v3875 = vshrl.u32 %v3874, 7
    %v3876 = vsub.s32 %v3873, %v3875
    %v3877 = vrot.slane %v3870, %v3876
    %3879 = vst [vmem:[%s11] sm:$0xf] %v3877
    %v3880 = vld [vmem:[#allocation6] sm:$0xff]
    %v3881 = vld [vmem:[#allocation6 + $0x8] sm:$0xff]
    %v3882 = vld [vmem:[#allocation6 + $0x10] sm:$0xff]
    %v3883 = vld [vmem:[#allocation6 + $0x18] sm:$0xff]
    %v3884 = vld [vmem:[#allocation6 + $0x20] sm:$0xff]
    %v3885 = vld [vmem:[#allocation6 + $0x28] sm:$0xff]
    %v3886 = vld [vmem:[#allocation6 + $0x30] sm:$0xff]
    %v3887 = vld [vmem:[#allocation6 + $0x38] sm:$0xff]
    %v3888 = vld [vmem:[#allocation6 + $0x40] sm:$0xff]
    %v3889 = vld [vmem:[#allocation6 + $0x48] sm:$0xff]
    %v3890 = vld [vmem:[#allocation6 + $0x50] sm:$0xff]
    %v3891 = vld [vmem:[#allocation6 + $0x58] sm:$0xff]
    %v3892 = vld [vmem:[#allocation6 + $0x60] sm:$0xff]
    %v3893 = vld [vmem:[#allocation6 + $0x68] sm:$0xff]
    %v3894 = vld [vmem:[#allocation6 + $0x70] sm:$0xff]
    %v3895 = vld [vmem:[#allocation6 + $0x78] sm:$0xff]
    %v3896 = vld [vmem:[#allocation6 + $0x80] sm:$0xff]
    %v3897 = vld [vmem:[#allocation6 + $0x88] sm:$0xff]
    %v3898 = vld [vmem:[#allocation6 + $0x90] sm:$0xff]
    %v3899 = vld [vmem:[#allocation6 + $0x98] sm:$0xff]
    %v3900 = vld [vmem:[#allocation6 + $0xa0] sm:$0xff]
    %v3901 = vld [vmem:[#allocation6 + $0xa8] sm:$0xff]
    %v3902 = vld [vmem:[#allocation6 + $0xb0] sm:$0xff]
    %v3903 = vld [vmem:[#allocation6 + $0xb8] sm:$0xff]
    %v3904 = vld [vmem:[#allocation6 + $0xc0] sm:$0xff]
    %v3905 = vld [vmem:[#allocation6 + $0xc8] sm:$0xff]
    %v3906 = vld [vmem:[#allocation6 + $0xd0] sm:$0xff]
    %v3907 = vld [vmem:[#allocation6 + $0xd8] sm:$0xff]
    %v3908 = vld [vmem:[#allocation6 + $0xe0] sm:$0xff]
    %v3909 = vld [vmem:[#allocation6 + $0xe8] sm:$0xff]
    %v3910 = vld [vmem:[#allocation6 + $0xf0] sm:$0xff]
    %v3911 = vld [vmem:[#allocation6 + $0xf8] sm:$0xff]
    %v3912 = vld [vmem:[#allocation6 + $0x100] sm:$0xff]
    %v3913 = vld [vmem:[#allocation6 + $0x108] sm:$0xff]
    %v3914 = vld [vmem:[#allocation6 + $0x110] sm:$0xff]
    %v3915 = vld [vmem:[#allocation6 + $0x118] sm:$0xff]
    %v3916 = vld [vmem:[#allocation6 + $0x120] sm:$0xff]
    %v3917 = vld [vmem:[#allocation6 + $0x128] sm:$0xff]
    %v3918 = vld [vmem:[#allocation6 + $0x130] sm:$0xff]
    %v3919 = vld [vmem:[#allocation6 + $0x138] sm:$0xff]
    %v3920 = vld [vmem:[#allocation6 + $0x140] sm:$0xff]
    %v3921 = vld [vmem:[#allocation6 + $0x148] sm:$0xff]
    %v3922 = vld [vmem:[#allocation6 + $0x150] sm:$0xff]
    %v3923 = vld [vmem:[#allocation6 + $0x158] sm:$0xff]
    %v3924 = vld [vmem:[#allocation6 + $0x160] sm:$0xff]
    %v3925 = vld [vmem:[#allocation6 + $0x168] sm:$0xff]
    %v3926 = vld [vmem:[#allocation6 + $0x170] sm:$0xff]
    %v3927 = vld [vmem:[#allocation6 + $0x178] sm:$0xff]
    %v3928 = vld [vmem:[#allocation6 + $0x180] sm:$0xff]
    %v3929 = vld [vmem:[#allocation6 + $0x188] sm:$0xff]
    %v3930 = vld [vmem:[#allocation6 + $0x190] sm:$0xff]
    %v3931 = vld [vmem:[#allocation6 + $0x198] sm:$0xff]
    %v3932 = vld [vmem:[#allocation6 + $0x1a0] sm:$0xff]
    %v3933 = vld [vmem:[#allocation6 + $0x1a8] sm:$0xff]
    %v3934 = vld [vmem:[#allocation6 + $0x1b0] sm:$0xff]
    %v3935 = vld [vmem:[#allocation6 + $0x1b8] sm:$0xff]
    %v3936 = vld [vmem:[#allocation6 + $0x1c0] sm:$0xff]
    %v3937 = vld [vmem:[#allocation6 + $0x1c8] sm:$0xff]
    %v3938 = vld [vmem:[#allocation6 + $0x1d0] sm:$0xff]
    %v3939 = vld [vmem:[#allocation6 + $0x1d8] sm:$0xff]
    %v3940 = vld [vmem:[#allocation6 + $0x1e0] sm:$0xff]
    %v3941 = vld [vmem:[#allocation6 + $0x1e8] sm:$0xff]
    %v3942 = vld [vmem:[#allocation6 + $0x1f0] sm:$0xff]
    %v3943 = vld [vmem:[#allocation6 + $0x1f8] sm:$0xff]
    %v3944 = vld [vmem:[#allocation6 + $0x200] sm:$0xff]
    %v3945 = vld [vmem:[#allocation6 + $0x208] sm:$0xff]
    %v3946 = vld [vmem:[#allocation6 + $0x210] sm:$0xff]
    %v3947 = vld [vmem:[#allocation6 + $0x218] sm:$0xff]
    %v3948 = vld [vmem:[#allocation6 + $0x220] sm:$0xff]
    %v3949 = vld [vmem:[#allocation6 + $0x228] sm:$0xff]
    %v3950 = vld [vmem:[#allocation6 + $0x230] sm:$0xff]
    %v3951 = vld [vmem:[#allocation6 + $0x238] sm:$0xff]
    %v3952 = vld [vmem:[#allocation6 + $0x240] sm:$0xff]
    %v3953 = vld [vmem:[#allocation6 + $0x248] sm:$0xff]
    %v3954 = vld [vmem:[#allocation6 + $0x250] sm:$0xff]
    %v3955 = vld [vmem:[#allocation6 + $0x258] sm:$0xff]
    %v3956 = vld [vmem:[#allocation6 + $0x260] sm:$0xff]
    %v3957 = vld [vmem:[#allocation6 + $0x268] sm:$0xff]
    %v3958 = vld [vmem:[#allocation6 + $0x270] sm:$0xff]
    %v3959 = vld [vmem:[#allocation6 + $0x278] sm:$0xff]
    %v3960 = vld [vmem:[#allocation6 + $0x280] sm:$0xff]
    %v3961 = vld [vmem:[#allocation6 + $0x288] sm:$0xff]
    %v3962 = vld [vmem:[#allocation6 + $0x290] sm:$0xff]
    %v3963 = vld [vmem:[#allocation6 + $0x298] sm:$0xff]
    %v3964 = vld [vmem:[#allocation6 + $0x2a0] sm:$0xff]
    %v3965 = vld [vmem:[#allocation6 + $0x2a8] sm:$0xff]
    %v3966 = vld [vmem:[#allocation6 + $0x2b0] sm:$0xff]
    %v3967 = vld [vmem:[#allocation6 + $0x2b8] sm:$0xff]
    %v3968 = vld [vmem:[#allocation6 + $0x2c0] sm:$0xff]
    %v3969 = vld [vmem:[#allocation6 + $0x2c8] sm:$0xff]
    %v3970 = vld [vmem:[#allocation6 + $0x2d0] sm:$0xff]
    %v3971 = vld [vmem:[#allocation6 + $0x2d8] sm:$0xff]
    %v3972 = vld [vmem:[#allocation6 + $0x2e0] sm:$0xff]
    %v3973 = vld [vmem:[#allocation6 + $0x2e8] sm:$0xff]
    %v3974 = vld [vmem:[#allocation6 + $0x2f0] sm:$0xff]
    %v3975 = vld [vmem:[#allocation6 + $0x2f8] sm:$0xff]
    %v3976 = vld [vmem:[#allocation6 + $0x300] sm:$0xff]
    %v3977 = vld [vmem:[#allocation6 + $0x308] sm:$0xff]
    %v3978 = vld [vmem:[#allocation6 + $0x310] sm:$0xff]
    %v3979 = vld [vmem:[#allocation6 + $0x318] sm:$0xff]
    %v3980 = vld [vmem:[#allocation6 + $0x320] sm:$0xff]
    %v3981 = vld [vmem:[#allocation6 + $0x328] sm:$0xff]
    %v3982 = vld [vmem:[#allocation6 + $0x330] sm:$0xff]
    %v3983 = vld [vmem:[#allocation6 + $0x338] sm:$0xff]
    %v3984 = vld [vmem:[#allocation6 + $0x340] sm:$0xff]
    %v3985 = vld [vmem:[#allocation6 + $0x348] sm:$0xff]
    %v3986 = vld [vmem:[#allocation6 + $0x350] sm:$0xff]
    %v3987 = vld [vmem:[#allocation6 + $0x358] sm:$0xff]
    %v3988 = vld [vmem:[#allocation6 + $0x360] sm:$0xff]
    %v3989 = vld [vmem:[#allocation6 + $0x368] sm:$0xff]
    %v3990 = vld [vmem:[#allocation6 + $0x370] sm:$0xff]
    %v3991 = vld [vmem:[#allocation6 + $0x378] sm:$0xff]
    %v3992 = vld [vmem:[#allocation6 + $0x380] sm:$0xff]
    %v3993 = vld [vmem:[#allocation6 + $0x388] sm:$0xff]
    %v3994 = vld [vmem:[#allocation6 + $0x390] sm:$0xff]
    %v3995 = vld [vmem:[#allocation6 + $0x398] sm:$0xff]
    %v3996 = vld [vmem:[#allocation6 + $0x3a0] sm:$0xff]
    %v3997 = vld [vmem:[#allocation6 + $0x3a8] sm:$0xff]
    %v3998 = vld [vmem:[#allocation6 + $0x3b0] sm:$0xff]
    %v3999 = vld [vmem:[#allocation6 + $0x3b8] sm:$0xff]
    %v4000 = vld [vmem:[#allocation6 + $0x3c0] sm:$0xff]
    %v4001 = vld [vmem:[#allocation6 + $0x3c8] sm:$0xff]
    %v4002 = vld [vmem:[#allocation6 + $0x3d0] sm:$0xff]
    %v4003 = vld [vmem:[#allocation6 + $0x3d8] sm:$0xff]
    %v4004 = vld [vmem:[#allocation6 + $0x3e0] sm:$0xff]
    %v4005 = vld [vmem:[#allocation6 + $0x3e8] sm:$0xff]
    %v4006 = vld [vmem:[#allocation6 + $0x3f0] sm:$0xff]
    %v4007 = vld [vmem:[#allocation6 + $0x3f8] sm:$0xff]
    %v4136 = vunpack.c.l.b16 %v3880
    %v4137 = vunpack.c.h.b16 %v3880
    %v4138 = vunpack.c.l.b16 %v3881
    %v4139 = vunpack.c.h.b16 %v3881
    %v4140 = vunpack.c.l.b16 %v3882
    %v4141 = vunpack.c.h.b16 %v3882
    %v4142 = vunpack.c.l.b16 %v3883
    %v4143 = vunpack.c.h.b16 %v3883
    %v4144 = vunpack.c.l.b16 %v3884
    %v4145 = vunpack.c.h.b16 %v3884
    %v4146 = vunpack.c.l.b16 %v3885
    %v4147 = vunpack.c.h.b16 %v3885
    %v4148 = vunpack.c.l.b16 %v3886
    %v4149 = vunpack.c.h.b16 %v3886
    %v4150 = vunpack.c.l.b16 %v3887
    %v4151 = vunpack.c.h.b16 %v3887
    %v4152 = vunpack.c.l.b16 %v3888
    %v4153 = vunpack.c.h.b16 %v3888
    %v4154 = vunpack.c.l.b16 %v3889
    %v4155 = vunpack.c.h.b16 %v3889
    %v4156 = vunpack.c.l.b16 %v3890
    %v4157 = vunpack.c.h.b16 %v3890
    %v4158 = vunpack.c.l.b16 %v3891
    %v4159 = vunpack.c.h.b16 %v3891
    %v4160 = vunpack.c.l.b16 %v3892
    %v4161 = vunpack.c.h.b16 %v3892
    %v4162 = vunpack.c.l.b16 %v3893
    %v4163 = vunpack.c.h.b16 %v3893
    %v4164 = vunpack.c.l.b16 %v3894
    %v4165 = vunpack.c.h.b16 %v3894
    %v4166 = vunpack.c.l.b16 %v3895
    %v4167 = vunpack.c.h.b16 %v3895
    %v4168 = vunpack.c.l.b16 %v3896
    %v4169 = vunpack.c.h.b16 %v3896
    %v4170 = vunpack.c.l.b16 %v3897
    %v4171 = vunpack.c.h.b16 %v3897
    %v4172 = vunpack.c.l.b16 %v3898
    %v4173 = vunpack.c.h.b16 %v3898
    %v4174 = vunpack.c.l.b16 %v3899
    %v4175 = vunpack.c.h.b16 %v3899
    %v4176 = vunpack.c.l.b16 %v3900
    %v4177 = vunpack.c.h.b16 %v3900
    %v4178 = vunpack.c.l.b16 %v3901
    %v4179 = vunpack.c.h.b16 %v3901
    %v4180 = vunpack.c.l.b16 %v3902
    %v4181 = vunpack.c.h.b16 %v3902
    %v4182 = vunpack.c.l.b16 %v3903
    %v4183 = vunpack.c.h.b16 %v3903
    %v4184 = vunpack.c.l.b16 %v3904
    %v4185 = vunpack.c.h.b16 %v3904
    %v4186 = vunpack.c.l.b16 %v3905
    %v4187 = vunpack.c.h.b16 %v3905
    %v4188 = vunpack.c.l.b16 %v3906
    %v4189 = vunpack.c.h.b16 %v3906
    %v4190 = vunpack.c.l.b16 %v3907
    %v4191 = vunpack.c.h.b16 %v3907
    %v4192 = vunpack.c.l.b16 %v3908
    %v4193 = vunpack.c.h.b16 %v3908
    %v4194 = vunpack.c.l.b16 %v3909
    %v4195 = vunpack.c.h.b16 %v3909
    %v4196 = vunpack.c.l.b16 %v3910
    %v4197 = vunpack.c.h.b16 %v3910
    %v4198 = vunpack.c.l.b16 %v3911
    %v4199 = vunpack.c.h.b16 %v3911
    %v4200 = vunpack.c.l.b16 %v3912
    %v4201 = vunpack.c.h.b16 %v3912
    %v4202 = vunpack.c.l.b16 %v3913
    %v4203 = vunpack.c.h.b16 %v3913
    %v4204 = vunpack.c.l.b16 %v3914
    %v4205 = vunpack.c.h.b16 %v3914
    %v4206 = vunpack.c.l.b16 %v3915
    %v4207 = vunpack.c.h.b16 %v3915
    %v4208 = vunpack.c.l.b16 %v3916
    %v4209 = vunpack.c.h.b16 %v3916
    %v4210 = vunpack.c.l.b16 %v3917
    %v4211 = vunpack.c.h.b16 %v3917
    %v4212 = vunpack.c.l.b16 %v3918
    %v4213 = vunpack.c.h.b16 %v3918
    %v4214 = vunpack.c.l.b16 %v3919
    %v4215 = vunpack.c.h.b16 %v3919
    %v4216 = vunpack.c.l.b16 %v3920
    %v4217 = vunpack.c.h.b16 %v3920
    %v4218 = vunpack.c.l.b16 %v3921
    %v4219 = vunpack.c.h.b16 %v3921
    %v4220 = vunpack.c.l.b16 %v3922
    %v4221 = vunpack.c.h.b16 %v3922
    %v4222 = vunpack.c.l.b16 %v3923
    %v4223 = vunpack.c.h.b16 %v3923
    %v4224 = vunpack.c.l.b16 %v3924
    %v4225 = vunpack.c.h.b16 %v3924
    %v4226 = vunpack.c.l.b16 %v3925
    %v4227 = vunpack.c.h.b16 %v3925
    %v4228 = vunpack.c.l.b16 %v3926
    %v4229 = vunpack.c.h.b16 %v3926
    %v4230 = vunpack.c.l.b16 %v3927
    %v4231 = vunpack.c.h.b16 %v3927
    %v4232 = vunpack.c.l.b16 %v3928
    %v4233 = vunpack.c.h.b16 %v3928
    %v4234 = vunpack.c.l.b16 %v3929
    %v4235 = vunpack.c.h.b16 %v3929
    %v4236 = vunpack.c.l.b16 %v3930
    %v4237 = vunpack.c.h.b16 %v3930
    %v4238 = vunpack.c.l.b16 %v3931
    %v4239 = vunpack.c.h.b16 %v3931
    %v4240 = vunpack.c.l.b16 %v3932
    %v4241 = vunpack.c.h.b16 %v3932
    %v4242 = vunpack.c.l.b16 %v3933
    %v4243 = vunpack.c.h.b16 %v3933
    %v4244 = vunpack.c.l.b16 %v3934
    %v4245 = vunpack.c.h.b16 %v3934
    %v4246 = vunpack.c.l.b16 %v3935
    %v4247 = vunpack.c.h.b16 %v3935
    %v4248 = vunpack.c.l.b16 %v3936
    %v4249 = vunpack.c.h.b16 %v3936
    %v4250 = vunpack.c.l.b16 %v3937
    %v4251 = vunpack.c.h.b16 %v3937
    %v4252 = vunpack.c.l.b16 %v3938
    %v4253 = vunpack.c.h.b16 %v3938
    %v4254 = vunpack.c.l.b16 %v3939
    %v4255 = vunpack.c.h.b16 %v3939
    %v4256 = vunpack.c.l.b16 %v3940
    %v4257 = vunpack.c.h.b16 %v3940
    %v4258 = vunpack.c.l.b16 %v3941
    %v4259 = vunpack.c.h.b16 %v3941
    %v4260 = vunpack.c.l.b16 %v3942
    %v4261 = vunpack.c.h.b16 %v3942
    %v4262 = vunpack.c.l.b16 %v3943
    %v4263 = vunpack.c.h.b16 %v3943
    %v4264 = vunpack.c.l.b16 %v3944
    %v4265 = vunpack.c.h.b16 %v3944
    %v4266 = vunpack.c.l.b16 %v3945
    %v4267 = vunpack.c.h.b16 %v3945
    %v4268 = vunpack.c.l.b16 %v3946
    %v4269 = vunpack.c.h.b16 %v3946
    %v4270 = vunpack.c.l.b16 %v3947
    %v4271 = vunpack.c.h.b16 %v3947
    %v4272 = vunpack.c.l.b16 %v3948
    %v4273 = vunpack.c.h.b16 %v3948
    %v4274 = vunpack.c.l.b16 %v3949
    %v4275 = vunpack.c.h.b16 %v3949
    %v4276 = vunpack.c.l.b16 %v3950
    %v4277 = vunpack.c.h.b16 %v3950
    %v4278 = vunpack.c.l.b16 %v3951
    %v4279 = vunpack.c.h.b16 %v3951
    %v4280 = vunpack.c.l.b16 %v3952
    %v4281 = vunpack.c.h.b16 %v3952
    %v4282 = vunpack.c.l.b16 %v3953
    %v4283 = vunpack.c.h.b16 %v3953
    %v4284 = vunpack.c.l.b16 %v3954
    %v4285 = vunpack.c.h.b16 %v3954
    %v4286 = vunpack.c.l.b16 %v3955
    %v4287 = vunpack.c.h.b16 %v3955
    %v4288 = vunpack.c.l.b16 %v3956
    %v4289 = vunpack.c.h.b16 %v3956
    %v4290 = vunpack.c.l.b16 %v3957
    %v4291 = vunpack.c.h.b16 %v3957
    %v4292 = vunpack.c.l.b16 %v3958
    %v4293 = vunpack.c.h.b16 %v3958
    %v4294 = vunpack.c.l.b16 %v3959
    %v4295 = vunpack.c.h.b16 %v3959
    %v4296 = vunpack.c.l.b16 %v3960
    %v4297 = vunpack.c.h.b16 %v3960
    %v4298 = vunpack.c.l.b16 %v3961
    %v4299 = vunpack.c.h.b16 %v3961
    %v4300 = vunpack.c.l.b16 %v3962
    %v4301 = vunpack.c.h.b16 %v3962
    %v4302 = vunpack.c.l.b16 %v3963
    %v4303 = vunpack.c.h.b16 %v3963
    %v4304 = vunpack.c.l.b16 %v3964
    %v4305 = vunpack.c.h.b16 %v3964
    %v4306 = vunpack.c.l.b16 %v3965
    %v4307 = vunpack.c.h.b16 %v3965
    %v4308 = vunpack.c.l.b16 %v3966
    %v4309 = vunpack.c.h.b16 %v3966
    %v4310 = vunpack.c.l.b16 %v3967
    %v4311 = vunpack.c.h.b16 %v3967
    %v4312 = vunpack.c.l.b16 %v3968
    %v4313 = vunpack.c.h.b16 %v3968
    %v4314 = vunpack.c.l.b16 %v3969
    %v4315 = vunpack.c.h.b16 %v3969
    %v4316 = vunpack.c.l.b16 %v3970
    %v4317 = vunpack.c.h.b16 %v3970
    %v4318 = vunpack.c.l.b16 %v3971
    %v4319 = vunpack.c.h.b16 %v3971
    %v4320 = vunpack.c.l.b16 %v3972
    %v4321 = vunpack.c.h.b16 %v3972
    %v4322 = vunpack.c.l.b16 %v3973
    %v4323 = vunpack.c.h.b16 %v3973
    %v4324 = vunpack.c.l.b16 %v3974
    %v4325 = vunpack.c.h.b16 %v3974
    %v4326 = vunpack.c.l.b16 %v3975
    %v4327 = vunpack.c.h.b16 %v3975
    %v4328 = vunpack.c.l.b16 %v3976
    %v4329 = vunpack.c.h.b16 %v3976
    %v4330 = vunpack.c.l.b16 %v3977
    %v4331 = vunpack.c.h.b16 %v3977
    %v4332 = vunpack.c.l.b16 %v3978
    %v4333 = vunpack.c.h.b16 %v3978
    %v4334 = vunpack.c.l.b16 %v3979
    %v4335 = vunpack.c.h.b16 %v3979
    %v4336 = vunpack.c.l.b16 %v3980
    %v4337 = vunpack.c.h.b16 %v3980
    %v4338 = vunpack.c.l.b16 %v3981
    %v4339 = vunpack.c.h.b16 %v3981
    %v4340 = vunpack.c.l.b16 %v3982
    %v4341 = vunpack.c.h.b16 %v3982
    %v4342 = vunpack.c.l.b16 %v3983
    %v4343 = vunpack.c.h.b16 %v3983
    %v4344 = vunpack.c.l.b16 %v3984
    %v4345 = vunpack.c.h.b16 %v3984
    %v4346 = vunpack.c.l.b16 %v3985
    %v4347 = vunpack.c.h.b16 %v3985
    %v4348 = vunpack.c.l.b16 %v3986
    %v4349 = vunpack.c.h.b16 %v3986
    %v4350 = vunpack.c.l.b16 %v3987
    %v4351 = vunpack.c.h.b16 %v3987
    %v4352 = vunpack.c.l.b16 %v3988
    %v4353 = vunpack.c.h.b16 %v3988
    %v4354 = vunpack.c.l.b16 %v3989
    %v4355 = vunpack.c.h.b16 %v3989
    %v4356 = vunpack.c.l.b16 %v3990
    %v4357 = vunpack.c.h.b16 %v3990
    %v4358 = vunpack.c.l.b16 %v3991
    %v4359 = vunpack.c.h.b16 %v3991
    %v4360 = vunpack.c.l.b16 %v3992
    %v4361 = vunpack.c.h.b16 %v3992
    %v4362 = vunpack.c.l.b16 %v3993
    %v4363 = vunpack.c.h.b16 %v3993
    %v4364 = vunpack.c.l.b16 %v3994
    %v4365 = vunpack.c.h.b16 %v3994
    %v4366 = vunpack.c.l.b16 %v3995
    %v4367 = vunpack.c.h.b16 %v3995
    %v4368 = vunpack.c.l.b16 %v3996
    %v4369 = vunpack.c.h.b16 %v3996
    %v4370 = vunpack.c.l.b16 %v3997
    %v4371 = vunpack.c.h.b16 %v3997
    %v4372 = vunpack.c.l.b16 %v3998
    %v4373 = vunpack.c.h.b16 %v3998
    %v4374 = vunpack.c.l.b16 %v3999
    %v4375 = vunpack.c.h.b16 %v3999
    %v4376 = vunpack.c.l.b16 %v4000
    %v4377 = vunpack.c.h.b16 %v4000
    %v4378 = vunpack.c.l.b16 %v4001
    %v4379 = vunpack.c.h.b16 %v4001
    %v4380 = vunpack.c.l.b16 %v4002
    %v4381 = vunpack.c.h.b16 %v4002
    %v4382 = vunpack.c.l.b16 %v4003
    %v4383 = vunpack.c.h.b16 %v4003
    %v4384 = vunpack.c.l.b16 %v4004
    %v4385 = vunpack.c.h.b16 %v4004
    %v4386 = vunpack.c.l.b16 %v4005
    %v4387 = vunpack.c.h.b16 %v4005
    %v4388 = vunpack.c.l.b16 %v4006
    %v4389 = vunpack.c.h.b16 %v4006
    %v4390 = vunpack.c.l.b16 %v4007
    %v4391 = vunpack.c.h.b16 %v4007
    %v4392 = vpack.c.b16 %v4138, %v4136
    %v4393 = vpack.c.b16 %v4139, %v4137
    %v4394 = vpack.c.b16 %v4142, %v4140
    %v4395 = vpack.c.b16 %v4143, %v4141
    %v4396 = vpack.c.b16 %v4146, %v4144
    %v4397 = vpack.c.b16 %v4147, %v4145
    %v4398 = vpack.c.b16 %v4150, %v4148
    %v4399 = vpack.c.b16 %v4151, %v4149
    %v4400 = vpack.c.b16 %v4154, %v4152
    %v4401 = vpack.c.b16 %v4155, %v4153
    %v4402 = vpack.c.b16 %v4158, %v4156
    %v4403 = vpack.c.b16 %v4159, %v4157
    %v4404 = vpack.c.b16 %v4162, %v4160
    %v4405 = vpack.c.b16 %v4163, %v4161
    %v4406 = vpack.c.b16 %v4166, %v4164
    %v4407 = vpack.c.b16 %v4167, %v4165
    %v4408 = vpack.c.b16 %v4170, %v4168
    %v4409 = vpack.c.b16 %v4171, %v4169
    %v4410 = vpack.c.b16 %v4174, %v4172
    %v4411 = vpack.c.b16 %v4175, %v4173
    %v4412 = vpack.c.b16 %v4178, %v4176
    %v4413 = vpack.c.b16 %v4179, %v4177
    %v4414 = vpack.c.b16 %v4182, %v4180
    %v4415 = vpack.c.b16 %v4183, %v4181
    %v4416 = vpack.c.b16 %v4186, %v4184
    %v4417 = vpack.c.b16 %v4187, %v4185
    %v4418 = vpack.c.b16 %v4190, %v4188
    %v4419 = vpack.c.b16 %v4191, %v4189
    %v4420 = vpack.c.b16 %v4194, %v4192
    %v4421 = vpack.c.b16 %v4195, %v4193
    %v4422 = vpack.c.b16 %v4198, %v4196
    %v4423 = vpack.c.b16 %v4199, %v4197
    %v4424 = vpack.c.b16 %v4202, %v4200
    %v4425 = vpack.c.b16 %v4203, %v4201
    %v4426 = vpack.c.b16 %v4206, %v4204
    %v4427 = vpack.c.b16 %v4207, %v4205
    %v4428 = vpack.c.b16 %v4210, %v4208
    %v4429 = vpack.c.b16 %v4211, %v4209
    %v4430 = vpack.c.b16 %v4214, %v4212
    %v4431 = vpack.c.b16 %v4215, %v4213
    %v4432 = vpack.c.b16 %v4218, %v4216
    %v4433 = vpack.c.b16 %v4219, %v4217
    %v4434 = vpack.c.b16 %v4222, %v4220
    %v4435 = vpack.c.b16 %v4223, %v4221
    %v4436 = vpack.c.b16 %v4226, %v4224
    %v4437 = vpack.c.b16 %v4227, %v4225
    %v4438 = vpack.c.b16 %v4230, %v4228
    %v4439 = vpack.c.b16 %v4231, %v4229
    %v4440 = vpack.c.b16 %v4234, %v4232
    %v4441 = vpack.c.b16 %v4235, %v4233
    %v4442 = vpack.c.b16 %v4238, %v4236
    %v4443 = vpack.c.b16 %v4239, %v4237
    %v4444 = vpack.c.b16 %v4242, %v4240
    %v4445 = vpack.c.b16 %v4243, %v4241
    %v4446 = vpack.c.b16 %v4246, %v4244
    %v4447 = vpack.c.b16 %v4247, %v4245
    %v4448 = vpack.c.b16 %v4250, %v4248
    %v4449 = vpack.c.b16 %v4251, %v4249
    %v4450 = vpack.c.b16 %v4254, %v4252
    %v4451 = vpack.c.b16 %v4255, %v4253
    %v4452 = vpack.c.b16 %v4258, %v4256
    %v4453 = vpack.c.b16 %v4259, %v4257
    %v4454 = vpack.c.b16 %v4262, %v4260
    %v4455 = vpack.c.b16 %v4263, %v4261
    %v4456 = vpack.c.b16 %v4266, %v4264
    %v4457 = vpack.c.b16 %v4267, %v4265
    %v4458 = vpack.c.b16 %v4270, %v4268
    %v4459 = vpack.c.b16 %v4271, %v4269
    %v4460 = vpack.c.b16 %v4274, %v4272
    %v4461 = vpack.c.b16 %v4275, %v4273
    %v4462 = vpack.c.b16 %v4278, %v4276
    %v4463 = vpack.c.b16 %v4279, %v4277
    %v4464 = vpack.c.b16 %v4282, %v4280
    %v4465 = vpack.c.b16 %v4283, %v4281
    %v4466 = vpack.c.b16 %v4286, %v4284
    %v4467 = vpack.c.b16 %v4287, %v4285
    %v4468 = vpack.c.b16 %v4290, %v4288
    %v4469 = vpack.c.b16 %v4291, %v4289
    %v4470 = vpack.c.b16 %v4294, %v4292
    %v4471 = vpack.c.b16 %v4295, %v4293
    %v4472 = vpack.c.b16 %v4298, %v4296
    %v4473 = vpack.c.b16 %v4299, %v4297
    %v4474 = vpack.c.b16 %v4302, %v4300
    %v4475 = vpack.c.b16 %v4303, %v4301
    %v4476 = vpack.c.b16 %v4306, %v4304
    %v4477 = vpack.c.b16 %v4307, %v4305
    %v4478 = vpack.c.b16 %v4310, %v4308
    %v4479 = vpack.c.b16 %v4311, %v4309
    %v4480 = vpack.c.b16 %v4314, %v4312
    %v4481 = vpack.c.b16 %v4315, %v4313
    %v4482 = vpack.c.b16 %v4318, %v4316
    %v4483 = vpack.c.b16 %v4319, %v4317
    %v4484 = vpack.c.b16 %v4322, %v4320
    %v4485 = vpack.c.b16 %v4323, %v4321
    %v4486 = vpack.c.b16 %v4326, %v4324
    %v4487 = vpack.c.b16 %v4327, %v4325
    %v4488 = vpack.c.b16 %v4330, %v4328
    %v4489 = vpack.c.b16 %v4331, %v4329
    %v4490 = vpack.c.b16 %v4334, %v4332
    %v4491 = vpack.c.b16 %v4335, %v4333
    %v4492 = vpack.c.b16 %v4338, %v4336
    %v4493 = vpack.c.b16 %v4339, %v4337
    %v4494 = vpack.c.b16 %v4342, %v4340
    %v4495 = vpack.c.b16 %v4343, %v4341
    %v4496 = vpack.c.b16 %v4346, %v4344
    %v4497 = vpack.c.b16 %v4347, %v4345
    %v4498 = vpack.c.b16 %v4350, %v4348
    %v4499 = vpack.c.b16 %v4351, %v4349
    %v4500 = vpack.c.b16 %v4354, %v4352
    %v4501 = vpack.c.b16 %v4355, %v4353
    %v4502 = vpack.c.b16 %v4358, %v4356
    %v4503 = vpack.c.b16 %v4359, %v4357
    %v4504 = vpack.c.b16 %v4362, %v4360
    %v4505 = vpack.c.b16 %v4363, %v4361
    %v4506 = vpack.c.b16 %v4366, %v4364
    %v4507 = vpack.c.b16 %v4367, %v4365
    %v4508 = vpack.c.b16 %v4370, %v4368
    %v4509 = vpack.c.b16 %v4371, %v4369
    %v4510 = vpack.c.b16 %v4374, %v4372
    %v4511 = vpack.c.b16 %v4375, %v4373
    %v4512 = vpack.c.b16 %v4378, %v4376
    %v4513 = vpack.c.b16 %v4379, %v4377
    %v4514 = vpack.c.b16 %v4382, %v4380
    %v4515 = vpack.c.b16 %v4383, %v4381
    %v4516 = vpack.c.b16 %v4386, %v4384
    %v4517 = vpack.c.b16 %v4387, %v4385
    %v4518 = vpack.c.b16 %v4390, %v4388
    %v4519 = vpack.c.b16 %v4391, %v4389
    %4648 = vmatprep.subr.bf16.mxu0 %v4393
    %4649 = vmatpush1.bf16.msra.mxu0 %v4392
    %4650 = vmatprep.subr.bf16.mxu0 %v4395
    %4651 = vmatpush1.bf16.msra.mxu0 %v4394
    %4652 = vmatprep.subr.bf16.mxu0 %v4397
    %4653 = vmatpush1.bf16.msra.mxu0 %v4396
    %4654 = vmatprep.subr.bf16.mxu0 %v4399
    %4655 = vmatpush1.bf16.msra.mxu0 %v4398
    %4656 = vmatprep.subr.bf16.mxu0 %v4401
    %4657 = vmatpush1.bf16.msra.mxu0 %v4400
    %4658 = vmatprep.subr.bf16.mxu0 %v4403
    %4659 = vmatpush1.bf16.msra.mxu0 %v4402
    %4660 = vmatprep.subr.bf16.mxu0 %v4405
    %4661 = vmatpush1.bf16.msra.mxu0 %v4404
    %4662 = vmatprep.subr.bf16.mxu0 %v4407
    %4663 = vmatpush1.bf16.msra.mxu0 %v4406
    %4664 = vmatprep.subr.bf16.mxu0 %v4409
    %4665 = vmatpush1.bf16.msra.mxu0 %v4408
    %4666 = vmatprep.subr.bf16.mxu0 %v4411
    %4667 = vmatpush1.bf16.msra.mxu0 %v4410
    %4668 = vmatprep.subr.bf16.mxu0 %v4413
    %4669 = vmatpush1.bf16.msra.mxu0 %v4412
    %4670 = vmatprep.subr.bf16.mxu0 %v4415
    %4671 = vmatpush1.bf16.msra.mxu0 %v4414
    %4672 = vmatprep.subr.bf16.mxu0 %v4417
    %4673 = vmatpush1.bf16.msra.mxu0 %v4416
    %4674 = vmatprep.subr.bf16.mxu0 %v4419
    %4675 = vmatpush1.bf16.msra.mxu0 %v4418
    %4676 = vmatprep.subr.bf16.mxu0 %v4421
    %4677 = vmatpush1.bf16.msra.mxu0 %v4420
    %4678 = vmatprep.subr.bf16.mxu0 %v4423
    %4679 = vmatpush1.bf16.msra.mxu0 %v4422
    %4680 = vmatprep.mubr.bf16.mxu0 %v2921
    %4681 = vmatmul.mubr.bf16.gmra.mrb[0].mxu0 %v2920
    %v4682 = vpop.f32.mrb[0].mxu0
    %v4683 = vadd.f32 0.0, %v4682
    %v4684 = vpop.f32.mrb[0].mxu0
    %v4685 = vadd.f32 0.0, %v4684
    %v4686 = vpop.f32.mrb[0].mxu0
    %v4687 = vpop.f32.mrb[0].mxu0
    %4688 = vdwg.mxu0
    %4689 = vmatprep.subr.bf16.mxu0 %v4425
    %4690 = vmatpush1.bf16.msra.mxu0 %v4424
    %4691 = vmatprep.subr.bf16.mxu0 %v4427
    %4692 = vmatpush1.bf16.msra.mxu0 %v4426
    %4693 = vmatprep.subr.bf16.mxu0 %v4429
    %4694 = vmatpush1.bf16.msra.mxu0 %v4428
    %4695 = vmatprep.subr.bf16.mxu0 %v4431
    %4696 = vmatpush1.bf16.msra.mxu0 %v4430
    %4697 = vmatprep.subr.bf16.mxu0 %v4433
    %4698 = vmatpush1.bf16.msra.mxu0 %v4432
    %4699 = vmatprep.subr.bf16.mxu0 %v4435
    %4700 = vmatpush1.bf16.msra.mxu0 %v4434
    %4701 = vmatprep.subr.bf16.mxu0 %v4437
    %4702 = vmatpush1.bf16.msra.mxu0 %v4436
    %4703 = vmatprep.subr.bf16.mxu0 %v4439
    %4704 = vmatpush1.bf16.msra.mxu0 %v4438
    %4705 = vmatprep.subr.bf16.mxu0 %v4441
    %4706 = vmatpush1.bf16.msra.mxu0 %v4440
    %4707 = vmatprep.subr.bf16.mxu0 %v4443
    %4708 = vmatpush1.bf16.msra.mxu0 %v4442
    %4709 = vmatprep.subr.bf16.mxu0 %v4445
    %4710 = vmatpush1.bf16.msra.mxu0 %v4444
    %4711 = vmatprep.subr.bf16.mxu0 %v4447
    %4712 = vmatpush1.bf16.msra.mxu0 %v4446
    %4713 = vmatprep.subr.bf16.mxu0 %v4449
    %4714 = vmatpush1.bf16.msra.mxu0 %v4448
    %4715 = vmatprep.subr.bf16.mxu0 %v4451
    %4716 = vmatpush1.bf16.msra.mxu0 %v4450
    %4717 = vmatprep.subr.bf16.mxu0 %v4453
    %4718 = vmatpush1.bf16.msra.mxu0 %v4452
    %4719 = vmatprep.subr.bf16.mxu0 %v4455
    %4720 = vmatpush1.bf16.msra.mxu0 %v4454
    %4721 = vmatprep.mubr.bf16.mxu0 %v2923
    %4722 = vmatmul.mubr.bf16.gmra.mrb[0].mxu0 %v2922
    %v4723 = vpop.f32.mrb[0].mxu0
    %v4724 = vadd.f32 %v4683, %v4723
    %v4725 = vpop.f32.mrb[0].mxu0
    %v4726 = vadd.f32 %v4685, %v4725
    %v4727 = vpop.f32.mrb[0].mxu0
    %v4728 = vpop.f32.mrb[0].mxu0
    %4729 = vdwg.mxu0
    %4730 = vmatprep.subr.bf16.mxu0 %v4457
    %4731 = vmatpush1.bf16.msra.mxu0 %v4456
    %4732 = vmatprep.subr.bf16.mxu0 %v4459
    %4733 = vmatpush1.bf16.msra.mxu0 %v4458
    %4734 = vmatprep.subr.bf16.mxu0 %v4461
    %4735 = vmatpush1.bf16.msra.mxu0 %v4460
    %4736 = vmatprep.subr.bf16.mxu0 %v4463
    %4737 = vmatpush1.bf16.msra.mxu0 %v4462
    %4738 = vmatprep.subr.bf16.mxu0 %v4465
    %4739 = vmatpush1.bf16.msra.mxu0 %v4464
    %4740 = vmatprep.subr.bf16.mxu0 %v4467
    %4741 = vmatpush1.bf16.msra.mxu0 %v4466
    %4742 = vmatprep.subr.bf16.mxu0 %v4469
    %4743 = vmatpush1.bf16.msra.mxu0 %v4468
    %4744 = vmatprep.subr.bf16.mxu0 %v4471
    %4745 = vmatpush1.bf16.msra.mxu0 %v4470
    %4746 = vmatprep.subr.bf16.mxu0 %v4473
    %4747 = vmatpush1.bf16.msra.mxu0 %v4472
    %4748 = vmatprep.subr.bf16.mxu0 %v4475
    %4749 = vmatpush1.bf16.msra.mxu0 %v4474
    %4750 = vmatprep.subr.bf16.mxu0 %v4477
    %4751 = vmatpush1.bf16.msra.mxu0 %v4476
    %4752 = vmatprep.subr.bf16.mxu0 %v4479
    %4753 = vmatpush1.bf16.msra.mxu0 %v4478
    %4754 = vmatprep.subr.bf16.mxu0 %v4481
    %4755 = vmatpush1.bf16.msra.mxu0 %v4480
    %4756 = vmatprep.subr.bf16.mxu0 %v4483
    %4757 = vmatpush1.bf16.msra.mxu0 %v4482
    %4758 = vmatprep.subr.bf16.mxu0 %v4485
    %4759 = vmatpush1.bf16.msra.mxu0 %v4484
    %4760 = vmatprep.subr.bf16.mxu0 %v4487
    %4761 = vmatpush1.bf16.msra.mxu0 %v4486
    %4762 = vmatprep.mubr.bf16.mxu0 %v2925
    %4763 = vmatmul.mubr.bf16.gmra.mrb[0].mxu0 %v2924
    %v4764 = vpop.f32.mrb[0].mxu0
    %v4765 = vadd.f32 %v4724, %v4764
    %v4766 = vpop.f32.mrb[0].mxu0
    %v4767 = vadd.f32 %v4726, %v4766
    %v4768 = vpop.f32.mrb[0].mxu0
    %v4769 = vpop.f32.mrb[0].mxu0
    %4770 = vdwg.mxu0
    %4771 = vmatprep.subr.bf16.mxu0 %v4489
    %4772 = vmatpush1.bf16.msra.mxu0 %v4488
    %4773 = vmatprep.subr.bf16.mxu0 %v4491
    %4774 = vmatpush1.bf16.msra.mxu0 %v4490
    %4775 = vmatprep.subr.bf16.mxu0 %v4493
    %4776 = vmatpush1.bf16.msra.mxu0 %v4492
    %4777 = vmatprep.subr.bf16.mxu0 %v4495
    %4778 = vmatpush1.bf16.msra.mxu0 %v4494
    %4779 = vmatprep.subr.bf16.mxu0 %v4497
    %4780 = vmatpush1.bf16.msra.mxu0 %v4496
    %4781 = vmatprep.subr.bf16.mxu0 %v4499
    %4782 = vmatpush1.bf16.msra.mxu0 %v4498
    %4783 = vmatprep.subr.bf16.mxu0 %v4501
    %4784 = vmatpush1.bf16.msra.mxu0 %v4500
    %4785 = vmatprep.subr.bf16.mxu0 %v4503
    %4786 = vmatpush1.bf16.msra.mxu0 %v4502
    %4787 = vmatprep.subr.bf16.mxu0 %v4505
    %4788 = vmatpush1.bf16.msra.mxu0 %v4504
    %4789 = vmatprep.subr.bf16.mxu0 %v4507
    %4790 = vmatpush1.bf16.msra.mxu0 %v4506
    %4791 = vmatprep.subr.bf16.mxu0 %v4509
    %4792 = vmatpush1.bf16.msra.mxu0 %v4508
    %4793 = vmatprep.subr.bf16.mxu0 %v4511
    %4794 = vmatpush1.bf16.msra.mxu0 %v4510
    %4795 = vmatprep.subr.bf16.mxu0 %v4513
    %4796 = vmatpush1.bf16.msra.mxu0 %v4512
    %4797 = vmatprep.subr.bf16.mxu0 %v4515
    %4798 = vmatpush1.bf16.msra.mxu0 %v4514
    %4799 = vmatprep.subr.bf16.mxu0 %v4517
    %4800 = vmatpush1.bf16.msra.mxu0 %v4516
    %4801 = vmatprep.subr.bf16.mxu0 %v4519
    %4802 = vmatpush1.bf16.msra.mxu0 %v4518
    %4803 = vmatprep.mubr.bf16.mxu0 %v2927
    %4804 = vmatmul.mubr.bf16.gmra.mrb[0].mxu0 %v2926
    %v4805 = vpop.f32.mrb[0].mxu0
    %v4806 = vadd.f32 %v4765, %v4805
    %v4807 = vpop.f32.mrb[0].mxu0
    %v4808 = vadd.f32 %v4767, %v4807
    %v4809 = vpop.f32.mrb[0].mxu0
    %v4810 = vpop.f32.mrb[0].mxu0
    %4811 = vdwg.mxu0
    %v4814 = vcombine.low %v4806, %v4808
    %v4816 = vunpack.c.l.s4 1983009808
    %v4817 = vunpack.c.0.s8 %v4816
    %v4818 = vlaneseq
    %v4819 = vshrl.u32 %v4818, 7
    %v4820 = vsub.s32 %v4817, %v4819
    %v4821 = vrot.slane %v4814, %v4820
    %4823 = vst [vmem:[%s11 + $0x4] sm:$0xf] %v4821
    %v4824 = vld [vmem:[#allocation6] sm:$0xff]
    %v4825 = vld [vmem:[#allocation6 + $0x8] sm:$0xff]
    %v4826 = vld [vmem:[#allocation6 + $0x10] sm:$0xff]
    %v4827 = vld [vmem:[#allocation6 + $0x18] sm:$0xff]
    %v4828 = vld [vmem:[#allocation6 + $0x20] sm:$0xff]
    %v4829 = vld [vmem:[#allocation6 + $0x28] sm:$0xff]
    %v4830 = vld [vmem:[#allocation6 + $0x30] sm:$0xff]
    %v4831 = vld [vmem:[#allocation6 + $0x38] sm:$0xff]
    %v4832 = vld [vmem:[#allocation6 + $0x40] sm:$0xff]
    %v4833 = vld [vmem:[#allocation6 + $0x48] sm:$0xff]
    %v4834 = vld [vmem:[#allocation6 + $0x50] sm:$0xff]
    %v4835 = vld [vmem:[#allocation6 + $0x58] sm:$0xff]
    %v4836 = vld [vmem:[#allocation6 + $0x60] sm:$0xff]
    %v4837 = vld [vmem:[#allocation6 + $0x68] sm:$0xff]
    %v4838 = vld [vmem:[#allocation6 + $0x70] sm:$0xff]
    %v4839 = vld [vmem:[#allocation6 + $0x78] sm:$0xff]
    %v4840 = vld [vmem:[#allocation6 + $0x80] sm:$0xff]
    %v4841 = vld [vmem:[#allocation6 + $0x88] sm:$0xff]
    %v4842 = vld [vmem:[#allocation6 + $0x90] sm:$0xff]
    %v4843 = vld [vmem:[#allocation6 + $0x98] sm:$0xff]
    %v4844 = vld [vmem:[#allocation6 + $0xa0] sm:$0xff]
    %v4845 = vld [vmem:[#allocation6 + $0xa8] sm:$0xff]
    %v4846 = vld [vmem:[#allocation6 + $0xb0] sm:$0xff]
    %v4847 = vld [vmem:[#allocation6 + $0xb8] sm:$0xff]
    %v4848 = vld [vmem:[#allocation6 + $0xc0] sm:$0xff]
    %v4849 = vld [vmem:[#allocation6 + $0xc8] sm:$0xff]
    %v4850 = vld [vmem:[#allocation6 + $0xd0] sm:$0xff]
    %v4851 = vld [vmem:[#allocation6 + $0xd8] sm:$0xff]
    %v4852 = vld [vmem:[#allocation6 + $0xe0] sm:$0xff]
    %v4853 = vld [vmem:[#allocation6 + $0xe8] sm:$0xff]
    %v4854 = vld [vmem:[#allocation6 + $0xf0] sm:$0xff]
    %v4855 = vld [vmem:[#allocation6 + $0xf8] sm:$0xff]
    %v4856 = vld [vmem:[#allocation6 + $0x100] sm:$0xff]
    %v4857 = vld [vmem:[#allocation6 + $0x108] sm:$0xff]
    %v4858 = vld [vmem:[#allocation6 + $0x110] sm:$0xff]
    %v4859 = vld [vmem:[#allocation6 + $0x118] sm:$0xff]
    %v4860 = vld [vmem:[#allocation6 + $0x120] sm:$0xff]
    %v4861 = vld [vmem:[#allocation6 + $0x128] sm:$0xff]
    %v4862 = vld [vmem:[#allocation6 + $0x130] sm:$0xff]
    %v4863 = vld [vmem:[#allocation6 + $0x138] sm:$0xff]
    %v4864 = vld [vmem:[#allocation6 + $0x140] sm:$0xff]
    %v4865 = vld [vmem:[#allocation6 + $0x148] sm:$0xff]
    %v4866 = vld [vmem:[#allocation6 + $0x150] sm:$0xff]
    %v4867 = vld [vmem:[#allocation6 + $0x158] sm:$0xff]
    %v4868 = vld [vmem:[#allocation6 + $0x160] sm:$0xff]
    %v4869 = vld [vmem:[#allocation6 + $0x168] sm:$0xff]
    %v4870 = vld [vmem:[#allocation6 + $0x170] sm:$0xff]
    %v4871 = vld [vmem:[#allocation6 + $0x178] sm:$0xff]
    %v4872 = vld [vmem:[#allocation6 + $0x180] sm:$0xff]
    %v4873 = vld [vmem:[#allocation6 + $0x188] sm:$0xff]
    %v4874 = vld [vmem:[#allocation6 + $0x190] sm:$0xff]
    %v4875 = vld [vmem:[#allocation6 + $0x198] sm:$0xff]
    %v4876 = vld [vmem:[#allocation6 + $0x1a0] sm:$0xff]
    %v4877 = vld [vmem:[#allocation6 + $0x1a8] sm:$0xff]
    %v4878 = vld [vmem:[#allocation6 + $0x1b0] sm:$0xff]
    %v4879 = vld [vmem:[#allocation6 + $0x1b8] sm:$0xff]
    %v4880 = vld [vmem:[#allocation6 + $0x1c0] sm:$0xff]
    %v4881 = vld [vmem:[#allocation6 + $0x1c8] sm:$0xff]
    %v4882 = vld [vmem:[#allocation6 + $0x1d0] sm:$0xff]
    %v4883 = vld [vmem:[#allocation6 + $0x1d8] sm:$0xff]
    %v4884 = vld [vmem:[#allocation6 + $0x1e0] sm:$0xff]
    %v4885 = vld [vmem:[#allocation6 + $0x1e8] sm:$0xff]
    %v4886 = vld [vmem:[#allocation6 + $0x1f0] sm:$0xff]
    %v4887 = vld [vmem:[#allocation6 + $0x1f8] sm:$0xff]
    %v4888 = vld [vmem:[#allocation6 + $0x200] sm:$0xff]
    %v4889 = vld [vmem:[#allocation6 + $0x208] sm:$0xff]
    %v4890 = vld [vmem:[#allocation6 + $0x210] sm:$0xff]
    %v4891 = vld [vmem:[#allocation6 + $0x218] sm:$0xff]
    %v4892 = vld [vmem:[#allocation6 + $0x220] sm:$0xff]
    %v4893 = vld [vmem:[#allocation6 + $0x228] sm:$0xff]
    %v4894 = vld [vmem:[#allocation6 + $0x230] sm:$0xff]
    %v4895 = vld [vmem:[#allocation6 + $0x238] sm:$0xff]
    %v4896 = vld [vmem:[#allocation6 + $0x240] sm:$0xff]
    %v4897 = vld [vmem:[#allocation6 + $0x248] sm:$0xff]
    %v4898 = vld [vmem:[#allocation6 + $0x250] sm:$0xff]
    %v4899 = vld [vmem:[#allocation6 + $0x258] sm:$0xff]
    %v4900 = vld [vmem:[#allocation6 + $0x260] sm:$0xff]
    %v4901 = vld [vmem:[#allocation6 + $0x268] sm:$0xff]
    %v4902 = vld [vmem:[#allocation6 + $0x270] sm:$0xff]
    %v4903 = vld [vmem:[#allocation6 + $0x278] sm:$0xff]
    %v4904 = vld [vmem:[#allocation6 + $0x280] sm:$0xff]
    %v4905 = vld [vmem:[#allocation6 + $0x288] sm:$0xff]
    %v4906 = vld [vmem:[#allocation6 + $0x290] sm:$0xff]
    %v4907 = vld [vmem:[#allocation6 + $0x298] sm:$0xff]
    %v4908 = vld [vmem:[#allocation6 + $0x2a0] sm:$0xff]
    %v4909 = vld [vmem:[#allocation6 + $0x2a8] sm:$0xff]
    %v4910 = vld [vmem:[#allocation6 + $0x2b0] sm:$0xff]
    %v4911 = vld [vmem:[#allocation6 + $0x2b8] sm:$0xff]
    %v4912 = vld [vmem:[#allocation6 + $0x2c0] sm:$0xff]
    %v4913 = vld [vmem:[#allocation6 + $0x2c8] sm:$0xff]
    %v4914 = vld [vmem:[#allocation6 + $0x2d0] sm:$0xff]
    %v4915 = vld [vmem:[#allocation6 + $0x2d8] sm:$0xff]
    %v4916 = vld [vmem:[#allocation6 + $0x2e0] sm:$0xff]
    %v4917 = vld [vmem:[#allocation6 + $0x2e8] sm:$0xff]
    %v4918 = vld [vmem:[#allocation6 + $0x2f0] sm:$0xff]
    %v4919 = vld [vmem:[#allocation6 + $0x2f8] sm:$0xff]
    %v4920 = vld [vmem:[#allocation6 + $0x300] sm:$0xff]
    %v4921 = vld [vmem:[#allocation6 + $0x308] sm:$0xff]
    %v4922 = vld [vmem:[#allocation6 + $0x310] sm:$0xff]
    %v4923 = vld [vmem:[#allocation6 + $0x318] sm:$0xff]
    %v4924 = vld [vmem:[#allocation6 + $0x320] sm:$0xff]
    %v4925 = vld [vmem:[#allocation6 + $0x328] sm:$0xff]
    %v4926 = vld [vmem:[#allocation6 + $0x330] sm:$0xff]
    %v4927 = vld [vmem:[#allocation6 + $0x338] sm:$0xff]
    %v4928 = vld [vmem:[#allocation6 + $0x340] sm:$0xff]
    %v4929 = vld [vmem:[#allocation6 + $0x348] sm:$0xff]
    %v4930 = vld [vmem:[#allocation6 + $0x350] sm:$0xff]
    %v4931 = vld [vmem:[#allocation6 + $0x358] sm:$0xff]
    %v4932 = vld [vmem:[#allocation6 + $0x360] sm:$0xff]
    %v4933 = vld [vmem:[#allocation6 + $0x368] sm:$0xff]
    %v4934 = vld [vmem:[#allocation6 + $0x370] sm:$0xff]
    %v4935 = vld [vmem:[#allocation6 + $0x378] sm:$0xff]
    %v4936 = vld [vmem:[#allocation6 + $0x380] sm:$0xff]
    %v4937 = vld [vmem:[#allocation6 + $0x388] sm:$0xff]
    %v4938 = vld [vmem:[#allocation6 + $0x390] sm:$0xff]
    %v4939 = vld [vmem:[#allocation6 + $0x398] sm:$0xff]
    %v4940 = vld [vmem:[#allocation6 + $0x3a0] sm:$0xff]
    %v4941 = vld [vmem:[#allocation6 + $0x3a8] sm:$0xff]
    %v4942 = vld [vmem:[#allocation6 + $0x3b0] sm:$0xff]
    %v4943 = vld [vmem:[#allocation6 + $0x3b8] sm:$0xff]
    %v4944 = vld [vmem:[#allocation6 + $0x3c0] sm:$0xff]
    %v4945 = vld [vmem:[#allocation6 + $0x3c8] sm:$0xff]
    %v4946 = vld [vmem:[#allocation6 + $0x3d0] sm:$0xff]
    %v4947 = vld [vmem:[#allocation6 + $0x3d8] sm:$0xff]
    %v4948 = vld [vmem:[#allocation6 + $0x3e0] sm:$0xff]
    %v4949 = vld [vmem:[#allocation6 + $0x3e8] sm:$0xff]
    %v4950 = vld [vmem:[#allocation6 + $0x3f0] sm:$0xff]
    %v4951 = vld [vmem:[#allocation6 + $0x3f8] sm:$0xff]
    %v5080 = vunpack.c.l.b16 %v4824
    %v5081 = vunpack.c.h.b16 %v4824
    %v5082 = vunpack.c.l.b16 %v4825
    %v5083 = vunpack.c.h.b16 %v4825
    %v5084 = vunpack.c.l.b16 %v4826
    %v5085 = vunpack.c.h.b16 %v4826
    %v5086 = vunpack.c.l.b16 %v4827
    %v5087 = vunpack.c.h.b16 %v4827
    %v5088 = vunpack.c.l.b16 %v4828
    %v5089 = vunpack.c.h.b16 %v4828
    %v5090 = vunpack.c.l.b16 %v4829
    %v5091 = vunpack.c.h.b16 %v4829
    %v5092 = vunpack.c.l.b16 %v4830
    %v5093 = vunpack.c.h.b16 %v4830
    %v5094 = vunpack.c.l.b16 %v4831
    %v5095 = vunpack.c.h.b16 %v4831
    %v5096 = vunpack.c.l.b16 %v4832
    %v5097 = vunpack.c.h.b16 %v4832
    %v5098 = vunpack.c.l.b16 %v4833
    %v5099 = vunpack.c.h.b16 %v4833
    %v5100 = vunpack.c.l.b16 %v4834
    %v5101 = vunpack.c.h.b16 %v4834
    %v5102 = vunpack.c.l.b16 %v4835
    %v5103 = vunpack.c.h.b16 %v4835
    %v5104 = vunpack.c.l.b16 %v4836
    %v5105 = vunpack.c.h.b16 %v4836
    %v5106 = vunpack.c.l.b16 %v4837
    %v5107 = vunpack.c.h.b16 %v4837
    %v5108 = vunpack.c.l.b16 %v4838
    %v5109 = vunpack.c.h.b16 %v4838
    %v5110 = vunpack.c.l.b16 %v4839
    %v5111 = vunpack.c.h.b16 %v4839
    %v5112 = vunpack.c.l.b16 %v4840
    %v5113 = vunpack.c.h.b16 %v4840
    %v5114 = vunpack.c.l.b16 %v4841
    %v5115 = vunpack.c.h.b16 %v4841
    %v5116 = vunpack.c.l.b16 %v4842
    %v5117 = vunpack.c.h.b16 %v4842
    %v5118 = vunpack.c.l.b16 %v4843
    %v5119 = vunpack.c.h.b16 %v4843
    %v5120 = vunpack.c.l.b16 %v4844
    %v5121 = vunpack.c.h.b16 %v4844
    %v5122 = vunpack.c.l.b16 %v4845
    %v5123 = vunpack.c.h.b16 %v4845
    %v5124 = vunpack.c.l.b16 %v4846
    %v5125 = vunpack.c.h.b16 %v4846
    %v5126 = vunpack.c.l.b16 %v4847
    %v5127 = vunpack.c.h.b16 %v4847
    %v5128 = vunpack.c.l.b16 %v4848
    %v5129 = vunpack.c.h.b16 %v4848
    %v5130 = vunpack.c.l.b16 %v4849
    %v5131 = vunpack.c.h.b16 %v4849
    %v5132 = vunpack.c.l.b16 %v4850
    %v5133 = vunpack.c.h.b16 %v4850
    %v5134 = vunpack.c.l.b16 %v4851
    %v5135 = vunpack.c.h.b16 %v4851
    %v5136 = vunpack.c.l.b16 %v4852
    %v5137 = vunpack.c.h.b16 %v4852
    %v5138 = vunpack.c.l.b16 %v4853
    %v5139 = vunpack.c.h.b16 %v4853
    %v5140 = vunpack.c.l.b16 %v4854
    %v5141 = vunpack.c.h.b16 %v4854
    %v5142 = vunpack.c.l.b16 %v4855
    %v5143 = vunpack.c.h.b16 %v4855
    %v5144 = vunpack.c.l.b16 %v4856
    %v5145 = vunpack.c.h.b16 %v4856
    %v5146 = vunpack.c.l.b16 %v4857
    %v5147 = vunpack.c.h.b16 %v4857
    %v5148 = vunpack.c.l.b16 %v4858
    %v5149 = vunpack.c.h.b16 %v4858
    %v5150 = vunpack.c.l.b16 %v4859
    %v5151 = vunpack.c.h.b16 %v4859
    %v5152 = vunpack.c.l.b16 %v4860
    %v5153 = vunpack.c.h.b16 %v4860
    %v5154 = vunpack.c.l.b16 %v4861
    %v5155 = vunpack.c.h.b16 %v4861
    %v5156 = vunpack.c.l.b16 %v4862
    %v5157 = vunpack.c.h.b16 %v4862
    %v5158 = vunpack.c.l.b16 %v4863
    %v5159 = vunpack.c.h.b16 %v4863
    %v5160 = vunpack.c.l.b16 %v4864
    %v5161 = vunpack.c.h.b16 %v4864
    %v5162 = vunpack.c.l.b16 %v4865
    %v5163 = vunpack.c.h.b16 %v4865
    %v5164 = vunpack.c.l.b16 %v4866
    %v5165 = vunpack.c.h.b16 %v4866
    %v5166 = vunpack.c.l.b16 %v4867
    %v5167 = vunpack.c.h.b16 %v4867
    %v5168 = vunpack.c.l.b16 %v4868
    %v5169 = vunpack.c.h.b16 %v4868
    %v5170 = vunpack.c.l.b16 %v4869
    %v5171 = vunpack.c.h.b16 %v4869
    %v5172 = vunpack.c.l.b16 %v4870
    %v5173 = vunpack.c.h.b16 %v4870
    %v5174 = vunpack.c.l.b16 %v4871
    %v5175 = vunpack.c.h.b16 %v4871
    %v5176 = vunpack.c.l.b16 %v4872
    %v5177 = vunpack.c.h.b16 %v4872
    %v5178 = vunpack.c.l.b16 %v4873
    %v5179 = vunpack.c.h.b16 %v4873
    %v5180 = vunpack.c.l.b16 %v4874
    %v5181 = vunpack.c.h.b16 %v4874
    %v5182 = vunpack.c.l.b16 %v4875
    %v5183 = vunpack.c.h.b16 %v4875
    %v5184 = vunpack.c.l.b16 %v4876
    %v5185 = vunpack.c.h.b16 %v4876
    %v5186 = vunpack.c.l.b16 %v4877
    %v5187 = vunpack.c.h.b16 %v4877
    %v5188 = vunpack.c.l.b16 %v4878
    %v5189 = vunpack.c.h.b16 %v4878
    %v5190 = vunpack.c.l.b16 %v4879
    %v5191 = vunpack.c.h.b16 %v4879
    %v5192 = vunpack.c.l.b16 %v4880
    %v5193 = vunpack.c.h.b16 %v4880
    %v5194 = vunpack.c.l.b16 %v4881
    %v5195 = vunpack.c.h.b16 %v4881
    %v5196 = vunpack.c.l.b16 %v4882
    %v5197 = vunpack.c.h.b16 %v4882
    %v5198 = vunpack.c.l.b16 %v4883
    %v5199 = vunpack.c.h.b16 %v4883
    %v5200 = vunpack.c.l.b16 %v4884
    %v5201 = vunpack.c.h.b16 %v4884
    %v5202 = vunpack.c.l.b16 %v4885
    %v5203 = vunpack.c.h.b16 %v4885
    %v5204 = vunpack.c.l.b16 %v4886
    %v5205 = vunpack.c.h.b16 %v4886
    %v5206 = vunpack.c.l.b16 %v4887
    %v5207 = vunpack.c.h.b16 %v4887
    %v5208 = vunpack.c.l.b16 %v4888
    %v5209 = vunpack.c.h.b16 %v4888
    %v5210 = vunpack.c.l.b16 %v4889
    %v5211 = vunpack.c.h.b16 %v4889
    %v5212 = vunpack.c.l.b16 %v4890
    %v5213 = vunpack.c.h.b16 %v4890
    %v5214 = vunpack.c.l.b16 %v4891
    %v5215 = vunpack.c.h.b16 %v4891
    %v5216 = vunpack.c.l.b16 %v4892
    %v5217 = vunpack.c.h.b16 %v4892
    %v5218 = vunpack.c.l.b16 %v4893
    %v5219 = vunpack.c.h.b16 %v4893
    %v5220 = vunpack.c.l.b16 %v4894
    %v5221 = vunpack.c.h.b16 %v4894
    %v5222 = vunpack.c.l.b16 %v4895
    %v5223 = vunpack.c.h.b16 %v4895
    %v5224 = vunpack.c.l.b16 %v4896
    %v5225 = vunpack.c.h.b16 %v4896
    %v5226 = vunpack.c.l.b16 %v4897
    %v5227 = vunpack.c.h.b16 %v4897
    %v5228 = vunpack.c.l.b16 %v4898
    %v5229 = vunpack.c.h.b16 %v4898
    %v5230 = vunpack.c.l.b16 %v4899
    %v5231 = vunpack.c.h.b16 %v4899
    %v5232 = vunpack.c.l.b16 %v4900
    %v5233 = vunpack.c.h.b16 %v4900
    %v5234 = vunpack.c.l.b16 %v4901
    %v5235 = vunpack.c.h.b16 %v4901
    %v5236 = vunpack.c.l.b16 %v4902
    %v5237 = vunpack.c.h.b16 %v4902
    %v5238 = vunpack.c.l.b16 %v4903
    %v5239 = vunpack.c.h.b16 %v4903
    %v5240 = vunpack.c.l.b16 %v4904
    %v5241 = vunpack.c.h.b16 %v4904
    %v5242 = vunpack.c.l.b16 %v4905
    %v5243 = vunpack.c.h.b16 %v4905
    %v5244 = vunpack.c.l.b16 %v4906
    %v5245 = vunpack.c.h.b16 %v4906
    %v5246 = vunpack.c.l.b16 %v4907
    %v5247 = vunpack.c.h.b16 %v4907
    %v5248 = vunpack.c.l.b16 %v4908
    %v5249 = vunpack.c.h.b16 %v4908
    %v5250 = vunpack.c.l.b16 %v4909
    %v5251 = vunpack.c.h.b16 %v4909
    %v5252 = vunpack.c.l.b16 %v4910
    %v5253 = vunpack.c.h.b16 %v4910
    %v5254 = vunpack.c.l.b16 %v4911
    %v5255 = vunpack.c.h.b16 %v4911
    %v5256 = vunpack.c.l.b16 %v4912
    %v5257 = vunpack.c.h.b16 %v4912
    %v5258 = vunpack.c.l.b16 %v4913
    %v5259 = vunpack.c.h.b16 %v4913
    %v5260 = vunpack.c.l.b16 %v4914
    %v5261 = vunpack.c.h.b16 %v4914
    %v5262 = vunpack.c.l.b16 %v4915
    %v5263 = vunpack.c.h.b16 %v4915
    %v5264 = vunpack.c.l.b16 %v4916
    %v5265 = vunpack.c.h.b16 %v4916
    %v5266 = vunpack.c.l.b16 %v4917
    %v5267 = vunpack.c.h.b16 %v4917
    %v5268 = vunpack.c.l.b16 %v4918
    %v5269 = vunpack.c.h.b16 %v4918
    %v5270 = vunpack.c.l.b16 %v4919
    %v5271 = vunpack.c.h.b16 %v4919
    %v5272 = vunpack.c.l.b16 %v4920
    %v5273 = vunpack.c.h.b16 %v4920
    %v5274 = vunpack.c.l.b16 %v4921
    %v5275 = vunpack.c.h.b16 %v4921
    %v5276 = vunpack.c.l.b16 %v4922
    %v5277 = vunpack.c.h.b16 %v4922
    %v5278 = vunpack.c.l.b16 %v4923
    %v5279 = vunpack.c.h.b16 %v4923
    %v5280 = vunpack.c.l.b16 %v4924
    %v5281 = vunpack.c.h.b16 %v4924
    %v5282 = vunpack.c.l.b16 %v4925
    %v5283 = vunpack.c.h.b16 %v4925
    %v5284 = vunpack.c.l.b16 %v4926
    %v5285 = vunpack.c.h.b16 %v4926
    %v5286 = vunpack.c.l.b16 %v4927
    %v5287 = vunpack.c.h.b16 %v4927
    %v5288 = vunpack.c.l.b16 %v4928
    %v5289 = vunpack.c.h.b16 %v4928
    %v5290 = vunpack.c.l.b16 %v4929
    %v5291 = vunpack.c.h.b16 %v4929
    %v5292 = vunpack.c.l.b16 %v4930
    %v5293 = vunpack.c.h.b16 %v4930
    %v5294 = vunpack.c.l.b16 %v4931
    %v5295 = vunpack.c.h.b16 %v4931
    %v5296 = vunpack.c.l.b16 %v4932
    %v5297 = vunpack.c.h.b16 %v4932
    %v5298 = vunpack.c.l.b16 %v4933
    %v5299 = vunpack.c.h.b16 %v4933
    %v5300 = vunpack.c.l.b16 %v4934
    %v5301 = vunpack.c.h.b16 %v4934
    %v5302 = vunpack.c.l.b16 %v4935
    %v5303 = vunpack.c.h.b16 %v4935
    %v5304 = vunpack.c.l.b16 %v4936
    %v5305 = vunpack.c.h.b16 %v4936
    %v5306 = vunpack.c.l.b16 %v4937
    %v5307 = vunpack.c.h.b16 %v4937
    %v5308 = vunpack.c.l.b16 %v4938
    %v5309 = vunpack.c.h.b16 %v4938
    %v5310 = vunpack.c.l.b16 %v4939
    %v5311 = vunpack.c.h.b16 %v4939
    %v5312 = vunpack.c.l.b16 %v4940
    %v5313 = vunpack.c.h.b16 %v4940
    %v5314 = vunpack.c.l.b16 %v4941
    %v5315 = vunpack.c.h.b16 %v4941
    %v5316 = vunpack.c.l.b16 %v4942
    %v5317 = vunpack.c.h.b16 %v4942
    %v5318 = vunpack.c.l.b16 %v4943
    %v5319 = vunpack.c.h.b16 %v4943
    %v5320 = vunpack.c.l.b16 %v4944
    %v5321 = vunpack.c.h.b16 %v4944
    %v5322 = vunpack.c.l.b16 %v4945
    %v5323 = vunpack.c.h.b16 %v4945
    %v5324 = vunpack.c.l.b16 %v4946
    %v5325 = vunpack.c.h.b16 %v4946
    %v5326 = vunpack.c.l.b16 %v4947
    %v5327 = vunpack.c.h.b16 %v4947
    %v5328 = vunpack.c.l.b16 %v4948
    %v5329 = vunpack.c.h.b16 %v4948
    %v5330 = vunpack.c.l.b16 %v4949
    %v5331 = vunpack.c.h.b16 %v4949
    %v5332 = vunpack.c.l.b16 %v4950
    %v5333 = vunpack.c.h.b16 %v4950
    %v5334 = vunpack.c.l.b16 %v4951
    %v5335 = vunpack.c.h.b16 %v4951
    %v5336 = vpack.c.b16 %v5082, %v5080
    %v5337 = vpack.c.b16 %v5083, %v5081
    %v5338 = vpack.c.b16 %v5086, %v5084
    %v5339 = vpack.c.b16 %v5087, %v5085
    %v5340 = vpack.c.b16 %v5090, %v5088
    %v5341 = vpack.c.b16 %v5091, %v5089
    %v5342 = vpack.c.b16 %v5094, %v5092
    %v5343 = vpack.c.b16 %v5095, %v5093
    %v5344 = vpack.c.b16 %v5098, %v5096
    %v5345 = vpack.c.b16 %v5099, %v5097
    %v5346 = vpack.c.b16 %v5102, %v5100
    %v5347 = vpack.c.b16 %v5103, %v5101
    %v5348 = vpack.c.b16 %v5106, %v5104
    %v5349 = vpack.c.b16 %v5107, %v5105
    %v5350 = vpack.c.b16 %v5110, %v5108
    %v5351 = vpack.c.b16 %v5111, %v5109
    %v5352 = vpack.c.b16 %v5114, %v5112
    %v5353 = vpack.c.b16 %v5115, %v5113
    %v5354 = vpack.c.b16 %v5118, %v5116
    %v5355 = vpack.c.b16 %v5119, %v5117
    %v5356 = vpack.c.b16 %v5122, %v5120
    %v5357 = vpack.c.b16 %v5123, %v5121
    %v5358 = vpack.c.b16 %v5126, %v5124
    %v5359 = vpack.c.b16 %v5127, %v5125
    %v5360 = vpack.c.b16 %v5130, %v5128
    %v5361 = vpack.c.b16 %v5131, %v5129
    %v5362 = vpack.c.b16 %v5134, %v5132
    %v5363 = vpack.c.b16 %v5135, %v5133
    %v5364 = vpack.c.b16 %v5138, %v5136
    %v5365 = vpack.c.b16 %v5139, %v5137
    %v5366 = vpack.c.b16 %v5142, %v5140
    %v5367 = vpack.c.b16 %v5143, %v5141
    %v5368 = vpack.c.b16 %v5146, %v5144
    %v5369 = vpack.c.b16 %v5147, %v5145
    %v5370 = vpack.c.b16 %v5150, %v5148
    %v5371 = vpack.c.b16 %v5151, %v5149
    %v5372 = vpack.c.b16 %v5154, %v5152
    %v5373 = vpack.c.b16 %v5155, %v5153
    %v5374 = vpack.c.b16 %v5158, %v5156
    %v5375 = vpack.c.b16 %v5159, %v5157
    %v5376 = vpack.c.b16 %v5162, %v5160
    %v5377 = vpack.c.b16 %v5163, %v5161
    %v5378 = vpack.c.b16 %v5166, %v5164
    %v5379 = vpack.c.b16 %v5167, %v5165
    %v5380 = vpack.c.b16 %v5170, %v5168
    %v5381 = vpack.c.b16 %v5171, %v5169
    %v5382 = vpack.c.b16 %v5174, %v5172
    %v5383 = vpack.c.b16 %v5175, %v5173
    %v5384 = vpack.c.b16 %v5178, %v5176
    %v5385 = vpack.c.b16 %v5179, %v5177
    %v5386 = vpack.c.b16 %v5182, %v5180
    %v5387 = vpack.c.b16 %v5183, %v5181
    %v5388 = vpack.c.b16 %v5186, %v5184
    %v5389 = vpack.c.b16 %v5187, %v5185
    %v5390 = vpack.c.b16 %v5190, %v5188
    %v5391 = vpack.c.b16 %v5191, %v5189
    %v5392 = vpack.c.b16 %v5194, %v5192
    %v5393 = vpack.c.b16 %v5195, %v5193
    %v5394 = vpack.c.b16 %v5198, %v5196
    %v5395 = vpack.c.b16 %v5199, %v5197
    %v5396 = vpack.c.b16 %v5202, %v5200
    %v5397 = vpack.c.b16 %v5203, %v5201
    %v5398 = vpack.c.b16 %v5206, %v5204
    %v5399 = vpack.c.b16 %v5207, %v5205
    %v5400 = vpack.c.b16 %v5210, %v5208
    %v5401 = vpack.c.b16 %v5211, %v5209
    %v5402 = vpack.c.b16 %v5214, %v5212
    %v5403 = vpack.c.b16 %v5215, %v5213
    %v5404 = vpack.c.b16 %v5218, %v5216
    %v5405 = vpack.c.b16 %v5219, %v5217
    %v5406 = vpack.c.b16 %v5222, %v5220
    %v5407 = vpack.c.b16 %v5223, %v5221
    %v5408 = vpack.c.b16 %v5226, %v5224
    %v5409 = vpack.c.b16 %v5227, %v5225
    %v5410 = vpack.c.b16 %v5230, %v5228
    %v5411 = vpack.c.b16 %v5231, %v5229
    %v5412 = vpack.c.b16 %v5234, %v5232
    %v5413 = vpack.c.b16 %v5235, %v5233
    %v5414 = vpack.c.b16 %v5238, %v5236
    %v5415 = vpack.c.b16 %v5239, %v5237
    %v5416 = vpack.c.b16 %v5242, %v5240
    %v5417 = vpack.c.b16 %v5243, %v5241
    %v5418 = vpack.c.b16 %v5246, %v5244
    %v5419 = vpack.c.b16 %v5247, %v5245
    %v5420 = vpack.c.b16 %v5250, %v5248
    %v5421 = vpack.c.b16 %v5251, %v5249
    %v5422 = vpack.c.b16 %v5254, %v5252
    %v5423 = vpack.c.b16 %v5255, %v5253
    %v5424 = vpack.c.b16 %v5258, %v5256
    %v5425 = vpack.c.b16 %v5259, %v5257
    %v5426 = vpack.c.b16 %v5262, %v5260
    %v5427 = vpack.c.b16 %v5263, %v5261
    %v5428 = vpack.c.b16 %v5266, %v5264
    %v5429 = vpack.c.b16 %v5267, %v5265
    %v5430 = vpack.c.b16 %v5270, %v5268
    %v5431 = vpack.c.b16 %v5271, %v5269
    %v5432 = vpack.c.b16 %v5274, %v5272
    %v5433 = vpack.c.b16 %v5275, %v5273
    %v5434 = vpack.c.b16 %v5278, %v5276
    %v5435 = vpack.c.b16 %v5279, %v5277
    %v5436 = vpack.c.b16 %v5282, %v5280
    %v5437 = vpack.c.b16 %v5283, %v5281
    %v5438 = vpack.c.b16 %v5286, %v5284
    %v5439 = vpack.c.b16 %v5287, %v5285
    %v5440 = vpack.c.b16 %v5290, %v5288
    %v5441 = vpack.c.b16 %v5291, %v5289
    %v5442 = vpack.c.b16 %v5294, %v5292
    %v5443 = vpack.c.b16 %v5295, %v5293
    %v5444 = vpack.c.b16 %v5298, %v5296
    %v5445 = vpack.c.b16 %v5299, %v5297
    %v5446 = vpack.c.b16 %v5302, %v5300
    %v5447 = vpack.c.b16 %v5303, %v5301
    %v5448 = vpack.c.b16 %v5306, %v5304
    %v5449 = vpack.c.b16 %v5307, %v5305
    %v5450 = vpack.c.b16 %v5310, %v5308
    %v5451 = vpack.c.b16 %v5311, %v5309
    %v5452 = vpack.c.b16 %v5314, %v5312
    %v5453 = vpack.c.b16 %v5315, %v5313
    %v5454 = vpack.c.b16 %v5318, %v5316
    %v5455 = vpack.c.b16 %v5319, %v5317
    %v5456 = vpack.c.b16 %v5322, %v5320
    %v5457 = vpack.c.b16 %v5323, %v5321
    %v5458 = vpack.c.b16 %v5326, %v5324
    %v5459 = vpack.c.b16 %v5327, %v5325
    %v5460 = vpack.c.b16 %v5330, %v5328
    %v5461 = vpack.c.b16 %v5331, %v5329
    %v5462 = vpack.c.b16 %v5334, %v5332
    %v5463 = vpack.c.b16 %v5335, %v5333
    %5592 = vmatprep.subr.bf16.mxu0 %v5337
    %5593 = vmatpush1.bf16.msra.mxu0 %v5336
    %5594 = vmatprep.subr.bf16.mxu0 %v5339
    %5595 = vmatpush1.bf16.msra.mxu0 %v5338
    %5596 = vmatprep.subr.bf16.mxu0 %v5341
    %5597 = vmatpush1.bf16.msra.mxu0 %v5340
    %5598 = vmatprep.subr.bf16.mxu0 %v5343
    %5599 = vmatpush1.bf16.msra.mxu0 %v5342
    %5600 = vmatprep.subr.bf16.mxu0 %v5345
    %5601 = vmatpush1.bf16.msra.mxu0 %v5344
    %5602 = vmatprep.subr.bf16.mxu0 %v5347
    %5603 = vmatpush1.bf16.msra.mxu0 %v5346
    %5604 = vmatprep.subr.bf16.mxu0 %v5349
    %5605 = vmatpush1.bf16.msra.mxu0 %v5348
    %5606 = vmatprep.subr.bf16.mxu0 %v5351
    %5607 = vmatpush1.bf16.msra.mxu0 %v5350
    %5608 = vmatprep.subr.bf16.mxu0 %v5353
    %5609 = vmatpush1.bf16.msra.mxu0 %v5352
    %5610 = vmatprep.subr.bf16.mxu0 %v5355
    %5611 = vmatpush1.bf16.msra.mxu0 %v5354
    %5612 = vmatprep.subr.bf16.mxu0 %v5357
    %5613 = vmatpush1.bf16.msra.mxu0 %v5356
    %5614 = vmatprep.subr.bf16.mxu0 %v5359
    %5615 = vmatpush1.bf16.msra.mxu0 %v5358
    %5616 = vmatprep.subr.bf16.mxu0 %v5361
    %5617 = vmatpush1.bf16.msra.mxu0 %v5360
    %5618 = vmatprep.subr.bf16.mxu0 %v5363
    %5619 = vmatpush1.bf16.msra.mxu0 %v5362
    %5620 = vmatprep.subr.bf16.mxu0 %v5365
    %5621 = vmatpush1.bf16.msra.mxu0 %v5364
    %5622 = vmatprep.subr.bf16.mxu0 %v5367
    %5623 = vmatpush1.bf16.msra.mxu0 %v5366
    %5624 = vmatprep.mubr.bf16.mxu0 %v2929
    %5625 = vmatmul.mubr.bf16.gmra.mrb[0].mxu0 %v2928
    %v5626 = vpop.f32.mrb[0].mxu0
    %v5627 = vadd.f32 0.0, %v5626
    %v5628 = vpop.f32.mrb[0].mxu0
    %v5629 = vadd.f32 0.0, %v5628
    %v5630 = vpop.f32.mrb[0].mxu0
    %v5631 = vpop.f32.mrb[0].mxu0
    %5632 = vdwg.mxu0
    %5633 = vmatprep.subr.bf16.mxu0 %v5369
    %5634 = vmatpush1.bf16.msra.mxu0 %v5368
    %5635 = vmatprep.subr.bf16.mxu0 %v5371
    %5636 = vmatpush1.bf16.msra.mxu0 %v5370
    %5637 = vmatprep.subr.bf16.mxu0 %v5373
    %5638 = vmatpush1.bf16.msra.mxu0 %v5372
    %5639 = vmatprep.subr.bf16.mxu0 %v5375
    %5640 = vmatpush1.bf16.msra.mxu0 %v5374
    %5641 = vmatprep.subr.bf16.mxu0 %v5377
    %5642 = vmatpush1.bf16.msra.mxu0 %v5376
    %5643 = vmatprep.subr.bf16.mxu0 %v5379
    %5644 = vmatpush1.bf16.msra.mxu0 %v5378
    %5645 = vmatprep.subr.bf16.mxu0 %v5381
    %5646 = vmatpush1.bf16.msra.mxu0 %v5380
    %5647 = vmatprep.subr.bf16.mxu0 %v5383
    %5648 = vmatpush1.bf16.msra.mxu0 %v5382
    %5649 = vmatprep.subr.bf16.mxu0 %v5385
    %5650 = vmatpush1.bf16.msra.mxu0 %v5384
    %5651 = vmatprep.subr.bf16.mxu0 %v5387
    %5652 = vmatpush1.bf16.msra.mxu0 %v5386
    %5653 = vmatprep.subr.bf16.mxu0 %v5389
    %5654 = vmatpush1.bf16.msra.mxu0 %v5388
    %5655 = vmatprep.subr.bf16.mxu0 %v5391
    %5656 = vmatpush1.bf16.msra.mxu0 %v5390
    %5657 = vmatprep.subr.bf16.mxu0 %v5393
    %5658 = vmatpush1.bf16.msra.mxu0 %v5392
    %5659 = vmatprep.subr.bf16.mxu0 %v5395
    %5660 = vmatpush1.bf16.msra.mxu0 %v5394
    %5661 = vmatprep.subr.bf16.mxu0 %v5397
    %5662 = vmatpush1.bf16.msra.mxu0 %v5396
    %5663 = vmatprep.subr.bf16.mxu0 %v5399
    %5664 = vmatpush1.bf16.msra.mxu0 %v5398
    %5665 = vmatprep.mubr.bf16.mxu0 %v2931
    %5666 = vmatmul.mubr.bf16.gmra.mrb[0].mxu0 %v2930
    %v5667 = vpop.f32.mrb[0].mxu0
    %v5668 = vadd.f32 %v5627, %v5667
    %v5669 = vpop.f32.mrb[0].mxu0
    %v5670 = vadd.f32 %v5629, %v5669
    %v5671 = vpop.f32.mrb[0].mxu0
    %v5672 = vpop.f32.mrb[0].mxu0
    %5673 = vdwg.mxu0
    %5674 = vmatprep.subr.bf16.mxu0 %v5401
    %5675 = vmatpush1.bf16.msra.mxu0 %v5400
    %5676 = vmatprep.subr.bf16.mxu0 %v5403
    %5677 = vmatpush1.bf16.msra.mxu0 %v5402
    %5678 = vmatprep.subr.bf16.mxu0 %v5405
    %5679 = vmatpush1.bf16.msra.mxu0 %v5404
    %5680 = vmatprep.subr.bf16.mxu0 %v5407
    %5681 = vmatpush1.bf16.msra.mxu0 %v5406
    %5682 = vmatprep.subr.bf16.mxu0 %v5409
    %5683 = vmatpush1.bf16.msra.mxu0 %v5408
    %5684 = vmatprep.subr.bf16.mxu0 %v5411
    %5685 = vmatpush1.bf16.msra.mxu0 %v5410
    %5686 = vmatprep.subr.bf16.mxu0 %v5413
    %5687 = vmatpush1.bf16.msra.mxu0 %v5412
    %5688 = vmatprep.subr.bf16.mxu0 %v5415
    %5689 = vmatpush1.bf16.msra.mxu0 %v5414
    %5690 = vmatprep.subr.bf16.mxu0 %v5417
    %5691 = vmatpush1.bf16.msra.mxu0 %v5416
    %5692 = vmatprep.subr.bf16.mxu0 %v5419
    %5693 = vmatpush1.bf16.msra.mxu0 %v5418
    %5694 = vmatprep.subr.bf16.mxu0 %v5421
    %5695 = vmatpush1.bf16.msra.mxu0 %v5420
    %5696 = vmatprep.subr.bf16.mxu0 %v5423
    %5697 = vmatpush1.bf16.msra.mxu0 %v5422
    %5698 = vmatprep.subr.bf16.mxu0 %v5425
    %5699 = vmatpush1.bf16.msra.mxu0 %v5424
    %5700 = vmatprep.subr.bf16.mxu0 %v5427
    %5701 = vmatpush1.bf16.msra.mxu0 %v5426
    %5702 = vmatprep.subr.bf16.mxu0 %v5429
    %5703 = vmatpush1.bf16.msra.mxu0 %v5428
    %5704 = vmatprep.subr.bf16.mxu0 %v5431
    %5705 = vmatpush1.bf16.msra.mxu0 %v5430
    %5706 = vmatprep.mubr.bf16.mxu0 %v2933
    %5707 = vmatmul.mubr.bf16.gmra.mrb[0].mxu0 %v2932
    %v5708 = vpop.f32.mrb[0].mxu0
    %v5709 = vadd.f32 %v5668, %v5708
    %v5710 = vpop.f32.mrb[0].mxu0
    %v5711 = vadd.f32 %v5670, %v5710
    %v5712 = vpop.f32.mrb[0].mxu0
    %v5713 = vpop.f32.mrb[0].mxu0
    %5714 = vdwg.mxu0
    %5715 = vmatprep.subr.bf16.mxu0 %v5433
    %5716 = vmatpush1.bf16.msra.mxu0 %v5432
    %5717 = vmatprep.subr.bf16.mxu0 %v5435
    %5718 = vmatpush1.bf16.msra.mxu0 %v5434
    %5719 = vmatprep.subr.bf16.mxu0 %v5437
    %5720 = vmatpush1.bf16.msra.mxu0 %v5436
    %5721 = vmatprep.subr.bf16.mxu0 %v5439
    %5722 = vmatpush1.bf16.msra.mxu0 %v5438
    %5723 = vmatprep.subr.bf16.mxu0 %v5441
    %5724 = vmatpush1.bf16.msra.mxu0 %v5440
    %5725 = vmatprep.subr.bf16.mxu0 %v5443
    %5726 = vmatpush1.bf16.msra.mxu0 %v5442
    %5727 = vmatprep.subr.bf16.mxu0 %v5445
    %5728 = vmatpush1.bf16.msra.mxu0 %v5444
    %5729 = vmatprep.subr.bf16.mxu0 %v5447
    %5730 = vmatpush1.bf16.msra.mxu0 %v5446
    %5731 = vmatprep.subr.bf16.mxu0 %v5449
    %5732 = vmatpush1.bf16.msra.mxu0 %v5448
    %5733 = vmatprep.subr.bf16.mxu0 %v5451
    %5734 = vmatpush1.bf16.msra.mxu0 %v5450
    %5735 = vmatprep.subr.bf16.mxu0 %v5453
    %5736 = vmatpush1.bf16.msra.mxu0 %v5452
    %5737 = vmatprep.subr.bf16.mxu0 %v5455
    %5738 = vmatpush1.bf16.msra.mxu0 %v5454
    %5739 = vmatprep.subr.bf16.mxu0 %v5457
    %5740 = vmatpush1.bf16.msra.mxu0 %v5456
    %5741 = vmatprep.subr.bf16.mxu0 %v5459
    %5742 = vmatpush1.bf16.msra.mxu0 %v5458
    %5743 = vmatprep.subr.bf16.mxu0 %v5461
    %5744 = vmatpush1.bf16.msra.mxu0 %v5460
    %5745 = vmatprep.subr.bf16.mxu0 %v5463
    %5746 = vmatpush1.bf16.msra.mxu0 %v5462
    %5747 = vmatprep.mubr.bf16.mxu0 %v2935
    %5748 = vmatmul.mubr.bf16.gmra.mrb[0].mxu0 %v2934
    %v5749 = vpop.f32.mrb[0].mxu0
    %v5750 = vadd.f32 %v5709, %v5749
    %v5751 = vpop.f32.mrb[0].mxu0
    %v5752 = vadd.f32 %v5711, %v5751
    %v5753 = vpop.f32.mrb[0].mxu0
    %v5754 = vpop.f32.mrb[0].mxu0
    %5755 = vdwg.mxu0
    %v5758 = vcombine.low %v5750, %v5752
    %v5760 = vunpack.c.l.s4 1983009808
    %v5761 = vunpack.c.0.s8 %v5760
    %v5762 = vlaneseq
    %v5763 = vshrl.u32 %v5762, 7
    %v5764 = vsub.s32 %v5761, %v5763
    %v5765 = vrot.slane %v5758, %v5764
    %5767 = vst [vmem:[%s11 + $0x8] sm:$0xf] %v5765
    // Predicated region
    $region54: #{psp_eg3d_forward.1} parent=1 // pred_check
      _
    $region55: #{psp_eg3d_forward.1} parent=1 // pred_check_branch
      %5769 = sbr.rel (0) target = $region57
    $region56: #{psp_eg3d_forward.1} parent=1 // pred_region
      _
    $region57: #{psp_eg3d_forward.1} parent=1 // pred_fallthru
      _
    // Predicated region
    $region58: #{psp_eg3d_forward.1} parent=1 // pred_check
      _
    $region59: #{psp_eg3d_forward.1} parent=1 // pred_check_branch
      %5771 = sbr.rel (0) target = $region61
    $region60: #{psp_eg3d_forward.1} parent=1 // pred_region
      _
    $region61: #{psp_eg3d_forward.1} parent=1 // pred_fallthru
      _
    // Predicated region
    $region62: #{psp_eg3d_forward.1} parent=1 // pred_check
      _
    $region63: #{psp_eg3d_forward.1} parent=1 // pred_check_branch
      %5773 = sbr.rel (0) target = $region65
    $region64: #{psp_eg3d_forward.1} parent=1 // pred_region
      _
    $region65: #{psp_eg3d_forward.1} parent=1 // pred_fallthru
      _
    // Predicated region
    $region66: #{psp_eg3d_forward.1} parent=1 // pred_check
      _
    $region67: #{psp_eg3d_forward.1} parent=1 // pred_check_branch
      %5775 = sbr.rel (0) target = $region69
    $region68: #{psp_eg3d_forward.1} parent=1 // pred_region
      _
    $region69: #{psp_eg3d_forward.1} parent=1 // pred_fallthru
      _
    %5776 = vsyncpa [#allocation3], 1
    %5777 = vsyncpa [#allocation5], 1

</llo_original>
